<compile_context>
chip_gen: v6e
topology: v6e:2x2x1
jax: 0.10.0
libtpu: 0.0.40
codegen_flags: <defaults>
</compile_context>

<pallas_src>
import numpy as np
import jax
import jax.numpy as jnp
from jax.experimental import pallas as pl
from jax.experimental.pallas import tpu as pltpu

# ---------------- hyper-params (small, consistent with the module) ------------
N_MELS = 16          # feat_dims
RNN_DIMS = 32
FC_DIMS = 32
RES_OUT_DIMS = 32
AUX_DIMS = RES_OUT_DIMS // 4   # 8
N_CLASSES = 30                 # MOL -> 3 * 10
N_CLASSES_PAD = 128            # lane-dense output width
BATCH = 2
SEQ = 8

TC_MAX = 1024        # timesteps per grid step (~37 MiB VMEM at Tc=1024, Bp=8)
VMEM_LIMIT_BYTES = 56 * 1024 * 1024


# ------------------------------- Pallas kernel --------------------------------
def make_wavernn_kernel(Tc, Bp, R, FC):
    GA_W = 7 * R + 2 * FC      # phase-A slab width: [xI | gx1 | gx2p | ga3 | ga4]
    GH_W = 7 * R               # fused gh width: gh1 @ 0:3R, pad, gh2 @ 4R:7R
    GH2 = 4 * R                # lane offset of gh2 (vreg-aligned: 128)

    def kernel(feat_ref, wA_ref, bA_ref, wHH_ref, bHHn_ref, wih2x_ref,
               wFCx_ref, w3_ref, b3_ref,
               out_ref, gA_ref, x2_ref, h1_ref, h2_ref):
        # hidden state persists across time chunks; zero it on the first chunk
        @pl.when(pl.program_id(0) == 0)
        def _():
            h1_ref[...] = jnp.zeros_like(h1_ref)
            h2_ref[...] = jnp.zeros_like(h2_ref)

        def dot(a, b):
            return jnp.dot(a, b, preferred_element_type=jnp.float32)

        flat = feat_ref[0]                                   # (Tc*Bp, D_IN)

        # ---- Phase A (batched): [xI | gx1 | gx2_pre | ga3 | ga4] whole chunk --
        #   xI   = cat([x, mels, a1]) @ W_I^T + b_I
        #   gx1  = xI @ Wih1^T + bih1 + [bhh1_rz | 0]
        #   gx2p = xI @ Wih2_x^T + a2 @ Wih2_a^T + bih2 + [bhh2_rz | 0]
        #   ga3  = a3 @ W1_a^T + b1      ga4 = a4 @ W2_a^T + b2
        gA_ref[...] = dot(flat, wA_ref[...]) + bA_ref[...]

        # loop-invariant weight loads / bias broadcast (hoisted out of Phase B)
        whh_bd = wHH_ref[...]                 # (2R, GH_W) block-diag [Whh1 | Whh2]
        wih2x = wih2x_ref[...]                # (R, 3R)
        bhhn_b = jnp.broadcast_to(bHHn_ref[...], (Bp, GH_W))  # n-biases only

        # ---- Phase B (serial): GRU1 + GRU2 recurrence, PyTorch gate order ----
        def step(t, carry):
            h1, h2 = carry
            row = pl.multiple_of(t * Bp, Bp)
            g = gA_ref[pl.ds(row, Bp), :]                    # (Bp, GA_W)
            xI = g[:, 0:R]
            gx1 = g[:, R:4 * R]
            gx2p = g[:, 4 * R:7 * R]

            # one fused MXU call: gh[:, 0:3R] = h1@Whh1, gh[:, 4R:7R] = h2@Whh2
            h12 = jnp.concatenate([h1, h2], axis=1)          # (Bp, 2R)
            gh = dot(h12, whh_bd) + bhhn_b                   # (Bp, GH_W)

            rz1 = jax.nn.sigmoid(gx1[:, :2 * R] + gh[:, :2 * R])
            r1 = rz1[:, :R]
            z1 = rz1[:, R:]
            n1 = jnp.tanh(gx1[:, 2 * R:] + r1 * gh[:, 2 * R:3 * R])
            h1n = (1.0 - z1) * n1 + z1 * h1
            x1 = h1n + xI                                    # rnn1(x) + res

            # cat([x1, a2]) @ Wih2^T == gx2_pre + h1_new @ Wih2_x^T
            gx2 = gx2p + dot(h1n, wih2x)
            rz2 = jax.nn.sigmoid(gx2[:, :2 * R] + gh[:, GH2:GH2 + 2 * R])
            r2 = rz2[:, :R]
            z2 = rz2[:, R:]
            n2 = jnp.tanh(gx2[:, 2 * R:] + r2 * gh[:, GH2 + 2 * R:GH2 + 3 * R])
            h2n = (1.0 - z2) * n2 + z2 * h2

            x2_ref[pl.ds(row, Bp), :] = h2n + x1             # rnn2(...) + res
            return (h1n, h2n)

        unroll = True if Tc <= 32 else 16
        h1f, h2f = jax.lax.fori_loop(0, Tc, step, (h1_ref[...], h2_ref[...]),
                                     unroll=unroll)
        h1_ref[...] = h1f
        h2_ref[...] = h2f

        # ---- Phase C (batched): fc1 / fc2 / fc3 over the whole chunk ----
        x2 = x2_ref[...]                                     # (Tc*Bp, R)
        ga3 = gA_ref[:, 7 * R:7 * R + FC]                    # a3 @ W1_a^T + b1
        ga4 = gA_ref[:, 7 * R + FC:7 * R + 2 * FC]           # a4 @ W2_a^T + b2
        x3 = jax.nn.relu(dot(x2, wFCx_ref[0]) + ga3)
        x4 = jax.nn.relu(dot(x3, wFCx_ref[1]) + ga4)
        # lane-dense (128-wide) store; real logits are the first N_CLASSES lanes
        out_ref[0] = dot(x4, w3_ref[...]) + b3_ref[...]

    return kernel


# ------------------------------ wrapper ---------------------------------------
def wavernn_forward(x, mels, aux, p):
    """x: (B, T) f32, mels: (B, T, N_MELS), aux: (B, T, 4*AUX_DIMS) -> (B, T, N_CLASSES)."""
    B, T = x.shape
    F, A, R, FC, C = N_MELS, AUX_DIMS, RNN_DIMS, FC_DIMS, N_CLASSES
    C_PAD = N_CLASSES_PAD
    D_IN = 1 + F + 4 * A      # packed feature width (x | mels | a1 | a2 | a3 | a4)
    K_I = 1 + F + A           # input width of self.I
    GA_W = 7 * R + 2 * FC
    GH_W = 7 * R

    Bp = ((B + 7) // 8) * 8                  # sublane-pad batch to 8 rows
    Tc = min(T, TC_MAX)                      # timesteps per grid step
    n_chunks = pl.cdiv(T, Tc)
    T_pad = n_chunks * Tc

    # ---- coalesced, time-major, batch/time-padded input feature slab ----
    feat = jnp.concatenate([x[..., None], mels, aux], axis=-1)        # (B, T, D_IN)
    feat = jnp.pad(feat, ((0, Bp - B), (0, T_pad - T), (0, 0)))
    feat = jnp.transpose(feat, (1, 0, 2)).reshape(n_chunks, Tc * Bp, D_IN)

    # ---- packed weights (all transposed to (in, out), biases as rows) ----
    hi = jax.lax.Precision.HIGHEST           # accurate weight-folding products
    W_I_T = p["W_I"].T                       # (K_I, R)
    Wih1_T = p["Wih1"].T                     # (R, 3R)
    Wih2_T = p["Wih2"].T                     # (R+A, 3R)
    Wih2x_T = Wih2_T[:R]                     # (R, 3R)
    Wih2a_T = Wih2_T[R:]                     # (A, 3R)
    W1_T = p["W1"].T                         # (R+A, FC)
    W2_T = p["W2"].T                         # (FC+A, FC)
    W1x_T, W1a_T = W1_T[:R], W1_T[R:]
    W2x_T, W2a_T = W2_T[:FC], W2_T[FC:]

    A2_0 = K_I                               # a2 column offset in feat
    A3_0 = K_I + A                           # a3 column offset
    A4_0 = K_I + 2 * A                       # a4 column offset

    W_A = jnp.zeros((D_IN, GA_W), jnp.float32)
    W_A = W_A.at[:K_I, 0:R].set(W_I_T)
    W_A = W_A.at[:K_I, R:4 * R].set(jnp.dot(W_I_T, Wih1_T, precision=hi))
    W_A = W_A.at[:K_I, 4 * R:7 * R].set(jnp.dot(W_I_T, Wih2x_T, precision=hi))
    W_A = W_A.at[A2_0:A2_0 + A, 4 * R:7 * R].set(Wih2a_T)
    W_A = W_A.at[A3_0:A3_0 + A, 7 * R:7 * R + FC].set(W1a_T)
    W_A = W_A.at[A4_0:A4_0 + A, 7 * R + FC:7 * R + 2 * FC].set(W2a_T)

    # biases: b_I folded through Wih1/Wih2_x; bhh r/z portions folded here too
    bih1_eff = jnp.dot(p["b_I"], Wih1_T, precision=hi) + p["bih1"]
    bih1_eff = bih1_eff.at[:2 * R].add(p["bhh1"][:2 * R])
    bih2_eff = jnp.dot(p["b_I"], Wih2x_T, precision=hi) + p["bih2"]
    bih2_eff = bih2_eff.at[:2 * R].add(p["bhh2"][:2 * R])
    b_A = jnp.concatenate([p["b_I"], bih1_eff, bih2_eff,
                           p["b1"], p["b2"]]).reshape(1, GA_W)

    # block-diagonal fused recurrent weight: gh1 lanes 0:3R, gh2 lanes 4R:7R
    W_hh_bd = jnp.zeros((2 * R, GH_W), jnp.float32)
    W_hh_bd = W_hh_bd.at[:R, 0:3 * R].set(p["Whh1"].T)
    W_hh_bd = W_hh_bd.at[R:, 4 * R:7 * R].set(p["Whh2"].T)

    # only the n-portion of bhh stays with gh (needed inside r*(...)+b_hn)
    b_hh_n = jnp.zeros((1, GH_W), jnp.float32)
    b_hh_n = b_hh_n.at[0, 2 * R:3 * R].set(p["bhh1"][2 * R:])
    b_hh_n = b_hh_n.at[0, 6 * R:7 * R].set(p["bhh2"][2 * R:])

    W_ih2x = Wih2x_T                                         # (R, 3R)
    W_fc_x = jnp.stack([W1x_T, W2x_T])                       # (2, R, FC)
    W3_pad = jnp.zeros((FC, C_PAD), jnp.float32).at[:, :C].set(p["W3"].T)
    b3_pad = jnp.zeros((1, C_PAD), jnp.float32).at[0, :C].set(p["b3"])

    weights = [W_A, b_A, W_hh_bd, b_hh_n, W_ih2x, W_fc_x, W3_pad, b3_pad]

    def w_spec(w):
        return pl.BlockSpec(w.shape, lambda c, nd=w.ndim: (0,) * nd)

    kernel = make_wavernn_kernel(Tc, Bp, R, FC)

    out = pl.pallas_call(
        kernel,
        out_shape=jax.ShapeDtypeStruct((n_chunks, Tc * Bp, C_PAD), jnp.float32),
        grid=(n_chunks,),
        in_specs=[pl.BlockSpec((1, Tc * Bp, D_IN), lambda c: (c, 0, 0))]
                 + [w_spec(w) for w in weights],
        out_specs=pl.BlockSpec((1, Tc * Bp, C_PAD), lambda c: (c, 0, 0)),
        scratch_shapes=[
            pltpu.VMEM((Tc * Bp, GA_W), jnp.float32),   # phase-A slab
            pltpu.VMEM((Tc * Bp, R), jnp.float32),      # x2 (rnn2 out + residual)
            pltpu.VMEM((Bp, R), jnp.float32),           # h1 (persists across chunks)
            pltpu.VMEM((Bp, R), jnp.float32),           # h2
        ],
        compiler_params=pltpu.CompilerParams(
            dimension_semantics=("arbitrary",),
            vmem_limit_bytes=VMEM_LIMIT_BYTES),
    )(feat, *weights)

    out = out.reshape(T_pad, Bp, C_PAD)
    return jnp.transpose(out, (1, 0, 2))[:B, :T, :C]


# --------------------------- pure-JAX reference --------------------------------
def ref_forward(x, mels, aux, p):
    A, R = AUX_DIMS, RNN_DIMS
    a1 = aux[..., :A]
    a2 = aux[..., A:2 * A]
    a3 = aux[..., 2 * A:3 * A]
    a4 = aux[..., 3 * A:]

    xin = jnp.concatenate([x[..., None], mels, a1], axis=-1)
    xI = xin @ p["W_I"].T + p["b_I"]

    def gru(x_seq, Wih, Whh, bih, bhh):
        H = Whh.shape[1]

        def step(h, xt):
            gx = xt @ Wih.T + bih
            gh = h @ Whh.T + bhh
            r = jax.nn.sigmoid(gx[:, :H] + gh[:, :H])
            z = jax.nn.sigmoid(gx[:, H:2 * H] + gh[:, H:2 * H])
            n = jnp.tanh(gx[:, 2 * H:] + r * gh[:, 2 * H:])
            h = (1.0 - z) * n + z * h
            return h, h

        h0 = jnp.zeros((x_seq.shape[0], H), jnp.float32)
        _, ys = jax.lax.scan(step, h0, jnp.transpose(x_seq, (1, 0, 2)))
        return jnp.transpose(ys, (1, 0, 2))

    o1 = gru(xI, p["Wih1"], p["Whh1"], p["bih1"], p["bhh1"])
    x1 = o1 + xI
    res = x1
    o2 = gru(jnp.concatenate([x1, a2], axis=-1),
             p["Wih2"], p["Whh2"], p["bih2"], p["bhh2"])
    x2 = o2 + res
    x3 = jax.nn.relu(jnp.concatenate([x2, a3], axis=-1) @ p["W1"].T + p["b1"])
    x4 = jax.nn.relu(jnp.concatenate([x3, a4], axis=-1) @ p["W2"].T + p["b2"])
    return x4 @ p["W3"].T + p["b3"]


# ------------------------------ param init -------------------------------------
def init_params(key):
    def linear(k, fan_in, fan_out):
        k1, k2 = jax.random.split(k)
        b = 1.0 / np.sqrt(fan_in)
        return (jax.random.uniform(k1, (fan_out, fan_in), jnp.float32, -b, b),
                jax.random.uniform(k2, (fan_out,), jnp.float32, -b, b))

    def gru(k, fan_in, hid):
        k1, k2, k3, k4 = jax.random.split(k, 4)
        b = 1.0 / np.sqrt(hid)
        return (jax.random.uniform(k1, (3 * hid, fan_in), jnp.float32, -b, b),
                jax.random.uniform(k2, (3 * hid, hid), jnp.float32, -b, b),
                jax.random.uniform(k3, (3 * hid,), jnp.float32, -b, b),
                jax.random.uniform(k4, (3 * hid,), jnp.float32, -b, b))

    ks = jax.random.split(key, 6)
    p = {}
    p["W_I"], p["b_I"] = linear(ks[0], N_MELS + AUX_DIMS + 1, RNN_DIMS)
    p["Wih1"], p["Whh1"], p["bih1"], p["bhh1"] = gru(ks[1], RNN_DIMS, RNN_DIMS)
    p["Wih2"], p["Whh2"], p["bih2"], p["bhh2"] = gru(ks[2], RNN_DIMS + AUX_DIMS, RNN_DIMS)
    p["W1"], p["b1"] = linear(ks[3], RNN_DIMS + AUX_DIMS, FC_DIMS)
    p["W2"], p["b2"] = linear(ks[4], FC_DIMS + AUX_DIMS, FC_DIMS)
    p["W3"], p["b3"] = linear(ks[5], FC_DIMS, N_CLASSES)
    return p


# ---------------------------------- main ----------------------------------------
if __name__ == "__main__":
    key = jax.random.PRNGKey(0)
    kp, kx, km, ka = jax.random.split(key, 4)

    params = init_params(kp)
    x = jax.random.uniform(kx, (BATCH, SEQ), jnp.float32, -1.0, 1.0)       # waveform samples
    mels = jax.random.normal(km, (BATCH, SEQ, N_MELS), jnp.float32)        # upsampled mels
    aux = jax.random.normal(ka, (BATCH, SEQ, RES_OUT_DIMS), jnp.float32)   # upsampled aux feats

    out = jax.block_until_ready(wavernn_forward(x, mels, aux, params))
    ref = jax.block_until_ready(ref_forward(x, mels, aux, params))

    assert out.shape == (BATCH, SEQ, N_CLASSES), out.shape
    err = float(np.max(np.abs(np.asarray(out) - np.asarray(ref))))
    assert np.allclose(np.asarray(out), np.asarray(ref), rtol=3e-4, atol=3e-4), (
        "mismatch vs reference: max abs err " + str(err))

    print("KERNEL_OK")
</pallas_src>

<mosaic_0001>
module attributes {stable_mosaic.version = 11 : i64} {
  func.func @kernel(%arg0: i32, %arg1: memref<1x64x49xf32, #tpu.memory_space<vmem>>, %arg2: memref<49x288xf32, #tpu.memory_space<vmem>>, %arg3: memref<1x288xf32, #tpu.memory_space<vmem>>, %arg4: memref<64x224xf32, #tpu.memory_space<vmem>>, %arg5: memref<1x224xf32, #tpu.memory_space<vmem>>, %arg6: memref<32x96xf32, #tpu.memory_space<vmem>>, %arg7: memref<2x32x32xf32, #tpu.memory_space<vmem>>, %arg8: memref<32x128xf32, #tpu.memory_space<vmem>>, %arg9: memref<1x128xf32, #tpu.memory_space<vmem>>, %arg10: memref<1x64x128xf32, #tpu.memory_space<vmem>>, %arg11: memref<64x288xf32, #tpu.memory_space<vmem>>, %arg12: memref<64x32xf32, #tpu.memory_space<vmem>>, %arg13: memref<8x32xf32, #tpu.memory_space<vmem>>, %arg14: memref<8x32xf32, #tpu.memory_space<vmem>>) attributes {dimension_semantics = [#tpu.dimension_semantics<arbitrary>], iteration_bounds = array<i64: 1>, scalar_prefetch = 0 : i64, scratch_operands = 4 : i64, tpu.core_type = #tpu.core_type<tc>, window_params = [{transform_indices = @transform_0, window_bounds = array<i64: 1, 64, 49>}, {pipeline_mode = #tpu.pipeline_mode<synchronous>, transform_indices = @transform_1, window_bounds = array<i64: 49, 288>}, {pipeline_mode = #tpu.pipeline_mode<synchronous>, transform_indices = @transform_2, window_bounds = array<i64: 1, 288>}, {pipeline_mode = #tpu.pipeline_mode<synchronous>, transform_indices = @transform_3, window_bounds = array<i64: 64, 224>}, {pipeline_mode = #tpu.pipeline_mode<synchronous>, transform_indices = @transform_4, window_bounds = array<i64: 1, 224>}, {pipeline_mode = #tpu.pipeline_mode<synchronous>, transform_indices = @transform_5, window_bounds = array<i64: 32, 96>}, {pipeline_mode = #tpu.pipeline_mode<synchronous>, transform_indices = @transform_6, window_bounds = array<i64: 2, 32, 32>}, {pipeline_mode = #tpu.pipeline_mode<synchronous>, transform_indices = @transform_7, window_bounds = array<i64: 32, 128>}, {pipeline_mode = #tpu.pipeline_mode<synchronous>, transform_indices = @transform_8, window_bounds = array<i64: 1, 128>}, {transform_indices = @transform_9, window_bounds = array<i64: 1, 64, 128>}]} {
    %c0_i32 = arith.constant 0 : i32
    %0 = arith.cmpi eq, %arg0, %c0_i32 : i32
    %1 = arith.extui %0 : i1 to i32
    %c0_i32_0 = arith.constant 0 : i32
    %2 = arith.cmpi ne, %1, %c0_i32_0 : i32
    scf.if %2 {
      %cst_117 = arith.constant 0.000000e+00 : f32
      %491 = vector.broadcast %cst_117 : f32 to vector<8x32xf32>
      %c0_118 = arith.constant 0 : index
      %c0_119 = arith.constant 0 : index
      %492 = vector.load %arg13[%c0_118, %c0_119] : memref<8x32xf32, #tpu.memory_space<vmem>>, vector<8x32xf32>
      tpu.vector_store %arg13[%c0_118, %c0_119], %491 {strides = array<i32>} : memref<8x32xf32, #tpu.memory_space<vmem>>, vector<8x32xf32>,
      %cst_120 = arith.constant 0.000000e+00 : f32
      %493 = vector.broadcast %cst_120 : f32 to vector<8x32xf32>
      %c0_121 = arith.constant 0 : index
      %c0_122 = arith.constant 0 : index
      %494 = vector.load %arg14[%c0_121, %c0_122] : memref<8x32xf32, #tpu.memory_space<vmem>>, vector<8x32xf32>
      tpu.vector_store %arg14[%c0_121, %c0_122], %493 {strides = array<i32>} : memref<8x32xf32, #tpu.memory_space<vmem>>, vector<8x32xf32>,
    } else {
    }
    %c0 = arith.constant 0 : index
    %c0_1 = arith.constant 0 : index
    %c0_2 = arith.constant 0 : index
    %3 = vector.load %arg1[%c0, %c0_1, %c0_2] : memref<1x64x49xf32, #tpu.memory_space<vmem>>, vector<1x64x49xf32>
    %4 = vector.shape_cast %3 : vector<1x64x49xf32> to vector<64x49xf32>
    %c0_3 = arith.constant 0 : index
    %c0_4 = arith.constant 0 : index
    %5 = vector.load %arg2[%c0_3, %c0_4] : memref<49x288xf32, #tpu.memory_space<vmem>>, vector<49x288xf32>
    %cst = arith.constant dense<0.000000e+00> : vector<64x288xf32>
    %6 = tpu.matmul %4, %5, %cst {dimension_numbers = #tpu.dot_dimension_numbers<[1], [0], [0], [1], [0, 0, 1, 1], [], []>} : vector<64x49xf32>, vector<49x288xf32>, vector<64x288xf32> -> vector<64x288xf32>
    %c0_5 = arith.constant 0 : index
    %c0_6 = arith.constant 0 : index
    %7 = vector.load %arg3[%c0_5, %c0_6] : memref<1x288xf32, #tpu.memory_space<vmem>>, vector<1x288xf32>
    %8 = vector.broadcast %7 : vector<1x288xf32> to vector<64x288xf32>
    %9 = arith.addf %6, %8 : vector<64x288xf32>
    %c0_7 = arith.constant 0 : index
    %c0_8 = arith.constant 0 : index
    %10 = vector.load %arg11[%c0_7, %c0_8] : memref<64x288xf32, #tpu.memory_space<vmem>>, vector<64x288xf32>
    tpu.vector_store %arg11[%c0_7, %c0_8], %9 {strides = array<i32>} : memref<64x288xf32, #tpu.memory_space<vmem>>, vector<64x288xf32>,
    %c0_9 = arith.constant 0 : index
    %c0_10 = arith.constant 0 : index
    %11 = vector.load %arg4[%c0_9, %c0_10] : memref<64x224xf32, #tpu.memory_space<vmem>>, vector<64x224xf32>
    %c0_11 = arith.constant 0 : index
    %c0_12 = arith.constant 0 : index
    %12 = vector.load %arg6[%c0_11, %c0_12] : memref<32x96xf32, #tpu.memory_space<vmem>>, vector<32x96xf32>
    %c0_13 = arith.constant 0 : index
    %c0_14 = arith.constant 0 : index
    %13 = vector.load %arg5[%c0_13, %c0_14] : memref<1x224xf32, #tpu.memory_space<vmem>>, vector<1x224xf32>
    %14 = vector.shape_cast %13 : vector<1x224xf32> to vector<1x224xf32>
    %15 = vector.broadcast %14 : vector<1x224xf32> to vector<8x224xf32>
    %c0_15 = arith.constant 0 : index
    %c0_16 = arith.constant 0 : index
    %16 = vector.load %arg13[%c0_15, %c0_16] : memref<8x32xf32, #tpu.memory_space<vmem>>, vector<8x32xf32>
    %c0_17 = arith.constant 0 : index
    %c0_18 = arith.constant 0 : index
    %17 = vector.load %arg14[%c0_17, %c0_18] : memref<8x32xf32, #tpu.memory_space<vmem>>, vector<8x32xf32>
    %c0_i32_19 = arith.constant 0 : i32
    %c8_i32 = arith.constant 8 : i32
    %18 = arith.muli %c0_i32_19, %c8_i32 : i32
    %19 = tpu.assume_multiple %18, 8 : i32
    %20 = arith.index_cast %19 : i32 to index
    %c0_20 = arith.constant 0 : index
    %21 = vector.load %arg11[%20, %c0_20] : memref<64x288xf32, #tpu.memory_space<vmem>>, vector<8x288xf32>
    %22 = vector.extract_strided_slice %21 {offsets = [0, 0], sizes = [8, 32], strides = [1, 1]} : vector<8x288xf32> to vector<8x32xf32>
    %23 = vector.extract_strided_slice %21 {offsets = [0, 32], sizes = [8, 96], strides = [1, 1]} : vector<8x288xf32> to vector<8x96xf32>
    %24 = vector.extract_strided_slice %21 {offsets = [0, 128], sizes = [8, 96], strides = [1, 1]} : vector<8x288xf32> to vector<8x96xf32>
    %25 = tpu.concatenate %16, %17 in 1 : vector<8x32xf32>, vector<8x32xf32> -> vector<8x64xf32>
    %cst_21 = arith.constant dense<0.000000e+00> : vector<8x224xf32>
    %26 = tpu.matmul %25, %11, %cst_21 {dimension_numbers = #tpu.dot_dimension_numbers<[1], [0], [0], [1], [0, 0, 1, 1], [], []>} : vector<8x64xf32>, vector<64x224xf32>, vector<8x224xf32> -> vector<8x224xf32>
    %27 = arith.addf %26, %15 : vector<8x224xf32>
    %28 = vector.extract_strided_slice %23 {offsets = [0, 0], sizes = [8, 64], strides = [1, 1]} : vector<8x96xf32> to vector<8x64xf32>
    %29 = vector.extract_strided_slice %27 {offsets = [0, 0], sizes = [8, 64], strides = [1, 1]} : vector<8x224xf32> to vector<8x64xf32>
    %30 = arith.addf %28, %29 : vector<8x64xf32>
    %31 = arith.negf %30 : vector<8x64xf32>
    %32 = math.exp %31 : vector<8x64xf32>
    %cst_22 = arith.constant 1.000000e+00 : f32
    %33 = vector.broadcast %cst_22 : f32 to vector<8x64xf32>
    %34 = arith.addf %33, %32 : vector<8x64xf32>
    %35 = arith.divf %33, %34 : vector<8x64xf32>
    %36 = vector.extract_strided_slice %35 {offsets = [0, 0], sizes = [8, 32], strides = [1, 1]} : vector<8x64xf32> to vector<8x32xf32>
    %37 = vector.extract_strided_slice %35 {offsets = [0, 32], sizes = [8, 32], strides = [1, 1]} : vector<8x64xf32> to vector<8x32xf32>
    %38 = vector.extract_strided_slice %23 {offsets = [0, 64], sizes = [8, 32], strides = [1, 1]} : vector<8x96xf32> to vector<8x32xf32>
    %39 = vector.extract_strided_slice %27 {offsets = [0, 64], sizes = [8, 32], strides = [1, 1]} : vector<8x224xf32> to vector<8x32xf32>
    %40 = arith.mulf %36, %39 : vector<8x32xf32>
    %41 = arith.addf %38, %40 : vector<8x32xf32>
    %42 = math.tanh %41 : vector<8x32xf32>
    %cst_23 = arith.constant 1.000000e+00 : f32
    %43 = vector.broadcast %cst_23 : f32 to vector<8x32xf32>
    %44 = arith.subf %43, %37 : vector<8x32xf32>
    %45 = arith.mulf %44, %42 : vector<8x32xf32>
    %46 = arith.mulf %37, %16 : vector<8x32xf32>
    %47 = arith.addf %45, %46 : vector<8x32xf32>
    %48 = arith.addf %47, %22 : vector<8x32xf32>
    %cst_24 = arith.constant dense<0.000000e+00> : vector<8x96xf32>
    %49 = tpu.matmul %47, %12, %cst_24 {dimension_numbers = #tpu.dot_dimension_numbers<[1], [0], [0], [1], [0, 0, 1, 1], [], []>} : vector<8x32xf32>, vector<32x96xf32>, vector<8x96xf32> -> vector<8x96xf32>
    %50 = arith.addf %24, %49 : vector<8x96xf32>
    %51 = vector.extract_strided_slice %50 {offsets = [0, 0], sizes = [8, 64], strides = [1, 1]} : vector<8x96xf32> to vector<8x64xf32>
    %52 = vector.extract_strided_slice %27 {offsets = [0, 128], sizes = [8, 64], strides = [1, 1]} : vector<8x224xf32> to vector<8x64xf32>
    %53 = arith.addf %51, %52 : vector<8x64xf32>
    %54 = arith.negf %53 : vector<8x64xf32>
    %55 = math.exp %54 : vector<8x64xf32>
    %cst_25 = arith.constant 1.000000e+00 : f32
    %56 = vector.broadcast %cst_25 : f32 to vector<8x64xf32>
    %57 = arith.addf %56, %55 : vector<8x64xf32>
    %58 = arith.divf %56, %57 : vector<8x64xf32>
    %59 = vector.extract_strided_slice %58 {offsets = [0, 0], sizes = [8, 32], strides = [1, 1]} : vector<8x64xf32> to vector<8x32xf32>
    %60 = vector.extract_strided_slice %58 {offsets = [0, 32], sizes = [8, 32], strides = [1, 1]} : vector<8x64xf32> to vector<8x32xf32>
    %61 = vector.extract_strided_slice %50 {offsets = [0, 64], sizes = [8, 32], strides = [1, 1]} : vector<8x96xf32> to vector<8x32xf32>
    %62 = vector.extract_strided_slice %27 {offsets = [0, 192], sizes = [8, 32], strides = [1, 1]} : vector<8x224xf32> to vector<8x32xf32>
    %63 = arith.mulf %59, %62 : vector<8x32xf32>
    %64 = arith.addf %61, %63 : vector<8x32xf32>
    %65 = math.tanh %64 : vector<8x32xf32>
    %cst_26 = arith.constant 1.000000e+00 : f32
    %66 = vector.broadcast %cst_26 : f32 to vector<8x32xf32>
    %67 = arith.subf %66, %60 : vector<8x32xf32>
    %68 = arith.mulf %67, %65 : vector<8x32xf32>
    %69 = arith.mulf %60, %17 : vector<8x32xf32>
    %70 = arith.addf %68, %69 : vector<8x32xf32>
    %71 = arith.addf %70, %48 : vector<8x32xf32>
    %72 = arith.index_cast %19 : i32 to index
    %c0_27 = arith.constant 0 : index
    %73 = vector.load %arg12[%72, %c0_27] : memref<64x32xf32, #tpu.memory_space<vmem>>, vector<8x32xf32>
    tpu.vector_store %arg12[%72, %c0_27], %71 {strides = array<i32>} : memref<64x32xf32, #tpu.memory_space<vmem>>, vector<8x32xf32>,
    %c1_i32 = arith.constant 1 : i32
    %c8_i32_28 = arith.constant 8 : i32
    %74 = arith.muli %c1_i32, %c8_i32_28 : i32
    %75 = tpu.assume_multiple %74, 8 : i32
    %76 = arith.index_cast %75 : i32 to index
    %c0_29 = arith.constant 0 : index
    %77 = vector.load %arg11[%76, %c0_29] : memref<64x288xf32, #tpu.memory_space<vmem>>, vector<8x288xf32>
    %78 = vector.extract_strided_slice %77 {offsets = [0, 0], sizes = [8, 32], strides = [1, 1]} : vector<8x288xf32> to vector<8x32xf32>
    %79 = vector.extract_strided_slice %77 {offsets = [0, 32], sizes = [8, 96], strides = [1, 1]} : vector<8x288xf32> to vector<8x96xf32>
    %80 = vector.extract_strided_slice %77 {offsets = [0, 128], sizes = [8, 96], strides = [1, 1]} : vector<8x288xf32> to vector<8x96xf32>
    %81 = tpu.concatenate %47, %70 in 1 : vector<8x32xf32>, vector<8x32xf32> -> vector<8x64xf32>
    %cst_30 = arith.constant dense<0.000000e+00> : vector<8x224xf32>
    %82 = tpu.matmul %81, %11, %cst_30 {dimension_numbers = #tpu.dot_dimension_numbers<[1], [0], [0], [1], [0, 0, 1, 1], [], []>} : vector<8x64xf32>, vector<64x224xf32>, vector<8x224xf32> -> vector<8x224xf32>
    %83 = arith.addf %82, %15 : vector<8x224xf32>
    %84 = vector.extract_strided_slice %79 {offsets = [0, 0], sizes = [8, 64], strides = [1, 1]} : vector<8x96xf32> to vector<8x64xf32>
    %85 = vector.extract_strided_slice %83 {offsets = [0, 0], sizes = [8, 64], strides = [1, 1]} : vector<8x224xf32> to vector<8x64xf32>
    %86 = arith.addf %84, %85 : vector<8x64xf32>
    %87 = arith.negf %86 : vector<8x64xf32>
    %88 = math.exp %87 : vector<8x64xf32>
    %cst_31 = arith.constant 1.000000e+00 : f32
    %89 = vector.broadcast %cst_31 : f32 to vector<8x64xf32>
    %90 = arith.addf %89, %88 : vector<8x64xf32>
    %91 = arith.divf %89, %90 : vector<8x64xf32>
    %92 = vector.extract_strided_slice %91 {offsets = [0, 0], sizes = [8, 32], strides = [1, 1]} : vector<8x64xf32> to vector<8x32xf32>
    %93 = vector.extract_strided_slice %91 {offsets = [0, 32], sizes = [8, 32], strides = [1, 1]} : vector<8x64xf32> to vector<8x32xf32>
    %94 = vector.extract_strided_slice %79 {offsets = [0, 64], sizes = [8, 32], strides = [1, 1]} : vector<8x96xf32> to vector<8x32xf32>
    %95 = vector.extract_strided_slice %83 {offsets = [0, 64], sizes = [8, 32], strides = [1, 1]} : vector<8x224xf32> to vector<8x32xf32>
    %96 = arith.mulf %92, %95 : vector<8x32xf32>
    %97 = arith.addf %94, %96 : vector<8x32xf32>
    %98 = math.tanh %97 : vector<8x32xf32>
    %cst_32 = arith.constant 1.000000e+00 : f32
    %99 = vector.broadcast %cst_32 : f32 to vector<8x32xf32>
    %100 = arith.subf %99, %93 : vector<8x32xf32>
    %101 = arith.mulf %100, %98 : vector<8x32xf32>
    %102 = arith.mulf %93, %47 : vector<8x32xf32>
    %103 = arith.addf %101, %102 : vector<8x32xf32>
    %104 = arith.addf %103, %78 : vector<8x32xf32>
    %cst_33 = arith.constant dense<0.000000e+00> : vector<8x96xf32>
    %105 = tpu.matmul %103, %12, %cst_33 {dimension_numbers = #tpu.dot_dimension_numbers<[1], [0], [0], [1], [0, 0, 1, 1], [], []>} : vector<8x32xf32>, vector<32x96xf32>, vector<8x96xf32> -> vector<8x96xf32>
    %106 = arith.addf %80, %105 : vector<8x96xf32>
    %107 = vector.extract_strided_slice %106 {offsets = [0, 0], sizes = [8, 64], strides = [1, 1]} : vector<8x96xf32> to vector<8x64xf32>
    %108 = vector.extract_strided_slice %83 {offsets = [0, 128], sizes = [8, 64], strides = [1, 1]} : vector<8x224xf32> to vector<8x64xf32>
    %109 = arith.addf %107, %108 : vector<8x64xf32>
    %110 = arith.negf %109 : vector<8x64xf32>
    %111 = math.exp %110 : vector<8x64xf32>
    %cst_34 = arith.constant 1.000000e+00 : f32
    %112 = vector.broadcast %cst_34 : f32 to vector<8x64xf32>
    %113 = arith.addf %112, %111 : vector<8x64xf32>
    %114 = arith.divf %112, %113 : vector<8x64xf32>
    %115 = vector.extract_strided_slice %114 {offsets = [0, 0], sizes = [8, 32], strides = [1, 1]} : vector<8x64xf32> to vector<8x32xf32>
    %116 = vector.extract_strided_slice %114 {offsets = [0, 32], sizes = [8, 32], strides = [1, 1]} : vector<8x64xf32> to vector<8x32xf32>
    %117 = vector.extract_strided_slice %106 {offsets = [0, 64], sizes = [8, 32], strides = [1, 1]} : vector<8x96xf32> to vector<8x32xf32>
    %118 = vector.extract_strided_slice %83 {offsets = [0, 192], sizes = [8, 32], strides = [1, 1]} : vector<8x224xf32> to vector<8x32xf32>
    %119 = arith.mulf %115, %118 : vector<8x32xf32>
    %120 = arith.addf %117, %119 : vector<8x32xf32>
    %121 = math.tanh %120 : vector<8x32xf32>
    %cst_35 = arith.constant 1.000000e+00 : f32
    %122 = vector.broadcast %cst_35 : f32 to vector<8x32xf32>
    %123 = arith.subf %122, %116 : vector<8x32xf32>
    %124 = arith.mulf %123, %121 : vector<8x32xf32>
    %125 = arith.mulf %116, %70 : vector<8x32xf32>
    %126 = arith.addf %124, %125 : vector<8x32xf32>
    %127 = arith.addf %126, %104 : vector<8x32xf32>
    %128 = arith.index_cast %75 : i32 to index
    %c0_36 = arith.constant 0 : index
    %129 = vector.load %arg12[%128, %c0_36] : memref<64x32xf32, #tpu.memory_space<vmem>>, vector<8x32xf32>
    tpu.vector_store %arg12[%128, %c0_36], %127 {strides = array<i32>} : memref<64x32xf32, #tpu.memory_space<vmem>>, vector<8x32xf32>,
    %c2_i32 = arith.constant 2 : i32
    %c8_i32_37 = arith.constant 8 : i32
    %130 = arith.muli %c2_i32, %c8_i32_37 : i32
    %131 = tpu.assume_multiple %130, 8 : i32
    %132 = arith.index_cast %131 : i32 to index
    %c0_38 = arith.constant 0 : index
    %133 = vector.load %arg11[%132, %c0_38] : memref<64x288xf32, #tpu.memory_space<vmem>>, vector<8x288xf32>
    %134 = vector.extract_strided_slice %133 {offsets = [0, 0], sizes = [8, 32], strides = [1, 1]} : vector<8x288xf32> to vector<8x32xf32>
    %135 = vector.extract_strided_slice %133 {offsets = [0, 32], sizes = [8, 96], strides = [1, 1]} : vector<8x288xf32> to vector<8x96xf32>
    %136 = vector.extract_strided_slice %133 {offsets = [0, 128], sizes = [8, 96], strides = [1, 1]} : vector<8x288xf32> to vector<8x96xf32>
    %137 = tpu.concatenate %103, %126 in 1 : vector<8x32xf32>, vector<8x32xf32> -> vector<8x64xf32>
    %cst_39 = arith.constant dense<0.000000e+00> : vector<8x224xf32>
    %138 = tpu.matmul %137, %11, %cst_39 {dimension_numbers = #tpu.dot_dimension_numbers<[1], [0], [0], [1], [0, 0, 1, 1], [], []>} : vector<8x64xf32>, vector<64x224xf32>, vector<8x224xf32> -> vector<8x224xf32>
    %139 = arith.addf %138, %15 : vector<8x224xf32>
    %140 = vector.extract_strided_slice %135 {offsets = [0, 0], sizes = [8, 64], strides = [1, 1]} : vector<8x96xf32> to vector<8x64xf32>
    %141 = vector.extract_strided_slice %139 {offsets = [0, 0], sizes = [8, 64], strides = [1, 1]} : vector<8x224xf32> to vector<8x64xf32>
    %142 = arith.addf %140, %141 : vector<8x64xf32>
    %143 = arith.negf %142 : vector<8x64xf32>
    %144 = math.exp %143 : vector<8x64xf32>
    %cst_40 = arith.constant 1.000000e+00 : f32
    %145 = vector.broadcast %cst_40 : f32 to vector<8x64xf32>
    %146 = arith.addf %145, %144 : vector<8x64xf32>
    %147 = arith.divf %145, %146 : vector<8x64xf32>
    %148 = vector.extract_strided_slice %147 {offsets = [0, 0], sizes = [8, 32], strides = [1, 1]} : vector<8x64xf32> to vector<8x32xf32>
    %149 = vector.extract_strided_slice %147 {offsets = [0, 32], sizes = [8, 32], strides = [1, 1]} : vector<8x64xf32> to vector<8x32xf32>
    %150 = vector.extract_strided_slice %135 {offsets = [0, 64], sizes = [8, 32], strides = [1, 1]} : vector<8x96xf32> to vector<8x32xf32>
    %151 = vector.extract_strided_slice %139 {offsets = [0, 64], sizes = [8, 32], strides = [1, 1]} : vector<8x224xf32> to vector<8x32xf32>
    %152 = arith.mulf %148, %151 : vector<8x32xf32>
    %153 = arith.addf %150, %152 : vector<8x32xf32>
    %154 = math.tanh %153 : vector<8x32xf32>
    %cst_41 = arith.constant 1.000000e+00 : f32
    %155 = vector.broadcast %cst_41 : f32 to vector<8x32xf32>
    %156 = arith.subf %155, %149 : vector<8x32xf32>
    %157 = arith.mulf %156, %154 : vector<8x32xf32>
    %158 = arith.mulf %149, %103 : vector<8x32xf32>
    %159 = arith.addf %157, %158 : vector<8x32xf32>
    %160 = arith.addf %159, %134 : vector<8x32xf32>
    %cst_42 = arith.constant dense<0.000000e+00> : vector<8x96xf32>
    %161 = tpu.matmul %159, %12, %cst_42 {dimension_numbers = #tpu.dot_dimension_numbers<[1], [0], [0], [1], [0, 0, 1, 1], [], []>} : vector<8x32xf32>, vector<32x96xf32>, vector<8x96xf32> -> vector<8x96xf32>
    %162 = arith.addf %136, %161 : vector<8x96xf32>
    %163 = vector.extract_strided_slice %162 {offsets = [0, 0], sizes = [8, 64], strides = [1, 1]} : vector<8x96xf32> to vector<8x64xf32>
    %164 = vector.extract_strided_slice %139 {offsets = [0, 128], sizes = [8, 64], strides = [1, 1]} : vector<8x224xf32> to vector<8x64xf32>
    %165 = arith.addf %163, %164 : vector<8x64xf32>
    %166 = arith.negf %165 : vector<8x64xf32>
    %167 = math.exp %166 : vector<8x64xf32>
    %cst_43 = arith.constant 1.000000e+00 : f32
    %168 = vector.broadcast %cst_43 : f32 to vector<8x64xf32>
    %169 = arith.addf %168, %167 : vector<8x64xf32>
    %170 = arith.divf %168, %169 : vector<8x64xf32>
    %171 = vector.extract_strided_slice %170 {offsets = [0, 0], sizes = [8, 32], strides = [1, 1]} : vector<8x64xf32> to vector<8x32xf32>
    %172 = vector.extract_strided_slice %170 {offsets = [0, 32], sizes = [8, 32], strides = [1, 1]} : vector<8x64xf32> to vector<8x32xf32>
    %173 = vector.extract_strided_slice %162 {offsets = [0, 64], sizes = [8, 32], strides = [1, 1]} : vector<8x96xf32> to vector<8x32xf32>
    %174 = vector.extract_strided_slice %139 {offsets = [0, 192], sizes = [8, 32], strides = [1, 1]} : vector<8x224xf32> to vector<8x32xf32>
    %175 = arith.mulf %171, %174 : vector<8x32xf32>
    %176 = arith.addf %173, %175 : vector<8x32xf32>
    %177 = math.tanh %176 : vector<8x32xf32>
    %cst_44 = arith.constant 1.000000e+00 : f32
    %178 = vector.broadcast %cst_44 : f32 to vector<8x32xf32>
    %179 = arith.subf %178, %172 : vector<8x32xf32>
    %180 = arith.mulf %179, %177 : vector<8x32xf32>
    %181 = arith.mulf %172, %126 : vector<8x32xf32>
    %182 = arith.addf %180, %181 : vector<8x32xf32>
    %183 = arith.addf %182, %160 : vector<8x32xf32>
    %184 = arith.index_cast %131 : i32 to index
    %c0_45 = arith.constant 0 : index
    %185 = vector.load %arg12[%184, %c0_45] : memref<64x32xf32, #tpu.memory_space<vmem>>, vector<8x32xf32>
    tpu.vector_store %arg12[%184, %c0_45], %183 {strides = array<i32>} : memref<64x32xf32, #tpu.memory_space<vmem>>, vector<8x32xf32>,
    %c3_i32 = arith.constant 3 : i32
    %c8_i32_46 = arith.constant 8 : i32
    %186 = arith.muli %c3_i32, %c8_i32_46 : i32
    %187 = tpu.assume_multiple %186, 8 : i32
    %188 = arith.index_cast %187 : i32 to index
    %c0_47 = arith.constant 0 : index
    %189 = vector.load %arg11[%188, %c0_47] : memref<64x288xf32, #tpu.memory_space<vmem>>, vector<8x288xf32>
    %190 = vector.extract_strided_slice %189 {offsets = [0, 0], sizes = [8, 32], strides = [1, 1]} : vector<8x288xf32> to vector<8x32xf32>
    %191 = vector.extract_strided_slice %189 {offsets = [0, 32], sizes = [8, 96], strides = [1, 1]} : vector<8x288xf32> to vector<8x96xf32>
    %192 = vector.extract_strided_slice %189 {offsets = [0, 128], sizes = [8, 96], strides = [1, 1]} : vector<8x288xf32> to vector<8x96xf32>
    %193 = tpu.concatenate %159, %182 in 1 : vector<8x32xf32>, vector<8x32xf32> -> vector<8x64xf32>
    %cst_48 = arith.constant dense<0.000000e+00> : vector<8x224xf32>
    %194 = tpu.matmul %193, %11, %cst_48 {dimension_numbers = #tpu.dot_dimension_numbers<[1], [0], [0], [1], [0, 0, 1, 1], [], []>} : vector<8x64xf32>, vector<64x224xf32>, vector<8x224xf32> -> vector<8x224xf32>
    %195 = arith.addf %194, %15 : vector<8x224xf32>
    %196 = vector.extract_strided_slice %191 {offsets = [0, 0], sizes = [8, 64], strides = [1, 1]} : vector<8x96xf32> to vector<8x64xf32>
    %197 = vector.extract_strided_slice %195 {offsets = [0, 0], sizes = [8, 64], strides = [1, 1]} : vector<8x224xf32> to vector<8x64xf32>
    %198 = arith.addf %196, %197 : vector<8x64xf32>
    %199 = arith.negf %198 : vector<8x64xf32>
    %200 = math.exp %199 : vector<8x64xf32>
    %cst_49 = arith.constant 1.000000e+00 : f32
    %201 = vector.broadcast %cst_49 : f32 to vector<8x64xf32>
    %202 = arith.addf %201, %200 : vector<8x64xf32>
    %203 = arith.divf %201, %202 : vector<8x64xf32>
    %204 = vector.extract_strided_slice %203 {offsets = [0, 0], sizes = [8, 32], strides = [1, 1]} : vector<8x64xf32> to vector<8x32xf32>
    %205 = vector.extract_strided_slice %203 {offsets = [0, 32], sizes = [8, 32], strides = [1, 1]} : vector<8x64xf32> to vector<8x32xf32>
    %206 = vector.extract_strided_slice %191 {offsets = [0, 64], sizes = [8, 32], strides = [1, 1]} : vector<8x96xf32> to vector<8x32xf32>
    %207 = vector.extract_strided_slice %195 {offsets = [0, 64], sizes = [8, 32], strides = [1, 1]} : vector<8x224xf32> to vector<8x32xf32>
    %208 = arith.mulf %204, %207 : vector<8x32xf32>
    %209 = arith.addf %206, %208 : vector<8x32xf32>
    %210 = math.tanh %209 : vector<8x32xf32>
    %cst_50 = arith.constant 1.000000e+00 : f32
    %211 = vector.broadcast %cst_50 : f32 to vector<8x32xf32>
    %212 = arith.subf %211, %205 : vector<8x32xf32>
    %213 = arith.mulf %212, %210 : vector<8x32xf32>
    %214 = arith.mulf %205, %159 : vector<8x32xf32>
    %215 = arith.addf %213, %214 : vector<8x32xf32>
    %216 = arith.addf %215, %190 : vector<8x32xf32>
    %cst_51 = arith.constant dense<0.000000e+00> : vector<8x96xf32>
    %217 = tpu.matmul %215, %12, %cst_51 {dimension_numbers = #tpu.dot_dimension_numbers<[1], [0], [0], [1], [0, 0, 1, 1], [], []>} : vector<8x32xf32>, vector<32x96xf32>, vector<8x96xf32> -> vector<8x96xf32>
    %218 = arith.addf %192, %217 : vector<8x96xf32>
    %219 = vector.extract_strided_slice %218 {offsets = [0, 0], sizes = [8, 64], strides = [1, 1]} : vector<8x96xf32> to vector<8x64xf32>
    %220 = vector.extract_strided_slice %195 {offsets = [0, 128], sizes = [8, 64], strides = [1, 1]} : vector<8x224xf32> to vector<8x64xf32>
    %221 = arith.addf %219, %220 : vector<8x64xf32>
    %222 = arith.negf %221 : vector<8x64xf32>
    %223 = math.exp %222 : vector<8x64xf32>
    %cst_52 = arith.constant 1.000000e+00 : f32
    %224 = vector.broadcast %cst_52 : f32 to vector<8x64xf32>
    %225 = arith.addf %224, %223 : vector<8x64xf32>
    %226 = arith.divf %224, %225 : vector<8x64xf32>
    %227 = vector.extract_strided_slice %226 {offsets = [0, 0], sizes = [8, 32], strides = [1, 1]} : vector<8x64xf32> to vector<8x32xf32>
    %228 = vector.extract_strided_slice %226 {offsets = [0, 32], sizes = [8, 32], strides = [1, 1]} : vector<8x64xf32> to vector<8x32xf32>
    %229 = vector.extract_strided_slice %218 {offsets = [0, 64], sizes = [8, 32], strides = [1, 1]} : vector<8x96xf32> to vector<8x32xf32>
    %230 = vector.extract_strided_slice %195 {offsets = [0, 192], sizes = [8, 32], strides = [1, 1]} : vector<8x224xf32> to vector<8x32xf32>
    %231 = arith.mulf %227, %230 : vector<8x32xf32>
    %232 = arith.addf %229, %231 : vector<8x32xf32>
    %233 = math.tanh %232 : vector<8x32xf32>
    %cst_53 = arith.constant 1.000000e+00 : f32
    %234 = vector.broadcast %cst_53 : f32 to vector<8x32xf32>
    %235 = arith.subf %234, %228 : vector<8x32xf32>
    %236 = arith.mulf %235, %233 : vector<8x32xf32>
    %237 = arith.mulf %228, %182 : vector<8x32xf32>
    %238 = arith.addf %236, %237 : vector<8x32xf32>
    %239 = arith.addf %238, %216 : vector<8x32xf32>
    %240 = arith.index_cast %187 : i32 to index
    %c0_54 = arith.constant 0 : index
    %241 = vector.load %arg12[%240, %c0_54] : memref<64x32xf32, #tpu.memory_space<vmem>>, vector<8x32xf32>
    tpu.vector_store %arg12[%240, %c0_54], %239 {strides = array<i32>} : memref<64x32xf32, #tpu.memory_space<vmem>>, vector<8x32xf32>,
    %c4_i32 = arith.constant 4 : i32
    %c8_i32_55 = arith.constant 8 : i32
    %242 = arith.muli %c4_i32, %c8_i32_55 : i32
    %243 = tpu.assume_multiple %242, 8 : i32
    %244 = arith.index_cast %243 : i32 to index
    %c0_56 = arith.constant 0 : index
    %245 = vector.load %arg11[%244, %c0_56] : memref<64x288xf32, #tpu.memory_space<vmem>>, vector<8x288xf32>
    %246 = vector.extract_strided_slice %245 {offsets = [0, 0], sizes = [8, 32], strides = [1, 1]} : vector<8x288xf32> to vector<8x32xf32>
    %247 = vector.extract_strided_slice %245 {offsets = [0, 32], sizes = [8, 96], strides = [1, 1]} : vector<8x288xf32> to vector<8x96xf32>
    %248 = vector.extract_strided_slice %245 {offsets = [0, 128], sizes = [8, 96], strides = [1, 1]} : vector<8x288xf32> to vector<8x96xf32>
    %249 = tpu.concatenate %215, %238 in 1 : vector<8x32xf32>, vector<8x32xf32> -> vector<8x64xf32>
    %cst_57 = arith.constant dense<0.000000e+00> : vector<8x224xf32>
    %250 = tpu.matmul %249, %11, %cst_57 {dimension_numbers = #tpu.dot_dimension_numbers<[1], [0], [0], [1], [0, 0, 1, 1], [], []>} : vector<8x64xf32>, vector<64x224xf32>, vector<8x224xf32> -> vector<8x224xf32>
    %251 = arith.addf %250, %15 : vector<8x224xf32>
    %252 = vector.extract_strided_slice %247 {offsets = [0, 0], sizes = [8, 64], strides = [1, 1]} : vector<8x96xf32> to vector<8x64xf32>
    %253 = vector.extract_strided_slice %251 {offsets = [0, 0], sizes = [8, 64], strides = [1, 1]} : vector<8x224xf32> to vector<8x64xf32>
    %254 = arith.addf %252, %253 : vector<8x64xf32>
    %255 = arith.negf %254 : vector<8x64xf32>
    %256 = math.exp %255 : vector<8x64xf32>
    %cst_58 = arith.constant 1.000000e+00 : f32
    %257 = vector.broadcast %cst_58 : f32 to vector<8x64xf32>
    %258 = arith.addf %257, %256 : vector<8x64xf32>
    %259 = arith.divf %257, %258 : vector<8x64xf32>
    %260 = vector.extract_strided_slice %259 {offsets = [0, 0], sizes = [8, 32], strides = [1, 1]} : vector<8x64xf32> to vector<8x32xf32>
    %261 = vector.extract_strided_slice %259 {offsets = [0, 32], sizes = [8, 32], strides = [1, 1]} : vector<8x64xf32> to vector<8x32xf32>
    %262 = vector.extract_strided_slice %247 {offsets = [0, 64], sizes = [8, 32], strides = [1, 1]} : vector<8x96xf32> to vector<8x32xf32>
    %263 = vector.extract_strided_slice %251 {offsets = [0, 64], sizes = [8, 32], strides = [1, 1]} : vector<8x224xf32> to vector<8x32xf32>
    %264 = arith.mulf %260, %263 : vector<8x32xf32>
    %265 = arith.addf %262, %264 : vector<8x32xf32>
    %266 = math.tanh %265 : vector<8x32xf32>
    %cst_59 = arith.constant 1.000000e+00 : f32
    %267 = vector.broadcast %cst_59 : f32 to vector<8x32xf32>
    %268 = arith.subf %267, %261 : vector<8x32xf32>
    %269 = arith.mulf %268, %266 : vector<8x32xf32>
    %270 = arith.mulf %261, %215 : vector<8x32xf32>
    %271 = arith.addf %269, %270 : vector<8x32xf32>
    %272 = arith.addf %271, %246 : vector<8x32xf32>
    %cst_60 = arith.constant dense<0.000000e+00> : vector<8x96xf32>
    %273 = tpu.matmul %271, %12, %cst_60 {dimension_numbers = #tpu.dot_dimension_numbers<[1], [0], [0], [1], [0, 0, 1, 1], [], []>} : vector<8x32xf32>, vector<32x96xf32>, vector<8x96xf32> -> vector<8x96xf32>
    %274 = arith.addf %248, %273 : vector<8x96xf32>
    %275 = vector.extract_strided_slice %274 {offsets = [0, 0], sizes = [8, 64], strides = [1, 1]} : vector<8x96xf32> to vector<8x64xf32>
    %276 = vector.extract_strided_slice %251 {offsets = [0, 128], sizes = [8, 64], strides = [1, 1]} : vector<8x224xf32> to vector<8x64xf32>
    %277 = arith.addf %275, %276 : vector<8x64xf32>
    %278 = arith.negf %277 : vector<8x64xf32>
    %279 = math.exp %278 : vector<8x64xf32>
    %cst_61 = arith.constant 1.000000e+00 : f32
    %280 = vector.broadcast %cst_61 : f32 to vector<8x64xf32>
    %281 = arith.addf %280, %279 : vector<8x64xf32>
    %282 = arith.divf %280, %281 : vector<8x64xf32>
    %283 = vector.extract_strided_slice %282 {offsets = [0, 0], sizes = [8, 32], strides = [1, 1]} : vector<8x64xf32> to vector<8x32xf32>
    %284 = vector.extract_strided_slice %282 {offsets = [0, 32], sizes = [8, 32], strides = [1, 1]} : vector<8x64xf32> to vector<8x32xf32>
    %285 = vector.extract_strided_slice %274 {offsets = [0, 64], sizes = [8, 32], strides = [1, 1]} : vector<8x96xf32> to vector<8x32xf32>
    %286 = vector.extract_strided_slice %251 {offsets = [0, 192], sizes = [8, 32], strides = [1, 1]} : vector<8x224xf32> to vector<8x32xf32>
    %287 = arith.mulf %283, %286 : vector<8x32xf32>
    %288 = arith.addf %285, %287 : vector<8x32xf32>
    %289 = math.tanh %288 : vector<8x32xf32>
    %cst_62 = arith.constant 1.000000e+00 : f32
    %290 = vector.broadcast %cst_62 : f32 to vector<8x32xf32>
    %291 = arith.subf %290, %284 : vector<8x32xf32>
    %292 = arith.mulf %291, %289 : vector<8x32xf32>
    %293 = arith.mulf %284, %238 : vector<8x32xf32>
    %294 = arith.addf %292, %293 : vector<8x32xf32>
    %295 = arith.addf %294, %272 : vector<8x32xf32>
    %296 = arith.index_cast %243 : i32 to index
    %c0_63 = arith.constant 0 : index
    %297 = vector.load %arg12[%296, %c0_63] : memref<64x32xf32, #tpu.memory_space<vmem>>, vector<8x32xf32>
    tpu.vector_store %arg12[%296, %c0_63], %295 {strides = array<i32>} : memref<64x32xf32, #tpu.memory_space<vmem>>, vector<8x32xf32>,
    %c5_i32 = arith.constant 5 : i32
    %c8_i32_64 = arith.constant 8 : i32
    %298 = arith.muli %c5_i32, %c8_i32_64 : i32
    %299 = tpu.assume_multiple %298, 8 : i32
    %300 = arith.index_cast %299 : i32 to index
    %c0_65 = arith.constant 0 : index
    %301 = vector.load %arg11[%300, %c0_65] : memref<64x288xf32, #tpu.memory_space<vmem>>, vector<8x288xf32>
    %302 = vector.extract_strided_slice %301 {offsets = [0, 0], sizes = [8, 32], strides = [1, 1]} : vector<8x288xf32> to vector<8x32xf32>
    %303 = vector.extract_strided_slice %301 {offsets = [0, 32], sizes = [8, 96], strides = [1, 1]} : vector<8x288xf32> to vector<8x96xf32>
    %304 = vector.extract_strided_slice %301 {offsets = [0, 128], sizes = [8, 96], strides = [1, 1]} : vector<8x288xf32> to vector<8x96xf32>
    %305 = tpu.concatenate %271, %294 in 1 : vector<8x32xf32>, vector<8x32xf32> -> vector<8x64xf32>
    %cst_66 = arith.constant dense<0.000000e+00> : vector<8x224xf32>
    %306 = tpu.matmul %305, %11, %cst_66 {dimension_numbers = #tpu.dot_dimension_numbers<[1], [0], [0], [1], [0, 0, 1, 1], [], []>} : vector<8x64xf32>, vector<64x224xf32>, vector<8x224xf32> -> vector<8x224xf32>
    %307 = arith.addf %306, %15 : vector<8x224xf32>
    %308 = vector.extract_strided_slice %303 {offsets = [0, 0], sizes = [8, 64], strides = [1, 1]} : vector<8x96xf32> to vector<8x64xf32>
    %309 = vector.extract_strided_slice %307 {offsets = [0, 0], sizes = [8, 64], strides = [1, 1]} : vector<8x224xf32> to vector<8x64xf32>
    %310 = arith.addf %308, %309 : vector<8x64xf32>
    %311 = arith.negf %310 : vector<8x64xf32>
    %312 = math.exp %311 : vector<8x64xf32>
    %cst_67 = arith.constant 1.000000e+00 : f32
    %313 = vector.broadcast %cst_67 : f32 to vector<8x64xf32>
    %314 = arith.addf %313, %312 : vector<8x64xf32>
    %315 = arith.divf %313, %314 : vector<8x64xf32>
    %316 = vector.extract_strided_slice %315 {offsets = [0, 0], sizes = [8, 32], strides = [1, 1]} : vector<8x64xf32> to vector<8x32xf32>
    %317 = vector.extract_strided_slice %315 {offsets = [0, 32], sizes = [8, 32], strides = [1, 1]} : vector<8x64xf32> to vector<8x32xf32>
    %318 = vector.extract_strided_slice %303 {offsets = [0, 64], sizes = [8, 32], strides = [1, 1]} : vector<8x96xf32> to vector<8x32xf32>
    %319 = vector.extract_strided_slice %307 {offsets = [0, 64], sizes = [8, 32], strides = [1, 1]} : vector<8x224xf32> to vector<8x32xf32>
    %320 = arith.mulf %316, %319 : vector<8x32xf32>
    %321 = arith.addf %318, %320 : vector<8x32xf32>
    %322 = math.tanh %321 : vector<8x32xf32>
    %cst_68 = arith.constant 1.000000e+00 : f32
    %323 = vector.broadcast %cst_68 : f32 to vector<8x32xf32>
    %324 = arith.subf %323, %317 : vector<8x32xf32>
    %325 = arith.mulf %324, %322 : vector<8x32xf32>
    %326 = arith.mulf %317, %271 : vector<8x32xf32>
    %327 = arith.addf %325, %326 : vector<8x32xf32>
    %328 = arith.addf %327, %302 : vector<8x32xf32>
    %cst_69 = arith.constant dense<0.000000e+00> : vector<8x96xf32>
    %329 = tpu.matmul %327, %12, %cst_69 {dimension_numbers = #tpu.dot_dimension_numbers<[1], [0], [0], [1], [0, 0, 1, 1], [], []>} : vector<8x32xf32>, vector<32x96xf32>, vector<8x96xf32> -> vector<8x96xf32>
    %330 = arith.addf %304, %329 : vector<8x96xf32>
    %331 = vector.extract_strided_slice %330 {offsets = [0, 0], sizes = [8, 64], strides = [1, 1]} : vector<8x96xf32> to vector<8x64xf32>
    %332 = vector.extract_strided_slice %307 {offsets = [0, 128], sizes = [8, 64], strides = [1, 1]} : vector<8x224xf32> to vector<8x64xf32>
    %333 = arith.addf %331, %332 : vector<8x64xf32>
    %334 = arith.negf %333 : vector<8x64xf32>
    %335 = math.exp %334 : vector<8x64xf32>
    %cst_70 = arith.constant 1.000000e+00 : f32
    %336 = vector.broadcast %cst_70 : f32 to vector<8x64xf32>
    %337 = arith.addf %336, %335 : vector<8x64xf32>
    %338 = arith.divf %336, %337 : vector<8x64xf32>
    %339 = vector.extract_strided_slice %338 {offsets = [0, 0], sizes = [8, 32], strides = [1, 1]} : vector<8x64xf32> to vector<8x32xf32>
    %340 = vector.extract_strided_slice %338 {offsets = [0, 32], sizes = [8, 32], strides = [1, 1]} : vector<8x64xf32> to vector<8x32xf32>
    %341 = vector.extract_strided_slice %330 {offsets = [0, 64], sizes = [8, 32], strides = [1, 1]} : vector<8x96xf32> to vector<8x32xf32>
    %342 = vector.extract_strided_slice %307 {offsets = [0, 192], sizes = [8, 32], strides = [1, 1]} : vector<8x224xf32> to vector<8x32xf32>
    %343 = arith.mulf %339, %342 : vector<8x32xf32>
    %344 = arith.addf %341, %343 : vector<8x32xf32>
    %345 = math.tanh %344 : vector<8x32xf32>
    %cst_71 = arith.constant 1.000000e+00 : f32
    %346 = vector.broadcast %cst_71 : f32 to vector<8x32xf32>
    %347 = arith.subf %346, %340 : vector<8x32xf32>
    %348 = arith.mulf %347, %345 : vector<8x32xf32>
    %349 = arith.mulf %340, %294 : vector<8x32xf32>
    %350 = arith.addf %348, %349 : vector<8x32xf32>
    %351 = arith.addf %350, %328 : vector<8x32xf32>
    %352 = arith.index_cast %299 : i32 to index
    %c0_72 = arith.constant 0 : index
    %353 = vector.load %arg12[%352, %c0_72] : memref<64x32xf32, #tpu.memory_space<vmem>>, vector<8x32xf32>
    tpu.vector_store %arg12[%352, %c0_72], %351 {strides = array<i32>} : memref<64x32xf32, #tpu.memory_space<vmem>>, vector<8x32xf32>,
    %c6_i32 = arith.constant 6 : i32
    %c8_i32_73 = arith.constant 8 : i32
    %354 = arith.muli %c6_i32, %c8_i32_73 : i32
    %355 = tpu.assume_multiple %354, 8 : i32
    %356 = arith.index_cast %355 : i32 to index
    %c0_74 = arith.constant 0 : index
    %357 = vector.load %arg11[%356, %c0_74] : memref<64x288xf32, #tpu.memory_space<vmem>>, vector<8x288xf32>
    %358 = vector.extract_strided_slice %357 {offsets = [0, 0], sizes = [8, 32], strides = [1, 1]} : vector<8x288xf32> to vector<8x32xf32>
    %359 = vector.extract_strided_slice %357 {offsets = [0, 32], sizes = [8, 96], strides = [1, 1]} : vector<8x288xf32> to vector<8x96xf32>
    %360 = vector.extract_strided_slice %357 {offsets = [0, 128], sizes = [8, 96], strides = [1, 1]} : vector<8x288xf32> to vector<8x96xf32>
    %361 = tpu.concatenate %327, %350 in 1 : vector<8x32xf32>, vector<8x32xf32> -> vector<8x64xf32>
    %cst_75 = arith.constant dense<0.000000e+00> : vector<8x224xf32>
    %362 = tpu.matmul %361, %11, %cst_75 {dimension_numbers = #tpu.dot_dimension_numbers<[1], [0], [0], [1], [0, 0, 1, 1], [], []>} : vector<8x64xf32>, vector<64x224xf32>, vector<8x224xf32> -> vector<8x224xf32>
    %363 = arith.addf %362, %15 : vector<8x224xf32>
    %364 = vector.extract_strided_slice %359 {offsets = [0, 0], sizes = [8, 64], strides = [1, 1]} : vector<8x96xf32> to vector<8x64xf32>
    %365 = vector.extract_strided_slice %363 {offsets = [0, 0], sizes = [8, 64], strides = [1, 1]} : vector<8x224xf32> to vector<8x64xf32>
    %366 = arith.addf %364, %365 : vector<8x64xf32>
    %367 = arith.negf %366 : vector<8x64xf32>
    %368 = math.exp %367 : vector<8x64xf32>
    %cst_76 = arith.constant 1.000000e+00 : f32
    %369 = vector.broadcast %cst_76 : f32 to vector<8x64xf32>
    %370 = arith.addf %369, %368 : vector<8x64xf32>
    %371 = arith.divf %369, %370 : vector<8x64xf32>
    %372 = vector.extract_strided_slice %371 {offsets = [0, 0], sizes = [8, 32], strides = [1, 1]} : vector<8x64xf32> to vector<8x32xf32>
    %373 = vector.extract_strided_slice %371 {offsets = [0, 32], sizes = [8, 32], strides = [1, 1]} : vector<8x64xf32> to vector<8x32xf32>
    %374 = vector.extract_strided_slice %359 {offsets = [0, 64], sizes = [8, 32], strides = [1, 1]} : vector<8x96xf32> to vector<8x32xf32>
    %375 = vector.extract_strided_slice %363 {offsets = [0, 64], sizes = [8, 32], strides = [1, 1]} : vector<8x224xf32> to vector<8x32xf32>
    %376 = arith.mulf %372, %375 : vector<8x32xf32>
    %377 = arith.addf %374, %376 : vector<8x32xf32>
    %378 = math.tanh %377 : vector<8x32xf32>
    %cst_77 = arith.constant 1.000000e+00 : f32
    %379 = vector.broadcast %cst_77 : f32 to vector<8x32xf32>
    %380 = arith.subf %379, %373 : vector<8x32xf32>
    %381 = arith.mulf %380, %378 : vector<8x32xf32>
    %382 = arith.mulf %373, %327 : vector<8x32xf32>
    %383 = arith.addf %381, %382 : vector<8x32xf32>
    %384 = arith.addf %383, %358 : vector<8x32xf32>
    %cst_78 = arith.constant dense<0.000000e+00> : vector<8x96xf32>
    %385 = tpu.matmul %383, %12, %cst_78 {dimension_numbers = #tpu.dot_dimension_numbers<[1], [0], [0], [1], [0, 0, 1, 1], [], []>} : vector<8x32xf32>, vector<32x96xf32>, vector<8x96xf32> -> vector<8x96xf32>
    %386 = arith.addf %360, %385 : vector<8x96xf32>
    %387 = vector.extract_strided_slice %386 {offsets = [0, 0], sizes = [8, 64], strides = [1, 1]} : vector<8x96xf32> to vector<8x64xf32>
    %388 = vector.extract_strided_slice %363 {offsets = [0, 128], sizes = [8, 64], strides = [1, 1]} : vector<8x224xf32> to vector<8x64xf32>
    %389 = arith.addf %387, %388 : vector<8x64xf32>
    %390 = arith.negf %389 : vector<8x64xf32>
    %391 = math.exp %390 : vector<8x64xf32>
    %cst_79 = arith.constant 1.000000e+00 : f32
    %392 = vector.broadcast %cst_79 : f32 to vector<8x64xf32>
    %393 = arith.addf %392, %391 : vector<8x64xf32>
    %394 = arith.divf %392, %393 : vector<8x64xf32>
    %395 = vector.extract_strided_slice %394 {offsets = [0, 0], sizes = [8, 32], strides = [1, 1]} : vector<8x64xf32> to vector<8x32xf32>
    %396 = vector.extract_strided_slice %394 {offsets = [0, 32], sizes = [8, 32], strides = [1, 1]} : vector<8x64xf32> to vector<8x32xf32>
    %397 = vector.extract_strided_slice %386 {offsets = [0, 64], sizes = [8, 32], strides = [1, 1]} : vector<8x96xf32> to vector<8x32xf32>
    %398 = vector.extract_strided_slice %363 {offsets = [0, 192], sizes = [8, 32], strides = [1, 1]} : vector<8x224xf32> to vector<8x32xf32>
    %399 = arith.mulf %395, %398 : vector<8x32xf32>
    %400 = arith.addf %397, %399 : vector<8x32xf32>
    %401 = math.tanh %400 : vector<8x32xf32>
    %cst_80 = arith.constant 1.000000e+00 : f32
    %402 = vector.broadcast %cst_80 : f32 to vector<8x32xf32>
    %403 = arith.subf %402, %396 : vector<8x32xf32>
    %404 = arith.mulf %403, %401 : vector<8x32xf32>
    %405 = arith.mulf %396, %350 : vector<8x32xf32>
    %406 = arith.addf %404, %405 : vector<8x32xf32>
    %407 = arith.addf %406, %384 : vector<8x32xf32>
    %408 = arith.index_cast %355 : i32 to index
    %c0_81 = arith.constant 0 : index
    %409 = vector.load %arg12[%408, %c0_81] : memref<64x32xf32, #tpu.memory_space<vmem>>, vector<8x32xf32>
    tpu.vector_store %arg12[%408, %c0_81], %407 {strides = array<i32>} : memref<64x32xf32, #tpu.memory_space<vmem>>, vector<8x32xf32>,
    %c7_i32 = arith.constant 7 : i32
    %c8_i32_82 = arith.constant 8 : i32
    %410 = arith.muli %c7_i32, %c8_i32_82 : i32
    %411 = tpu.assume_multiple %410, 8 : i32
    %412 = arith.index_cast %411 : i32 to index
    %c0_83 = arith.constant 0 : index
    %413 = vector.load %arg11[%412, %c0_83] : memref<64x288xf32, #tpu.memory_space<vmem>>, vector<8x288xf32>
    %414 = vector.extract_strided_slice %413 {offsets = [0, 0], sizes = [8, 32], strides = [1, 1]} : vector<8x288xf32> to vector<8x32xf32>
    %415 = vector.extract_strided_slice %413 {offsets = [0, 32], sizes = [8, 96], strides = [1, 1]} : vector<8x288xf32> to vector<8x96xf32>
    %416 = vector.extract_strided_slice %413 {offsets = [0, 128], sizes = [8, 96], strides = [1, 1]} : vector<8x288xf32> to vector<8x96xf32>
    %417 = tpu.concatenate %383, %406 in 1 : vector<8x32xf32>, vector<8x32xf32> -> vector<8x64xf32>
    %cst_84 = arith.constant dense<0.000000e+00> : vector<8x224xf32>
    %418 = tpu.matmul %417, %11, %cst_84 {dimension_numbers = #tpu.dot_dimension_numbers<[1], [0], [0], [1], [0, 0, 1, 1], [], []>} : vector<8x64xf32>, vector<64x224xf32>, vector<8x224xf32> -> vector<8x224xf32>
    %419 = arith.addf %418, %15 : vector<8x224xf32>
    %420 = vector.extract_strided_slice %415 {offsets = [0, 0], sizes = [8, 64], strides = [1, 1]} : vector<8x96xf32> to vector<8x64xf32>
    %421 = vector.extract_strided_slice %419 {offsets = [0, 0], sizes = [8, 64], strides = [1, 1]} : vector<8x224xf32> to vector<8x64xf32>
    %422 = arith.addf %420, %421 : vector<8x64xf32>
    %423 = arith.negf %422 : vector<8x64xf32>
    %424 = math.exp %423 : vector<8x64xf32>
    %cst_85 = arith.constant 1.000000e+00 : f32
    %425 = vector.broadcast %cst_85 : f32 to vector<8x64xf32>
    %426 = arith.addf %425, %424 : vector<8x64xf32>
    %427 = arith.divf %425, %426 : vector<8x64xf32>
    %428 = vector.extract_strided_slice %427 {offsets = [0, 0], sizes = [8, 32], strides = [1, 1]} : vector<8x64xf32> to vector<8x32xf32>
    %429 = vector.extract_strided_slice %427 {offsets = [0, 32], sizes = [8, 32], strides = [1, 1]} : vector<8x64xf32> to vector<8x32xf32>
    %430 = vector.extract_strided_slice %415 {offsets = [0, 64], sizes = [8, 32], strides = [1, 1]} : vector<8x96xf32> to vector<8x32xf32>
    %431 = vector.extract_strided_slice %419 {offsets = [0, 64], sizes = [8, 32], strides = [1, 1]} : vector<8x224xf32> to vector<8x32xf32>
    %432 = arith.mulf %428, %431 : vector<8x32xf32>
    %433 = arith.addf %430, %432 : vector<8x32xf32>
    %434 = math.tanh %433 : vector<8x32xf32>
    %cst_86 = arith.constant 1.000000e+00 : f32
    %435 = vector.broadcast %cst_86 : f32 to vector<8x32xf32>
    %436 = arith.subf %435, %429 : vector<8x32xf32>
    %437 = arith.mulf %436, %434 : vector<8x32xf32>
    %438 = arith.mulf %429, %383 : vector<8x32xf32>
    %439 = arith.addf %437, %438 : vector<8x32xf32>
    %440 = arith.addf %439, %414 : vector<8x32xf32>
    %cst_87 = arith.constant dense<0.000000e+00> : vector<8x96xf32>
    %441 = tpu.matmul %439, %12, %cst_87 {dimension_numbers = #tpu.dot_dimension_numbers<[1], [0], [0], [1], [0, 0, 1, 1], [], []>} : vector<8x32xf32>, vector<32x96xf32>, vector<8x96xf32> -> vector<8x96xf32>
    %442 = arith.addf %416, %441 : vector<8x96xf32>
    %443 = vector.extract_strided_slice %442 {offsets = [0, 0], sizes = [8, 64], strides = [1, 1]} : vector<8x96xf32> to vector<8x64xf32>
    %444 = vector.extract_strided_slice %419 {offsets = [0, 128], sizes = [8, 64], strides = [1, 1]} : vector<8x224xf32> to vector<8x64xf32>
    %445 = arith.addf %443, %444 : vector<8x64xf32>
    %446 = arith.negf %445 : vector<8x64xf32>
    %447 = math.exp %446 : vector<8x64xf32>
    %cst_88 = arith.constant 1.000000e+00 : f32
    %448 = vector.broadcast %cst_88 : f32 to vector<8x64xf32>
    %449 = arith.addf %448, %447 : vector<8x64xf32>
    %450 = arith.divf %448, %449 : vector<8x64xf32>
    %451 = vector.extract_strided_slice %450 {offsets = [0, 0], sizes = [8, 32], strides = [1, 1]} : vector<8x64xf32> to vector<8x32xf32>
    %452 = vector.extract_strided_slice %450 {offsets = [0, 32], sizes = [8, 32], strides = [1, 1]} : vector<8x64xf32> to vector<8x32xf32>
    %453 = vector.extract_strided_slice %442 {offsets = [0, 64], sizes = [8, 32], strides = [1, 1]} : vector<8x96xf32> to vector<8x32xf32>
    %454 = vector.extract_strided_slice %419 {offsets = [0, 192], sizes = [8, 32], strides = [1, 1]} : vector<8x224xf32> to vector<8x32xf32>
    %455 = arith.mulf %451, %454 : vector<8x32xf32>
    %456 = arith.addf %453, %455 : vector<8x32xf32>
    %457 = math.tanh %456 : vector<8x32xf32>
    %cst_89 = arith.constant 1.000000e+00 : f32
    %458 = vector.broadcast %cst_89 : f32 to vector<8x32xf32>
    %459 = arith.subf %458, %452 : vector<8x32xf32>
    %460 = arith.mulf %459, %457 : vector<8x32xf32>
    %461 = arith.mulf %452, %406 : vector<8x32xf32>
    %462 = arith.addf %460, %461 : vector<8x32xf32>
    %463 = arith.addf %462, %440 : vector<8x32xf32>
    %464 = arith.index_cast %411 : i32 to index
    %c0_90 = arith.constant 0 : index
    %465 = vector.load %arg12[%464, %c0_90] : memref<64x32xf32, #tpu.memory_space<vmem>>, vector<8x32xf32>
    tpu.vector_store %arg12[%464, %c0_90], %463 {strides = array<i32>} : memref<64x32xf32, #tpu.memory_space<vmem>>, vector<8x32xf32>,
    %c8_i32_91 = arith.constant 8 : i32
    %c0_92 = arith.constant 0 : index
    %c0_93 = arith.constant 0 : index
    %466 = vector.load %arg13[%c0_92, %c0_93] : memref<8x32xf32, #tpu.memory_space<vmem>>, vector<8x32xf32>
    tpu.vector_store %arg13[%c0_92, %c0_93], %439 {strides = array<i32>} : memref<8x32xf32, #tpu.memory_space<vmem>>, vector<8x32xf32>,
    %c0_94 = arith.constant 0 : index
    %c0_95 = arith.constant 0 : index
    %467 = vector.load %arg14[%c0_94, %c0_95] : memref<8x32xf32, #tpu.memory_space<vmem>>, vector<8x32xf32>
    tpu.vector_store %arg14[%c0_94, %c0_95], %462 {strides = array<i32>} : memref<8x32xf32, #tpu.memory_space<vmem>>, vector<8x32xf32>,
    %c0_96 = arith.constant 0 : index
    %c0_97 = arith.constant 0 : index
    %468 = vector.load %arg12[%c0_96, %c0_97] : memref<64x32xf32, #tpu.memory_space<vmem>>, vector<64x32xf32>
    %c0_98 = arith.constant 0 : index
    %c224 = arith.constant 224 : index
    %469 = vector.load %arg11[%c0_98, %c224] : memref<64x288xf32, #tpu.memory_space<vmem>>, vector<64x32xf32>
    %c0_99 = arith.constant 0 : index
    %c256 = arith.constant 256 : index
    %470 = vector.load %arg11[%c0_99, %c256] : memref<64x288xf32, #tpu.memory_space<vmem>>, vector<64x32xf32>
    %c0_100 = arith.constant 0 : index
    %c0_101 = arith.constant 0 : index
    %c0_102 = arith.constant 0 : index
    %471 = vector.load %arg7[%c0_100, %c0_101, %c0_102] : memref<2x32x32xf32, #tpu.memory_space<vmem>>, vector<1x32x32xf32>
    %472 = vector.shape_cast %471 : vector<1x32x32xf32> to vector<32x32xf32>
    %cst_103 = arith.constant dense<0.000000e+00> : vector<64x32xf32>
    %473 = tpu.matmul %468, %472, %cst_103 {dimension_numbers = #tpu.dot_dimension_numbers<[1], [0], [0], [1], [0, 0, 1, 1], [], []>} : vector<64x32xf32>, vector<32x32xf32>, vector<64x32xf32> -> vector<64x32xf32>
    %474 = arith.addf %473, %469 : vector<64x32xf32>
    %cst_104 = arith.constant 0.000000e+00 : f32
    %475 = vector.broadcast %cst_104 : f32 to vector<64x32xf32>
    %476 = arith.maximumf %474, %475 : vector<64x32xf32>
    %c1 = arith.constant 1 : index
    %c0_105 = arith.constant 0 : index
    %c0_106 = arith.constant 0 : index
    %477 = vector.load %arg7[%c1, %c0_105, %c0_106] : memref<2x32x32xf32, #tpu.memory_space<vmem>>, vector<1x32x32xf32>
    %478 = vector.shape_cast %477 : vector<1x32x32xf32> to vector<32x32xf32>
    %cst_107 = arith.constant dense<0.000000e+00> : vector<64x32xf32>
    %479 = tpu.matmul %476, %478, %cst_107 {dimension_numbers = #tpu.dot_dimension_numbers<[1], [0], [0], [1], [0, 0, 1, 1], [], []>} : vector<64x32xf32>, vector<32x32xf32>, vector<64x32xf32> -> vector<64x32xf32>
    %480 = arith.addf %479, %470 : vector<64x32xf32>
    %cst_108 = arith.constant 0.000000e+00 : f32
    %481 = vector.broadcast %cst_108 : f32 to vector<64x32xf32>
    %482 = arith.maximumf %480, %481 : vector<64x32xf32>
    %c0_109 = arith.constant 0 : index
    %c0_110 = arith.constant 0 : index
    %483 = vector.load %arg8[%c0_109, %c0_110] : memref<32x128xf32, #tpu.memory_space<vmem>>, vector<32x128xf32>
    %cst_111 = arith.constant dense<0.000000e+00> : vector<64x128xf32>
    %484 = tpu.matmul %482, %483, %cst_111 {dimension_numbers = #tpu.dot_dimension_numbers<[1], [0], [0], [1], [0, 0, 1, 1], [], []>} : vector<64x32xf32>, vector<32x128xf32>, vector<64x128xf32> -> vector<64x128xf32>
    %c0_112 = arith.constant 0 : index
    %c0_113 = arith.constant 0 : index
    %485 = vector.load %arg9[%c0_112, %c0_113] : memref<1x128xf32, #tpu.memory_space<vmem>>, vector<1x128xf32>
    %486 = vector.broadcast %485 : vector<1x128xf32> to vector<64x128xf32>
    %487 = arith.addf %484, %486 : vector<64x128xf32>
    %c0_114 = arith.constant 0 : index
    %c0_115 = arith.constant 0 : index
    %c0_116 = arith.constant 0 : index
    %488 = vector.load %arg10[%c0_114, %c0_115, %c0_116] : memref<1x64x128xf32, #tpu.memory_space<vmem>>, vector<1x64x128xf32>
    %489 = vector.shape_cast %488 : vector<1x64x128xf32> to vector<64x128xf32>
    %490 = vector.shape_cast %487 : vector<64x128xf32> to vector<1x64x128xf32>
    tpu.vector_store %arg10[%c0_114, %c0_115, %c0_116], %490 {strides = array<i32>} : memref<1x64x128xf32, #tpu.memory_space<vmem>>, vector<1x64x128xf32>,
    return
  }
  func.func @transform_0(%arg0: i32) -> (i32, i32, i32) {
    %c0_i32 = arith.constant 0 : i32
    %c0_i32_0 = arith.constant 0 : i32
    %c0_i32_1 = arith.constant 0 : i32
    return %arg0, %c0_i32, %c0_i32_0 : i32, i32, i32
  }
  func.func @transform_1(%arg0: i32) -> (i32, i32) {
    %c0_i32 = arith.constant 0 : i32
    %c0_i32_0 = arith.constant 0 : i32
    %c0_i32_1 = arith.constant 0 : i32
    return %c0_i32, %c0_i32_0 : i32, i32
  }
  func.func @transform_2(%arg0: i32) -> (i32, i32) {
    %c0_i32 = arith.constant 0 : i32
    %c0_i32_0 = arith.constant 0 : i32
    %c0_i32_1 = arith.constant 0 : i32
    return %c0_i32, %c0_i32_0 : i32, i32
  }
  func.func @transform_3(%arg0: i32) -> (i32, i32) {
    %c0_i32 = arith.constant 0 : i32
    %c0_i32_0 = arith.constant 0 : i32
    %c0_i32_1 = arith.constant 0 : i32
    return %c0_i32, %c0_i32_0 : i32, i32
  }
  func.func @transform_4(%arg0: i32) -> (i32, i32) {
    %c0_i32 = arith.constant 0 : i32
    %c0_i32_0 = arith.constant 0 : i32
    %c0_i32_1 = arith.constant 0 : i32
    return %c0_i32, %c0_i32_0 : i32, i32
  }
  func.func @transform_5(%arg0: i32) -> (i32, i32) {
    %c0_i32 = arith.constant 0 : i32
    %c0_i32_0 = arith.constant 0 : i32
    %c0_i32_1 = arith.constant 0 : i32
    return %c0_i32, %c0_i32_0 : i32, i32
  }
  func.func @transform_6(%arg0: i32) -> (i32, i32, i32) {
    %c0_i32 = arith.constant 0 : i32
    %c0_i32_0 = arith.constant 0 : i32
    %c0_i32_1 = arith.constant 0 : i32
    %c0_i32_2 = arith.constant 0 : i32
    return %c0_i32, %c0_i32_0, %c0_i32_1 : i32, i32, i32
  }
  func.func @transform_7(%arg0: i32) -> (i32, i32) {
    %c0_i32 = arith.constant 0 : i32
    %c0_i32_0 = arith.constant 0 : i32
    %c0_i32_1 = arith.constant 0 : i32
    return %c0_i32, %c0_i32_0 : i32, i32
  }
  func.func @transform_8(%arg0: i32) -> (i32, i32) {
    %c0_i32 = arith.constant 0 : i32
    %c0_i32_0 = arith.constant 0 : i32
    %c0_i32_1 = arith.constant 0 : i32
    return %c0_i32, %c0_i32_0 : i32, i32
  }
  func.func @transform_9(%arg0: i32) -> (i32, i32, i32) {
    %c0_i32 = arith.constant 0 : i32
    %c0_i32_0 = arith.constant 0 : i32
    %c0_i32_1 = arith.constant 0 : i32
    return %arg0, %c0_i32, %c0_i32_0 : i32, i32, i32
  }
}

</mosaic_0001>

<llo_original>
// kernel: tpu_custom_call.1
$region0: #{tpu_custom_call.1}
  #allocation0 [shape = 'u32[]', space=smem, size = 0x4, offset = 0x4, fixed_abs, tag = 'smem constant byte address 0x4 - core index']
  #allocation1 [shape = 'u32[144,128]{1,0:T(1,128)}', space=vmem, size = 0x12000, scoped, tag = 'internal scratch']
  #allocation2 [shape = 'f32[64,288]{1,0:T(8,128)}', space=vmem, size = 0x18000, scoped, tag = 'scratch operand']
  #allocation3 [shape = 'f32[64,32]{1,0:T(8,128)}', space=vmem, size = 0x8000, scoped, tag = 'scratch operand']
  #allocation4 [shape = 'f32[8,32]{1,0:T(8,128)}', space=vmem, size = 0x1000, scoped, tag = 'scratch operand']
  #allocation5 [shape = 'f32[8,32]{1,0:T(8,128)}', space=vmem, size = 0x1000, scoped, tag = 'scratch operand']
  %s0 = inlined_call_operand.vmem [shape: f32[1,64,49], index: 0, kind: input, shape index: {}]
  %s1 = inlined_call_operand.hbm [shape: f32[49,288], index: 1, kind: input, shape index: {}]
  %s2 = inlined_call_operand.vmem [shape: f32[1,288], index: 2, kind: input, shape index: {}]
  %s3 = inlined_call_operand.hbm [shape: f32[64,224], index: 3, kind: input, shape index: {}]
  %s4 = inlined_call_operand.vmem [shape: f32[1,224], index: 4, kind: input, shape index: {}]
  %s5 = inlined_call_operand.vmem [shape: f32[32,96], index: 5, kind: input, shape index: {}]
  %s6 = inlined_call_operand.vmem [shape: f32[2,32,32], index: 6, kind: input, shape index: {}]
  %s7 = inlined_call_operand.hbm [shape: f32[32,128], index: 7, kind: input, shape index: {}]
  %s8 = inlined_call_operand.vmem [shape: f32[1,128], index: 8, kind: input, shape index: {}]
  %s9 = inlined_call_operand.hbm [shape: f32[1,64,128], index: 9, kind: output, shape index: {}]
  %s10 = sld [smem:[#allocation0]]
  $region62: #{tpu_custom_call.1} parent=0
    _
  %s12 = ssub.s32 1, %s10
  %s13 = scalar_select 0, %s12, %s10
  $region1: #{tpu_custom_call.1} parent=0
    #allocation6 [shape = 'u8[86016]{0}', space=vmem, size = 0x15000, scoped, tag = 'input window, operand 1, single buffered']
    #allocation7 [shape = 's32[1]{0}', space=sflag, size = 0x4, scoped, tag = 'scoped memory for tpu_custom_call.1']
    #allocation8 [shape = 's32[1]{0}', space=sflag, size = 0x4, scoped, tag = 'scoped memory for tpu_custom_call.1']
    #allocation9 [shape = 'u8[65536]{0}', space=vmem, size = 0x10000, scoped, tag = 'input window, operand 3, single buffered']
    #allocation10 [shape = 's32[1]{0}', space=sflag, size = 0x4, scoped, tag = 'scoped memory for tpu_custom_call.1']
    #allocation11 [shape = 'u8[16384]{0}', space=vmem, size = 0x4000, scoped, tag = 'input window, operand 7, single buffered']
    #allocation12 [shape = 'u8[32768]{0}', space=vmem, size = 0x8000, scoped, tag = 'output window, operand 0, single buffered']
    %14 = vsyncpa [#allocation7], 0
    %15 = vsyncpa [#allocation10], 0
    %16 = vsyncpa [#allocation8], 0
    // Predicated region
    $region2: #{tpu_custom_call.1} parent=1 // pred_check
      _
    $region3: #{tpu_custom_call.1} parent=1 // pred_check_branch
      %18 = sbr.rel (0) target = $region5
    $region4: #{tpu_custom_call.1} parent=1 // pred_region
      _
    $region5: #{tpu_custom_call.1} parent=1 // pred_fallthru
      _
    // Predicated region
    $region6: #{tpu_custom_call.1} parent=1 // pred_check
      _
    $region7: #{tpu_custom_call.1} parent=1 // pred_check_branch
      %20 = sbr.rel (0) target = $region9
    $region8: #{tpu_custom_call.1} parent=1 // pred_region
      %s22 = ssub.s32 2688, 2688
      %23 = vsyncadd [#allocation7], %s22
      %s24 = sshll.u32 [#allocation6], 4
      %s25 = int_to_ptr.vmem [resolvable:$true] %s24
      %30 = dma.hbm_to_vmem [thread:$0]  %s1, 2688, %s25, [#allocation7], 384, 384, 24
    $region9: #{tpu_custom_call.1} parent=1 // pred_fallthru
      _
    // Predicated region
    $region10: #{tpu_custom_call.1} parent=1 // pred_check
      _
    $region11: #{tpu_custom_call.1} parent=1 // pred_check_branch
      %32 = sbr.rel (0) target = $region13
    $region12: #{tpu_custom_call.1} parent=1 // pred_region
      _
    $region13: #{tpu_custom_call.1} parent=1 // pred_fallthru
      _
    // Predicated region
    $region14: #{tpu_custom_call.1} parent=1 // pred_check
      _
    $region15: #{tpu_custom_call.1} parent=1 // pred_check_branch
      %34 = sbr.rel (0) target = $region17
    $region16: #{tpu_custom_call.1} parent=1 // pred_region
      %s36 = ssub.s32 2048, 2048
      %37 = vsyncadd [#allocation10], %s36
      %s38 = sshll.u32 [#allocation9], 4
      %s39 = int_to_ptr.vmem [resolvable:$true] %s38
      %44 = dma.hbm_to_vmem [thread:$0]  %s3, 2048, %s39, [#allocation10], 256, 256, 16
    $region17: #{tpu_custom_call.1} parent=1 // pred_fallthru
      _
    // Predicated region
    $region18: #{tpu_custom_call.1} parent=1 // pred_check
      _
    $region19: #{tpu_custom_call.1} parent=1 // pred_check_branch
      %46 = sbr.rel (0) target = $region21
    $region20: #{tpu_custom_call.1} parent=1 // pred_region
      _
    $region21: #{tpu_custom_call.1} parent=1 // pred_fallthru
      _
    // Predicated region
    $region22: #{tpu_custom_call.1} parent=1 // pred_check
      _
    $region23: #{tpu_custom_call.1} parent=1 // pred_check_branch
      %48 = sbr.rel (0) target = $region25
    $region24: #{tpu_custom_call.1} parent=1 // pred_region
      _
    $region25: #{tpu_custom_call.1} parent=1 // pred_fallthru
      _
    // Predicated region
    $region26: #{tpu_custom_call.1} parent=1 // pred_check
      _
    $region27: #{tpu_custom_call.1} parent=1 // pred_check_branch
      %50 = sbr.rel (0) target = $region29
    $region28: #{tpu_custom_call.1} parent=1 // pred_region
      _
    $region29: #{tpu_custom_call.1} parent=1 // pred_fallthru
      _
    // Predicated region
    $region30: #{tpu_custom_call.1} parent=1 // pred_check
      _
    $region31: #{tpu_custom_call.1} parent=1 // pred_check_branch
      %52 = sbr.rel (0) target = $region33
    $region32: #{tpu_custom_call.1} parent=1 // pred_region
      %s54 = ssub.s32 512, 512
      %55 = vsyncadd [#allocation10], %s54
      %s56 = sshll.u32 [#allocation11], 4
      %s57 = int_to_ptr.vmem [resolvable:$true] %s56
      %62 = dma.hbm_to_vmem [thread:$0]  %s7, 512, %s57, [#allocation10], 128, 128, 8
    $region33: #{tpu_custom_call.1} parent=1 // pred_fallthru
      _
    // Predicated region
    $region34: #{tpu_custom_call.1} parent=1 // pred_check
      _
    $region35: #{tpu_custom_call.1} parent=1 // pred_check_branch
      %64 = sbr.rel (0) target = $region37
    $region36: #{tpu_custom_call.1} parent=1 // pred_region
      _
    $region37: #{tpu_custom_call.1} parent=1 // pred_fallthru
      _
    // Predicated region
    $region38: #{tpu_custom_call.1} parent=1 // pred_check
      _
    $region39: #{tpu_custom_call.1} parent=1 // pred_check_branch
      %66 = sbr.rel (0) target = $region41
    $region40: #{tpu_custom_call.1} parent=1 // pred_region
      %67 = dma.done [#allocation7], 2688
    $region41: #{tpu_custom_call.1} parent=1 // pred_fallthru
      _
    // Predicated region
    $region42: #{tpu_custom_call.1} parent=1 // pred_check
      _
    $region43: #{tpu_custom_call.1} parent=1 // pred_check_branch
      %69 = sbr.rel (0) target = $region45
    $region44: #{tpu_custom_call.1} parent=1 // pred_region
      %70 = dma.done [#allocation10], 2048
    $region45: #{tpu_custom_call.1} parent=1 // pred_fallthru
      _
    // Predicated region
    $region46: #{tpu_custom_call.1} parent=1 // pred_check
      _
    $region47: #{tpu_custom_call.1} parent=1 // pred_check_branch
      %72 = sbr.rel (0) target = $region49
    $region48: #{tpu_custom_call.1} parent=1 // pred_region
      %73 = dma.done [#allocation10], 512
    $region49: #{tpu_custom_call.1} parent=1 // pred_fallthru
      _
    %p74 = scmp.eq.s32.totalorder 0, 0
    // Predicated region
    $region50: #{tpu_custom_call.1} parent=1 // pred_check
      %p75 = pneg %p74
    $region51: #{tpu_custom_call.1} parent=1 // pred_check_branch
      %77 = sbr.rel (%p75) target = $region53
    $region52: #{tpu_custom_call.1} parent=1 // pred_region
      %vm78 = vcmask 261120
      %79 = vst.msk [vmem:[#allocation4] sm:$0xff] %vm78, 0.0
      %80 = vst.msk [vmem:[#allocation5] sm:$0xff] %vm78, 0.0
    $region53: #{tpu_custom_call.1} parent=1 // pred_fallthru
      _
    %v81 = vld [vmem:[%s0] sm:$0xff]
    %v82 = vld [vmem:[%s0 + $0x8] sm:$0xff]
    %v83 = vld [vmem:[%s0 + $0x10] sm:$0xff]
    %v84 = vld [vmem:[%s0 + $0x18] sm:$0xff]
    %v85 = vld [vmem:[%s0 + $0x20] sm:$0xff]
    %v86 = vld [vmem:[%s0 + $0x28] sm:$0xff]
    %v87 = vld [vmem:[%s0 + $0x30] sm:$0xff]
    %v88 = vld [vmem:[%s0 + $0x38] sm:$0xff]
    %v89 = vld [vmem:[#allocation6] sm:$0xff]
    %v90 = vld [vmem:[#allocation6 + $0x8] sm:$0xff]
    %v91 = vld [vmem:[#allocation6 + $0x10] sm:$0xff]
    %v92 = vld [vmem:[#allocation6 + $0x18] sm:$0xff]
    %v93 = vld [vmem:[#allocation6 + $0x20] sm:$0xff]
    %v94 = vld [vmem:[#allocation6 + $0x28] sm:$0xff]
    %v95 = vld [vmem:[#allocation6 + $0x30] sm:$0xff]
    %v96 = vld [vmem:[#allocation6 + $0x38] sm:$0xff]
    %v97 = vld [vmem:[#allocation6 + $0x40] sm:$0xff]
    %v98 = vld [vmem:[#allocation6 + $0x48] sm:$0xff]
    %v99 = vld [vmem:[#allocation6 + $0x50] sm:$0xff]
    %v100 = vld [vmem:[#allocation6 + $0x58] sm:$0xff]
    %v101 = vld [vmem:[#allocation6 + $0x60] sm:$0xff]
    %v102 = vld [vmem:[#allocation6 + $0x68] sm:$0xff]
    %v103 = vld [vmem:[#allocation6 + $0x70] sm:$0xff]
    %v104 = vld [vmem:[#allocation6 + $0x78] sm:$0xff]
    %v105 = vld [vmem:[#allocation6 + $0x80] sm:$0xff]
    %v106 = vld [vmem:[#allocation6 + $0x88] sm:$0xff]
    %v107 = vld [vmem:[#allocation6 + $0x90] sm:$0x1]
    %v108 = vld [vmem:[#allocation6 + $0x98] sm:$0x1]
    %v109 = vld [vmem:[#allocation6 + $0xa0] sm:$0x1]
    %v110 = vld [vmem:[%s2] sm:$0x7]
    %v112 = vlaneseq
    %v113 = vshrl.u32 %v112, 7
    %v114 = vsub.s32 0, %v113
    %v115 = vrot.slane %v110, %v114
    %v116 = vlaneseq
    %v117 = vshrl.u32 %v116, 7
    %v118 = vsub.s32 1, %v117
    %v119 = vrot.slane %v110, %v118
    %v120 = vlaneseq
    %v121 = vshrl.u32 %v120, 7
    %v122 = vsub.s32 2, %v121
    %v123 = vrot.slane %v110, %v122
    %vm127 = vcmask 400384
    %v129 = vsel %vm127, %v81, 0
    %v132 = vsel %vm127, %v82, 0
    %v135 = vsel %vm127, %v83, 0
    %v138 = vsel %vm127, %v84, 0
    %v141 = vsel %vm127, %v85, 0
    %v144 = vsel %vm127, %v86, 0
    %v147 = vsel %vm127, %v87, 0
    %v150 = vsel %vm127, %v88, 0
    %vm152 = vcmask 1040384
    %v154 = vsel %vm152, %v107, 0
    %v157 = vsel %vm152, %v108, 0
    %v160 = vsel %vm152, %v109, 0
    %162 = vmatprep.subr.mxu0 0.0
    %163 = vmatpush1.msra.mxu0 0.0
    %164 = vmatprep.subr.mxu0 0.0
    %165 = vmatpush1.msra.mxu0 0.0
    %166 = vmatprep.subr.mxu0 0.0
    %167 = vmatpush1.msra.mxu0 0.0
    %168 = vmatprep.subr.mxu0 0.0
    %169 = vmatpush1.msra.mxu0 0.0
    %170 = vmatprep.subr.mxu0 0.0
    %171 = vmatpush1.msra.mxu0 0.0
    %172 = vmatprep.subr.mxu0 0.0
    %173 = vmatpush1.msra.mxu0 0.0
    %174 = vmatprep.subr.mxu0 0.0
    %175 = vmatpush1.msra.mxu0 0.0
    %176 = vmatprep.subr.mxu0 0.0
    %177 = vmatpush1.msra.mxu0 0.0
    %178 = vmatprep.subr.mxu0 0.0
    %179 = vmatpush1.msra.mxu0 0.0
    %180 = vmatprep.subr.mxu0 %v157
    %181 = vmatpush1.msra.mxu0 %v154
    %182 = vmatprep.subr.mxu0 %v105
    %183 = vmatpush1.msra.mxu0 %v104
    %184 = vmatprep.subr.mxu0 %v102
    %185 = vmatpush1.msra.mxu0 %v101
    %186 = vmatprep.subr.mxu0 %v99
    %187 = vmatpush1.msra.mxu0 %v98
    %188 = vmatprep.subr.mxu0 %v96
    %189 = vmatpush1.msra.mxu0 %v95
    %190 = vmatprep.subr.mxu0 %v93
    %191 = vmatpush1.msra.mxu0 %v92
    %192 = vmatprep.subr.mxu0 %v90
    %193 = vmatpush1.msra.mxu0 %v89
    %194 = vmatprep.subr.mxu0 0.0
    %195 = vmatpush2.msra.mxu0 0.0
    %196 = vmatprep.subr.mxu0 0.0
    %197 = vmatpush2.msra.mxu0 0.0
    %198 = vmatprep.subr.mxu0 0.0
    %199 = vmatpush2.msra.mxu0 0.0
    %200 = vmatprep.subr.mxu0 0.0
    %201 = vmatpush2.msra.mxu0 0.0
    %202 = vmatprep.subr.mxu0 0.0
    %203 = vmatpush2.msra.mxu0 0.0
    %204 = vmatprep.subr.mxu0 0.0
    %205 = vmatpush2.msra.mxu0 0.0
    %206 = vmatprep.subr.mxu0 0.0
    %207 = vmatpush2.msra.mxu0 0.0
    %208 = vmatprep.subr.mxu0 0.0
    %209 = vmatpush2.msra.mxu0 0.0
    %210 = vmatprep.subr.mxu0 0.0
    %211 = vmatpush2.msra.mxu0 0.0
    %212 = vmatprep.subr.mxu0 0.0
    %213 = vmatpush2.msra.mxu0 0.0
    %214 = vmatprep.subr.mxu0 0.0
    %215 = vmatpush2.msra.mxu0 0.0
    %216 = vmatprep.subr.mxu0 0.0
    %217 = vmatpush2.msra.mxu0 0.0
    %218 = vmatprep.subr.mxu0 0.0
    %219 = vmatpush2.msra.mxu0 0.0
    %220 = vmatprep.subr.mxu0 0.0
    %221 = vmatpush2.msra.mxu0 0.0
    %222 = vmatprep.subr.mxu0 0.0
    %223 = vmatpush2.msra.mxu0 0.0
    %224 = vmatprep.subr.mxu0 0.0
    %225 = vmatpush2.msra.mxu0 0.0
    %226 = vmatprep.mubr.f32.mxu0 0.0
    %227 = vmatmul.mubr.f32.gmra.mxu0 %v129
    %v228 = vpop.f32.mrf.mxu0
    %v229 = vadd.f32 %v115, %v228
    %v230 = vpop.f32.mrf.mxu0
    %v231 = vadd.f32 %v119, %v230
    %232 = vmatprep.mubr.f32.mxu0 0.0
    %233 = vmatmul.mubr.f32.gmra.mxu0 %v132
    %v234 = vpop.f32.mrf.mxu0
    %v235 = vadd.f32 %v115, %v234
    %v236 = vpop.f32.mrf.mxu0
    %v237 = vadd.f32 %v119, %v236
    %238 = vmatprep.mubr.f32.mxu0 0.0
    %239 = vmatmul.mubr.f32.gmra.mxu0 %v135
    %v240 = vpop.f32.mrf.mxu0
    %v241 = vadd.f32 %v115, %v240
    %v242 = vpop.f32.mrf.mxu0
    %v243 = vadd.f32 %v119, %v242
    %244 = vmatprep.mubr.f32.mxu0 0.0
    %245 = vmatmul.mubr.f32.gmra.mxu0 %v138
    %v246 = vpop.f32.mrf.mxu0
    %v247 = vadd.f32 %v115, %v246
    %v248 = vpop.f32.mrf.mxu0
    %v249 = vadd.f32 %v119, %v248
    %250 = vmatprep.mubr.f32.mxu0 0.0
    %251 = vmatmul.mubr.f32.gmra.mxu0 %v141
    %v252 = vpop.f32.mrf.mxu0
    %v253 = vadd.f32 %v115, %v252
    %v254 = vpop.f32.mrf.mxu0
    %v255 = vadd.f32 %v119, %v254
    %256 = vmatprep.mubr.f32.mxu0 0.0
    %257 = vmatmul.mubr.f32.gmra.mxu0 %v144
    %v258 = vpop.f32.mrf.mxu0
    %v259 = vadd.f32 %v115, %v258
    %v260 = vpop.f32.mrf.mxu0
    %v261 = vadd.f32 %v119, %v260
    %262 = vmatprep.mubr.f32.mxu0 0.0
    %263 = vmatmul.mubr.f32.gmra.mxu0 %v147
    %v264 = vpop.f32.mrf.mxu0
    %v265 = vadd.f32 %v115, %v264
    %v266 = vpop.f32.mrf.mxu0
    %v267 = vadd.f32 %v119, %v266
    %268 = vmatprep.mubr.f32.mxu0 0.0
    %269 = vmatmul.mubr.f32.gmra.mxu0 %v150
    %v270 = vpop.f32.mrf.mxu0
    %v271 = vadd.f32 %v115, %v270
    %v272 = vpop.f32.mrf.mxu0
    %v273 = vadd.f32 %v119, %v272
    %274 = vdwg.mxu0
    %275 = vmatprep.subr.mxu0 0.0
    %276 = vmatpush1.msra.mxu0 0.0
    %277 = vmatprep.subr.mxu0 0.0
    %278 = vmatpush1.msra.mxu0 0.0
    %279 = vmatprep.subr.mxu0 0.0
    %280 = vmatpush1.msra.mxu0 0.0
    %281 = vmatprep.subr.mxu0 0.0
    %282 = vmatpush1.msra.mxu0 0.0
    %283 = vmatprep.subr.mxu0 0.0
    %284 = vmatpush1.msra.mxu0 0.0
    %285 = vmatprep.subr.mxu0 0.0
    %286 = vmatpush1.msra.mxu0 0.0
    %287 = vmatprep.subr.mxu0 0.0
    %288 = vmatpush1.msra.mxu0 0.0
    %289 = vmatprep.subr.mxu0 0.0
    %290 = vmatpush1.msra.mxu0 0.0
    %291 = vmatprep.subr.mxu0 0.0
    %292 = vmatpush1.msra.mxu0 0.0
    %293 = vmatprep.subr.mxu0 0.0
    %294 = vmatpush1.msra.mxu0 %v160
    %295 = vmatprep.subr.mxu0 0.0
    %296 = vmatpush1.msra.mxu0 %v106
    %297 = vmatprep.subr.mxu0 0.0
    %298 = vmatpush1.msra.mxu0 %v103
    %299 = vmatprep.subr.mxu0 0.0
    %300 = vmatpush1.msra.mxu0 %v100
    %301 = vmatprep.subr.mxu0 0.0
    %302 = vmatpush1.msra.mxu0 %v97
    %303 = vmatprep.subr.mxu0 0.0
    %304 = vmatpush1.msra.mxu0 %v94
    %305 = vmatprep.subr.mxu0 0.0
    %306 = vmatpush1.msra.mxu0 %v91
    %307 = vmatprep.subr.mxu0 0.0
    %308 = vmatpush2.msra.mxu0 0.0
    %309 = vmatprep.subr.mxu0 0.0
    %310 = vmatpush2.msra.mxu0 0.0
    %311 = vmatprep.subr.mxu0 0.0
    %312 = vmatpush2.msra.mxu0 0.0
    %313 = vmatprep.subr.mxu0 0.0
    %314 = vmatpush2.msra.mxu0 0.0
    %315 = vmatprep.subr.mxu0 0.0
    %316 = vmatpush2.msra.mxu0 0.0
    %317 = vmatprep.subr.mxu0 0.0
    %318 = vmatpush2.msra.mxu0 0.0
    %319 = vmatprep.subr.mxu0 0.0
    %320 = vmatpush2.msra.mxu0 0.0
    %321 = vmatprep.subr.mxu0 0.0
    %322 = vmatpush2.msra.mxu0 0.0
    %323 = vmatprep.subr.mxu0 0.0
    %324 = vmatpush2.msra.mxu0 0.0
    %325 = vmatprep.subr.mxu0 0.0
    %326 = vmatpush2.msra.mxu0 0.0
    %327 = vmatprep.subr.mxu0 0.0
    %328 = vmatpush2.msra.mxu0 0.0
    %329 = vmatprep.subr.mxu0 0.0
    %330 = vmatpush2.msra.mxu0 0.0
    %331 = vmatprep.subr.mxu0 0.0
    %332 = vmatpush2.msra.mxu0 0.0
    %333 = vmatprep.subr.mxu0 0.0
    %334 = vmatpush2.msra.mxu0 0.0
    %335 = vmatprep.subr.mxu0 0.0
    %336 = vmatpush2.msra.mxu0 0.0
    %337 = vmatprep.subr.mxu0 0.0
    %338 = vmatpush2.msra.mxu0 0.0
    %339 = vmatprep.mubr.f32.mxu0 0.0
    %340 = vmatmul.mubr.f32.gmra.mxu0 %v129
    %v341 = vpop.f32.mrf.mxu0
    %v342 = vadd.f32 %v123, %v341
    %v343 = vpop.f32.mrf.mxu0
    %344 = vmatprep.mubr.f32.mxu0 0.0
    %345 = vmatmul.mubr.f32.gmra.mxu0 %v132
    %v346 = vpop.f32.mrf.mxu0
    %v347 = vadd.f32 %v123, %v346
    %v348 = vpop.f32.mrf.mxu0
    %349 = vmatprep.mubr.f32.mxu0 0.0
    %350 = vmatmul.mubr.f32.gmra.mxu0 %v135
    %v351 = vpop.f32.mrf.mxu0
    %v352 = vadd.f32 %v123, %v351
    %v353 = vpop.f32.mrf.mxu0
    %354 = vmatprep.mubr.f32.mxu0 0.0
    %355 = vmatmul.mubr.f32.gmra.mxu0 %v138
    %v356 = vpop.f32.mrf.mxu0
    %v357 = vadd.f32 %v123, %v356
    %v358 = vpop.f32.mrf.mxu0
    %359 = vmatprep.mubr.f32.mxu0 0.0
    %360 = vmatmul.mubr.f32.gmra.mxu0 %v141
    %v361 = vpop.f32.mrf.mxu0
    %v362 = vadd.f32 %v123, %v361
    %v363 = vpop.f32.mrf.mxu0
    %364 = vmatprep.mubr.f32.mxu0 0.0
    %365 = vmatmul.mubr.f32.gmra.mxu0 %v144
    %v366 = vpop.f32.mrf.mxu0
    %v367 = vadd.f32 %v123, %v366
    %v368 = vpop.f32.mrf.mxu0
    %369 = vmatprep.mubr.f32.mxu0 0.0
    %370 = vmatmul.mubr.f32.gmra.mxu0 %v147
    %v371 = vpop.f32.mrf.mxu0
    %v372 = vadd.f32 %v123, %v371
    %v373 = vpop.f32.mrf.mxu0
    %374 = vmatprep.mubr.f32.mxu0 0.0
    %375 = vmatmul.mubr.f32.gmra.mxu0 %v150
    %v376 = vpop.f32.mrf.mxu0
    %v377 = vadd.f32 %v123, %v376
    %v378 = vpop.f32.mrf.mxu0
    %379 = vdwg.mxu0
    %380 = vst [vmem:[#allocation2] sm:$0xff] %v229
    %381 = vst [vmem:[#allocation2 + $0x8] sm:$0xff] %v231
    %vm382 = vcmask 261120
    %383 = vst.msk [vmem:[#allocation2 + $0x10] sm:$0xff] %vm382, %v342
    %384 = vst [vmem:[#allocation2 + $0x18] sm:$0xff] %v235
    %385 = vst [vmem:[#allocation2 + $0x20] sm:$0xff] %v237
    %386 = vst.msk [vmem:[#allocation2 + $0x28] sm:$0xff] %vm382, %v347
    %387 = vst [vmem:[#allocation2 + $0x30] sm:$0xff] %v241
    %388 = vst [vmem:[#allocation2 + $0x38] sm:$0xff] %v243
    %389 = vst.msk [vmem:[#allocation2 + $0x40] sm:$0xff] %vm382, %v352
    %390 = vst [vmem:[#allocation2 + $0x48] sm:$0xff] %v247
    %391 = vst [vmem:[#allocation2 + $0x50] sm:$0xff] %v249
    %392 = vst.msk [vmem:[#allocation2 + $0x58] sm:$0xff] %vm382, %v357
    %393 = vst [vmem:[#allocation2 + $0x60] sm:$0xff] %v253
    %394 = vst [vmem:[#allocation2 + $0x68] sm:$0xff] %v255
    %395 = vst.msk [vmem:[#allocation2 + $0x70] sm:$0xff] %vm382, %v362
    %396 = vst [vmem:[#allocation2 + $0x78] sm:$0xff] %v259
    %397 = vst [vmem:[#allocation2 + $0x80] sm:$0xff] %v261
    %398 = vst.msk [vmem:[#allocation2 + $0x88] sm:$0xff] %vm382, %v367
    %399 = vst [vmem:[#allocation2 + $0x90] sm:$0xff] %v265
    %400 = vst [vmem:[#allocation2 + $0x98] sm:$0xff] %v267
    %401 = vst.msk [vmem:[#allocation2 + $0xa0] sm:$0xff] %vm382, %v372
    %402 = vst [vmem:[#allocation2 + $0xa8] sm:$0xff] %v271
    %403 = vst [vmem:[#allocation2 + $0xb0] sm:$0xff] %v273
    %404 = vst.msk [vmem:[#allocation2 + $0xb8] sm:$0xff] %vm382, %v377
    %v405 = vld [vmem:[#allocation9] sm:$0xff]
    %v406 = vld [vmem:[#allocation9 + $0x8] sm:$0xff]
    %v407 = vld [vmem:[#allocation9 + $0x10] sm:$0xff]
    %v408 = vld [vmem:[#allocation9 + $0x18] sm:$0xff]
    %v409 = vld [vmem:[#allocation9 + $0x20] sm:$0xff]
    %v410 = vld [vmem:[#allocation9 + $0x28] sm:$0xff]
    %v411 = vld [vmem:[#allocation9 + $0x30] sm:$0xff]
    %v412 = vld [vmem:[#allocation9 + $0x38] sm:$0xff]
    %v413 = vld [vmem:[#allocation9 + $0x40] sm:$0xff]
    %v414 = vld [vmem:[#allocation9 + $0x48] sm:$0xff]
    %v415 = vld [vmem:[#allocation9 + $0x50] sm:$0xff]
    %v416 = vld [vmem:[#allocation9 + $0x58] sm:$0xff]
    %v417 = vld [vmem:[#allocation9 + $0x60] sm:$0xff]
    %v418 = vld [vmem:[#allocation9 + $0x68] sm:$0xff]
    %v419 = vld [vmem:[#allocation9 + $0x70] sm:$0xff]
    %v420 = vld [vmem:[#allocation9 + $0x78] sm:$0xff]
    %v421 = vld [vmem:[%s5] sm:$0xff]
    %v422 = vld [vmem:[%s5 + $0x8] sm:$0xff]
    %v423 = vld [vmem:[%s5 + $0x10] sm:$0xff]
    %v424 = vld [vmem:[%s5 + $0x18] sm:$0xff]
    %v425 = vld [vmem:[%s4] sm:$0x3]
    %v427 = vlaneseq
    %v428 = vshrl.u32 %v427, 7
    %v429 = vsub.s32 0, %v428
    %v430 = vrot.slane %v425, %v429
    %v431 = vlaneseq
    %v432 = vshrl.u32 %v431, 7
    %v433 = vsub.s32 1, %v432
    %v434 = vrot.slane %v425, %v433
    %v437 = vld [vmem:[#allocation4] sm:$0xff]
    %v438 = vld [vmem:[#allocation5] sm:$0xff]
    %s439 = smul.u32 0, 3
    %s440 = smul.addr %s439, 8
    %s441 = scalar_lea.vmem [#allocation2], %s440
    %v442 = vld [vmem:[%s441] sm:$0xff]
    %v443 = vld [vmem:[%s441 + $0x8] sm:$0xff]
    %445 = vrot.lane.b32.xlu0 %v438, 32
    %v446 = vpop.permute.xlu0 %445
    %v448 = vsel %vm382, %v437, %v446
    %vm449 = vcmask 523264
    %v451 = vsel %vm449, %v448, 0
    %453 = vmatprep.subr.mxu0 0.0
    %454 = vmatpush1.msra.mxu0 0.0
    %455 = vmatprep.subr.mxu0 0.0
    %456 = vmatpush1.msra.mxu0 0.0
    %457 = vmatprep.subr.mxu0 0.0
    %458 = vmatpush1.msra.mxu0 0.0
    %459 = vmatprep.subr.mxu0 0.0
    %460 = vmatpush1.msra.mxu0 0.0
    %461 = vmatprep.subr.mxu0 0.0
    %462 = vmatpush1.msra.mxu0 0.0
    %463 = vmatprep.subr.mxu0 0.0
    %464 = vmatpush1.msra.mxu0 0.0
    %465 = vmatprep.subr.mxu0 0.0
    %466 = vmatpush1.msra.mxu0 0.0
    %467 = vmatprep.subr.mxu0 0.0
    %468 = vmatpush1.msra.mxu0 0.0
    %469 = vmatprep.subr.mxu0 %v420
    %470 = vmatpush1.msra.mxu0 %v419
    %471 = vmatprep.subr.mxu0 %v418
    %472 = vmatpush1.msra.mxu0 %v417
    %473 = vmatprep.subr.mxu0 %v416
    %474 = vmatpush1.msra.mxu0 %v415
    %475 = vmatprep.subr.mxu0 %v414
    %476 = vmatpush1.msra.mxu0 %v413
    %477 = vmatprep.subr.mxu0 %v412
    %478 = vmatpush1.msra.mxu0 %v411
    %479 = vmatprep.subr.mxu0 %v410
    %480 = vmatpush1.msra.mxu0 %v409
    %481 = vmatprep.subr.mxu0 %v408
    %482 = vmatpush1.msra.mxu0 %v407
    %483 = vmatprep.subr.mxu0 %v406
    %484 = vmatpush1.msra.mxu0 %v405
    %485 = vmatprep.subr.mxu0 0.0
    %486 = vmatpush2.msra.mxu0 0.0
    %487 = vmatprep.subr.mxu0 0.0
    %488 = vmatpush2.msra.mxu0 0.0
    %489 = vmatprep.subr.mxu0 0.0
    %490 = vmatpush2.msra.mxu0 0.0
    %491 = vmatprep.subr.mxu0 0.0
    %492 = vmatpush2.msra.mxu0 0.0
    %493 = vmatprep.subr.mxu0 0.0
    %494 = vmatpush2.msra.mxu0 0.0
    %495 = vmatprep.subr.mxu0 0.0
    %496 = vmatpush2.msra.mxu0 0.0
    %497 = vmatprep.subr.mxu0 0.0
    %498 = vmatpush2.msra.mxu0 0.0
    %499 = vmatprep.subr.mxu0 0.0
    %500 = vmatpush2.msra.mxu0 0.0
    %501 = vmatprep.subr.mxu0 0.0
    %502 = vmatpush2.msra.mxu0 0.0
    %503 = vmatprep.subr.mxu0 0.0
    %504 = vmatpush2.msra.mxu0 0.0
    %505 = vmatprep.subr.mxu0 0.0
    %506 = vmatpush2.msra.mxu0 0.0
    %507 = vmatprep.subr.mxu0 0.0
    %508 = vmatpush2.msra.mxu0 0.0
    %509 = vmatprep.subr.mxu0 0.0
    %510 = vmatpush2.msra.mxu0 0.0
    %511 = vmatprep.subr.mxu0 0.0
    %512 = vmatpush2.msra.mxu0 0.0
    %513 = vmatprep.subr.mxu0 0.0
    %514 = vmatpush2.msra.mxu0 0.0
    %515 = vmatprep.subr.mxu0 0.0
    %516 = vmatpush2.msra.mxu0 0.0
    %517 = vmatprep.mubr.f32.mxu0 0.0
    %518 = vmatmul.mubr.f32.gmra.mxu0 %v451
    %v519 = vpop.f32.mrf.mxu0
    %v520 = vadd.f32 %v430, %v519
    %v521 = vpop.f32.mrf.mxu0
    %v522 = vadd.f32 %v434, %v521
    %523 = vdwg.mxu0
    %525 = vrot.lane.b32.xlu0 %v520, 32
    %v526 = vpop.permute.xlu0 %525
    %v528 = vadd.f32 %v442, %v526
    %v529 = vxor.u32 %v528, 2147483648
    %v530 = vmul.f32 %v529, 1.442695
    %v531 = vpow.pop %v530
    %v532 = vadd.f32 %v531, 1.0
    %v533 = vrcp.pop %v532
    %v534 = vmul.f32 1.0, %v533
    %535 = vrot.lane.b32.xlu0 %v520, 96
    %v536 = vpop.permute.xlu0 %535
    %v538 = vmul.f32 %v534, %v536
    %540 = vrot.lane.b32.xlu0 %v538, 64
    %v541 = vpop.permute.xlu0 %540
    %v543 = vadd.f32 %v442, %v541
    %v544 = vtanh.pop %v543
    %v545 = vsub.f32 1.0, %v534
    %547 = vrot.lane.b32.xlu0 %v544, 96
    %v548 = vpop.permute.xlu0 %547
    %v550 = vmul.f32 %v545, %v548
    %552 = vrot.lane.b32.xlu0 %v437, 64
    %v553 = vpop.permute.xlu0 %552
    %v555 = vmul.f32 %v534, %v553
    %v556 = vadd.f32 %v550, %v555
    %558 = vrot.lane.b32.xlu0 %v442, 64
    %v559 = vpop.permute.xlu0 %558
    %v561 = vadd.f32 %v556, %v559
    %563 = vrot.lane.b32.xlu0 %v556, 64
    %v564 = vpop.permute.xlu0 %563
    %v565 = vsel %vm382, %v564, 0
    %567 = vmatprep.subr.mxu0 0.0
    %568 = vmatpush1.msra.mxu0 0.0
    %569 = vmatprep.subr.mxu0 0.0
    %570 = vmatpush1.msra.mxu0 0.0
    %571 = vmatprep.subr.mxu0 0.0
    %572 = vmatpush1.msra.mxu0 0.0
    %573 = vmatprep.subr.mxu0 0.0
    %574 = vmatpush1.msra.mxu0 0.0
    %575 = vmatprep.subr.mxu0 0.0
    %576 = vmatpush1.msra.mxu0 0.0
    %577 = vmatprep.subr.mxu0 0.0
    %578 = vmatpush1.msra.mxu0 0.0
    %579 = vmatprep.subr.mxu0 0.0
    %580 = vmatpush1.msra.mxu0 0.0
    %581 = vmatprep.subr.mxu0 0.0
    %582 = vmatpush1.msra.mxu0 0.0
    %583 = vmatprep.subr.mxu0 0.0
    %584 = vmatpush1.msra.mxu0 0.0
    %585 = vmatprep.subr.mxu0 0.0
    %586 = vmatpush1.msra.mxu0 0.0
    %587 = vmatprep.subr.mxu0 0.0
    %588 = vmatpush1.msra.mxu0 0.0
    %589 = vmatprep.subr.mxu0 0.0
    %590 = vmatpush1.msra.mxu0 0.0
    %591 = vmatprep.subr.mxu0 0.0
    %592 = vmatpush1.msra.mxu0 %v424
    %593 = vmatprep.subr.mxu0 0.0
    %594 = vmatpush1.msra.mxu0 %v423
    %595 = vmatprep.subr.mxu0 0.0
    %596 = vmatpush1.msra.mxu0 %v422
    %597 = vmatprep.subr.mxu0 0.0
    %598 = vmatpush1.msra.mxu0 %v421
    %599 = vmatprep.subr.mxu0 0.0
    %600 = vmatpush2.msra.mxu0 0.0
    %601 = vmatprep.subr.mxu0 0.0
    %602 = vmatpush2.msra.mxu0 0.0
    %603 = vmatprep.subr.mxu0 0.0
    %604 = vmatpush2.msra.mxu0 0.0
    %605 = vmatprep.subr.mxu0 0.0
    %606 = vmatpush2.msra.mxu0 0.0
    %607 = vmatprep.subr.mxu0 0.0
    %608 = vmatpush2.msra.mxu0 0.0
    %609 = vmatprep.subr.mxu0 0.0
    %610 = vmatpush2.msra.mxu0 0.0
    %611 = vmatprep.subr.mxu0 0.0
    %612 = vmatpush2.msra.mxu0 0.0
    %613 = vmatprep.subr.mxu0 0.0
    %614 = vmatpush2.msra.mxu0 0.0
    %615 = vmatprep.subr.mxu0 0.0
    %616 = vmatpush2.msra.mxu0 0.0
    %617 = vmatprep.subr.mxu0 0.0
    %618 = vmatpush2.msra.mxu0 0.0
    %619 = vmatprep.subr.mxu0 0.0
    %620 = vmatpush2.msra.mxu0 0.0
    %621 = vmatprep.subr.mxu0 0.0
    %622 = vmatpush2.msra.mxu0 0.0
    %623 = vmatprep.subr.mxu0 0.0
    %624 = vmatpush2.msra.mxu0 0.0
    %625 = vmatprep.subr.mxu0 0.0
    %626 = vmatpush2.msra.mxu0 0.0
    %627 = vmatprep.subr.mxu0 0.0
    %628 = vmatpush2.msra.mxu0 0.0
    %629 = vmatprep.subr.mxu0 0.0
    %630 = vmatpush2.msra.mxu0 0.0
    %631 = vmatprep.mubr.f32.mxu0 0.0
    %632 = vmatmul.mubr.f32.gmra.mxu0 %v565
    %v633 = vpop.f32.mrf.mxu0
    %v634 = vadd.f32 0.0, %v633
    %v635 = vpop.f32.mrf.mxu0
    %636 = vdwg.mxu0
    %v637 = vadd.f32 %v443, %v634
    %v638 = vadd.f32 %v637, %v522
    %v639 = vxor.u32 %v638, 2147483648
    %v640 = vmul.f32 %v639, 1.442695
    %v641 = vpow.pop %v640
    %v642 = vadd.f32 %v641, 1.0
    %v643 = vrcp.pop %v642
    %v644 = vmul.f32 1.0, %v643
    %646 = vrot.lane.b32.xlu0 %v522, 64
    %v647 = vpop.permute.xlu0 %646
    %v649 = vmul.f32 %v644, %v647
    %651 = vrot.lane.b32.xlu0 %v649, 64
    %v652 = vpop.permute.xlu0 %651
    %v654 = vadd.f32 %v637, %v652
    %v655 = vtanh.pop %v654
    %v656 = vsub.f32 1.0, %v644
    %658 = vrot.lane.b32.xlu0 %v655, 96
    %v659 = vpop.permute.xlu0 %658
    %v661 = vmul.f32 %v656, %v659
    %v662 = vmul.f32 %v644, %v446
    %v663 = vadd.f32 %v661, %v662
    %665 = vrot.lane.b32.xlu0 %v561, 96
    %v666 = vpop.permute.xlu0 %665
    %v668 = vadd.f32 %v663, %v666
    %670 = vrot.lane.b32.xlu0 %v668, 96
    %v671 = vpop.permute.xlu0 %670
    %673 = vst.msk [vmem:[#allocation3] sm:$0xff] %vm382, %v671
    %s674 = smul.u32 1, 3
    %s675 = smul.addr %s674, 8
    %s676 = scalar_lea.vmem [#allocation2], %s675
    %v677 = vld [vmem:[%s676] sm:$0xff]
    %v678 = vld [vmem:[%s676 + $0x8] sm:$0xff]
    %v680 = vsel %vm382, %v564, %v663
    %v682 = vsel %vm449, %v680, 0
    %684 = vmatprep.subr.mxu0 0.0
    %685 = vmatpush1.msra.mxu0 0.0
    %686 = vmatprep.subr.mxu0 0.0
    %687 = vmatpush1.msra.mxu0 0.0
    %688 = vmatprep.subr.mxu0 0.0
    %689 = vmatpush1.msra.mxu0 0.0
    %690 = vmatprep.subr.mxu0 0.0
    %691 = vmatpush1.msra.mxu0 0.0
    %692 = vmatprep.subr.mxu0 0.0
    %693 = vmatpush1.msra.mxu0 0.0
    %694 = vmatprep.subr.mxu0 0.0
    %695 = vmatpush1.msra.mxu0 0.0
    %696 = vmatprep.subr.mxu0 0.0
    %697 = vmatpush1.msra.mxu0 0.0
    %698 = vmatprep.subr.mxu0 0.0
    %699 = vmatpush1.msra.mxu0 0.0
    %700 = vmatprep.subr.mxu0 %v420
    %701 = vmatpush1.msra.mxu0 %v419
    %702 = vmatprep.subr.mxu0 %v418
    %703 = vmatpush1.msra.mxu0 %v417
    %704 = vmatprep.subr.mxu0 %v416
    %705 = vmatpush1.msra.mxu0 %v415
    %706 = vmatprep.subr.mxu0 %v414
    %707 = vmatpush1.msra.mxu0 %v413
    %708 = vmatprep.subr.mxu0 %v412
    %709 = vmatpush1.msra.mxu0 %v411
    %710 = vmatprep.subr.mxu0 %v410
    %711 = vmatpush1.msra.mxu0 %v409
    %712 = vmatprep.subr.mxu0 %v408
    %713 = vmatpush1.msra.mxu0 %v407
    %714 = vmatprep.subr.mxu0 %v406
    %715 = vmatpush1.msra.mxu0 %v405
    %716 = vmatprep.subr.mxu0 0.0
    %717 = vmatpush2.msra.mxu0 0.0
    %718 = vmatprep.subr.mxu0 0.0
    %719 = vmatpush2.msra.mxu0 0.0
    %720 = vmatprep.subr.mxu0 0.0
    %721 = vmatpush2.msra.mxu0 0.0
    %722 = vmatprep.subr.mxu0 0.0
    %723 = vmatpush2.msra.mxu0 0.0
    %724 = vmatprep.subr.mxu0 0.0
    %725 = vmatpush2.msra.mxu0 0.0
    %726 = vmatprep.subr.mxu0 0.0
    %727 = vmatpush2.msra.mxu0 0.0
    %728 = vmatprep.subr.mxu0 0.0
    %729 = vmatpush2.msra.mxu0 0.0
    %730 = vmatprep.subr.mxu0 0.0
    %731 = vmatpush2.msra.mxu0 0.0
    %732 = vmatprep.subr.mxu0 0.0
    %733 = vmatpush2.msra.mxu0 0.0
    %734 = vmatprep.subr.mxu0 0.0
    %735 = vmatpush2.msra.mxu0 0.0
    %736 = vmatprep.subr.mxu0 0.0
    %737 = vmatpush2.msra.mxu0 0.0
    %738 = vmatprep.subr.mxu0 0.0
    %739 = vmatpush2.msra.mxu0 0.0
    %740 = vmatprep.subr.mxu0 0.0
    %741 = vmatpush2.msra.mxu0 0.0
    %742 = vmatprep.subr.mxu0 0.0
    %743 = vmatpush2.msra.mxu0 0.0
    %744 = vmatprep.subr.mxu0 0.0
    %745 = vmatpush2.msra.mxu0 0.0
    %746 = vmatprep.subr.mxu0 0.0
    %747 = vmatpush2.msra.mxu0 0.0
    %748 = vmatprep.mubr.f32.mxu0 0.0
    %749 = vmatmul.mubr.f32.gmra.mxu0 %v682
    %v750 = vpop.f32.mrf.mxu0
    %v751 = vadd.f32 %v430, %v750
    %v752 = vpop.f32.mrf.mxu0
    %v753 = vadd.f32 %v434, %v752
    %754 = vdwg.mxu0
    %756 = vrot.lane.b32.xlu0 %v751, 32
    %v757 = vpop.permute.xlu0 %756
    %v759 = vadd.f32 %v677, %v757
    %v760 = vxor.u32 %v759, 2147483648
    %v761 = vmul.f32 %v760, 1.442695
    %v762 = vpow.pop %v761
    %v763 = vadd.f32 %v762, 1.0
    %v764 = vrcp.pop %v763
    %v765 = vmul.f32 1.0, %v764
    %766 = vrot.lane.b32.xlu0 %v751, 96
    %v767 = vpop.permute.xlu0 %766
    %v769 = vmul.f32 %v765, %v767
    %771 = vrot.lane.b32.xlu0 %v769, 64
    %v772 = vpop.permute.xlu0 %771
    %v774 = vadd.f32 %v677, %v772
    %v775 = vtanh.pop %v774
    %v776 = vsub.f32 1.0, %v765
    %778 = vrot.lane.b32.xlu0 %v775, 96
    %v779 = vpop.permute.xlu0 %778
    %v781 = vmul.f32 %v776, %v779
    %v782 = vmul.f32 %v765, %v556
    %v783 = vadd.f32 %v781, %v782
    %785 = vrot.lane.b32.xlu0 %v677, 64
    %v786 = vpop.permute.xlu0 %785
    %v788 = vadd.f32 %v783, %v786
    %790 = vrot.lane.b32.xlu0 %v783, 64
    %v791 = vpop.permute.xlu0 %790
    %v792 = vsel %vm382, %v791, 0
    %794 = vmatprep.subr.mxu0 0.0
    %795 = vmatpush1.msra.mxu0 0.0
    %796 = vmatprep.subr.mxu0 0.0
    %797 = vmatpush1.msra.mxu0 0.0
    %798 = vmatprep.subr.mxu0 0.0
    %799 = vmatpush1.msra.mxu0 0.0
    %800 = vmatprep.subr.mxu0 0.0
    %801 = vmatpush1.msra.mxu0 0.0
    %802 = vmatprep.subr.mxu0 0.0
    %803 = vmatpush1.msra.mxu0 0.0
    %804 = vmatprep.subr.mxu0 0.0
    %805 = vmatpush1.msra.mxu0 0.0
    %806 = vmatprep.subr.mxu0 0.0
    %807 = vmatpush1.msra.mxu0 0.0
    %808 = vmatprep.subr.mxu0 0.0
    %809 = vmatpush1.msra.mxu0 0.0
    %810 = vmatprep.subr.mxu0 0.0
    %811 = vmatpush1.msra.mxu0 0.0
    %812 = vmatprep.subr.mxu0 0.0
    %813 = vmatpush1.msra.mxu0 0.0
    %814 = vmatprep.subr.mxu0 0.0
    %815 = vmatpush1.msra.mxu0 0.0
    %816 = vmatprep.subr.mxu0 0.0
    %817 = vmatpush1.msra.mxu0 0.0
    %818 = vmatprep.subr.mxu0 0.0
    %819 = vmatpush1.msra.mxu0 %v424
    %820 = vmatprep.subr.mxu0 0.0
    %821 = vmatpush1.msra.mxu0 %v423
    %822 = vmatprep.subr.mxu0 0.0
    %823 = vmatpush1.msra.mxu0 %v422
    %824 = vmatprep.subr.mxu0 0.0
    %825 = vmatpush1.msra.mxu0 %v421
    %826 = vmatprep.subr.mxu0 0.0
    %827 = vmatpush2.msra.mxu0 0.0
    %828 = vmatprep.subr.mxu0 0.0
    %829 = vmatpush2.msra.mxu0 0.0
    %830 = vmatprep.subr.mxu0 0.0
    %831 = vmatpush2.msra.mxu0 0.0
    %832 = vmatprep.subr.mxu0 0.0
    %833 = vmatpush2.msra.mxu0 0.0
    %834 = vmatprep.subr.mxu0 0.0
    %835 = vmatpush2.msra.mxu0 0.0
    %836 = vmatprep.subr.mxu0 0.0
    %837 = vmatpush2.msra.mxu0 0.0
    %838 = vmatprep.subr.mxu0 0.0
    %839 = vmatpush2.msra.mxu0 0.0
    %840 = vmatprep.subr.mxu0 0.0
    %841 = vmatpush2.msra.mxu0 0.0
    %842 = vmatprep.subr.mxu0 0.0
    %843 = vmatpush2.msra.mxu0 0.0
    %844 = vmatprep.subr.mxu0 0.0
    %845 = vmatpush2.msra.mxu0 0.0
    %846 = vmatprep.subr.mxu0 0.0
    %847 = vmatpush2.msra.mxu0 0.0
    %848 = vmatprep.subr.mxu0 0.0
    %849 = vmatpush2.msra.mxu0 0.0
    %850 = vmatprep.subr.mxu0 0.0
    %851 = vmatpush2.msra.mxu0 0.0
    %852 = vmatprep.subr.mxu0 0.0
    %853 = vmatpush2.msra.mxu0 0.0
    %854 = vmatprep.subr.mxu0 0.0
    %855 = vmatpush2.msra.mxu0 0.0
    %856 = vmatprep.subr.mxu0 0.0
    %857 = vmatpush2.msra.mxu0 0.0
    %858 = vmatprep.mubr.f32.mxu0 0.0
    %859 = vmatmul.mubr.f32.gmra.mxu0 %v792
    %v860 = vpop.f32.mrf.mxu0
    %v861 = vadd.f32 0.0, %v860
    %v862 = vpop.f32.mrf.mxu0
    %863 = vdwg.mxu0
    %v864 = vadd.f32 %v678, %v861
    %v865 = vadd.f32 %v864, %v753
    %v866 = vxor.u32 %v865, 2147483648
    %v867 = vmul.f32 %v866, 1.442695
    %v868 = vpow.pop %v867
    %v869 = vadd.f32 %v868, 1.0
    %v870 = vrcp.pop %v869
    %v871 = vmul.f32 1.0, %v870
    %873 = vrot.lane.b32.xlu0 %v753, 64
    %v874 = vpop.permute.xlu0 %873
    %v876 = vmul.f32 %v871, %v874
    %878 = vrot.lane.b32.xlu0 %v876, 64
    %v879 = vpop.permute.xlu0 %878
    %v881 = vadd.f32 %v864, %v879
    %v882 = vtanh.pop %v881
    %v883 = vsub.f32 1.0, %v871
    %885 = vrot.lane.b32.xlu0 %v882, 96
    %v886 = vpop.permute.xlu0 %885
    %v888 = vmul.f32 %v883, %v886
    %v889 = vmul.f32 %v871, %v663
    %v890 = vadd.f32 %v888, %v889
    %892 = vrot.lane.b32.xlu0 %v788, 96
    %v893 = vpop.permute.xlu0 %892
    %v895 = vadd.f32 %v890, %v893
    %897 = vrot.lane.b32.xlu0 %v895, 96
    %v898 = vpop.permute.xlu0 %897
    %s900 = scalar_lea.vmem [#allocation3], 8
    %901 = vst.msk [vmem:[%s900] sm:$0xff] %vm382, %v898
    %s902 = smul.u32 2, 3
    %s903 = smul.addr %s902, 8
    %s904 = scalar_lea.vmem [#allocation2], %s903
    %v905 = vld [vmem:[%s904] sm:$0xff]
    %v906 = vld [vmem:[%s904 + $0x8] sm:$0xff]
    %v908 = vsel %vm382, %v791, %v890
    %v910 = vsel %vm449, %v908, 0
    %912 = vmatprep.subr.mxu0 0.0
    %913 = vmatpush1.msra.mxu0 0.0
    %914 = vmatprep.subr.mxu0 0.0
    %915 = vmatpush1.msra.mxu0 0.0
    %916 = vmatprep.subr.mxu0 0.0
    %917 = vmatpush1.msra.mxu0 0.0
    %918 = vmatprep.subr.mxu0 0.0
    %919 = vmatpush1.msra.mxu0 0.0
    %920 = vmatprep.subr.mxu0 0.0
    %921 = vmatpush1.msra.mxu0 0.0
    %922 = vmatprep.subr.mxu0 0.0
    %923 = vmatpush1.msra.mxu0 0.0
    %924 = vmatprep.subr.mxu0 0.0
    %925 = vmatpush1.msra.mxu0 0.0
    %926 = vmatprep.subr.mxu0 0.0
    %927 = vmatpush1.msra.mxu0 0.0
    %928 = vmatprep.subr.mxu0 %v420
    %929 = vmatpush1.msra.mxu0 %v419
    %930 = vmatprep.subr.mxu0 %v418
    %931 = vmatpush1.msra.mxu0 %v417
    %932 = vmatprep.subr.mxu0 %v416
    %933 = vmatpush1.msra.mxu0 %v415
    %934 = vmatprep.subr.mxu0 %v414
    %935 = vmatpush1.msra.mxu0 %v413
    %936 = vmatprep.subr.mxu0 %v412
    %937 = vmatpush1.msra.mxu0 %v411
    %938 = vmatprep.subr.mxu0 %v410
    %939 = vmatpush1.msra.mxu0 %v409
    %940 = vmatprep.subr.mxu0 %v408
    %941 = vmatpush1.msra.mxu0 %v407
    %942 = vmatprep.subr.mxu0 %v406
    %943 = vmatpush1.msra.mxu0 %v405
    %944 = vmatprep.subr.mxu0 0.0
    %945 = vmatpush2.msra.mxu0 0.0
    %946 = vmatprep.subr.mxu0 0.0
    %947 = vmatpush2.msra.mxu0 0.0
    %948 = vmatprep.subr.mxu0 0.0
    %949 = vmatpush2.msra.mxu0 0.0
    %950 = vmatprep.subr.mxu0 0.0
    %951 = vmatpush2.msra.mxu0 0.0
    %952 = vmatprep.subr.mxu0 0.0
    %953 = vmatpush2.msra.mxu0 0.0
    %954 = vmatprep.subr.mxu0 0.0
    %955 = vmatpush2.msra.mxu0 0.0
    %956 = vmatprep.subr.mxu0 0.0
    %957 = vmatpush2.msra.mxu0 0.0
    %958 = vmatprep.subr.mxu0 0.0
    %959 = vmatpush2.msra.mxu0 0.0
    %960 = vmatprep.subr.mxu0 0.0
    %961 = vmatpush2.msra.mxu0 0.0
    %962 = vmatprep.subr.mxu0 0.0
    %963 = vmatpush2.msra.mxu0 0.0
    %964 = vmatprep.subr.mxu0 0.0
    %965 = vmatpush2.msra.mxu0 0.0
    %966 = vmatprep.subr.mxu0 0.0
    %967 = vmatpush2.msra.mxu0 0.0
    %968 = vmatprep.subr.mxu0 0.0
    %969 = vmatpush2.msra.mxu0 0.0
    %970 = vmatprep.subr.mxu0 0.0
    %971 = vmatpush2.msra.mxu0 0.0
    %972 = vmatprep.subr.mxu0 0.0
    %973 = vmatpush2.msra.mxu0 0.0
    %974 = vmatprep.subr.mxu0 0.0
    %975 = vmatpush2.msra.mxu0 0.0
    %976 = vmatprep.mubr.f32.mxu0 0.0
    %977 = vmatmul.mubr.f32.gmra.mxu0 %v910
    %v978 = vpop.f32.mrf.mxu0
    %v979 = vadd.f32 %v430, %v978
    %v980 = vpop.f32.mrf.mxu0
    %v981 = vadd.f32 %v434, %v980
    %982 = vdwg.mxu0
    %984 = vrot.lane.b32.xlu0 %v979, 32
    %v985 = vpop.permute.xlu0 %984
    %v987 = vadd.f32 %v905, %v985
    %v988 = vxor.u32 %v987, 2147483648
    %v989 = vmul.f32 %v988, 1.442695
    %v990 = vpow.pop %v989
    %v991 = vadd.f32 %v990, 1.0
    %v992 = vrcp.pop %v991
    %v993 = vmul.f32 1.0, %v992
    %994 = vrot.lane.b32.xlu0 %v979, 96
    %v995 = vpop.permute.xlu0 %994
    %v997 = vmul.f32 %v993, %v995
    %999 = vrot.lane.b32.xlu0 %v997, 64
    %v1000 = vpop.permute.xlu0 %999
    %v1002 = vadd.f32 %v905, %v1000
    %v1003 = vtanh.pop %v1002
    %v1004 = vsub.f32 1.0, %v993
    %1006 = vrot.lane.b32.xlu0 %v1003, 96
    %v1007 = vpop.permute.xlu0 %1006
    %v1009 = vmul.f32 %v1004, %v1007
    %v1010 = vmul.f32 %v993, %v783
    %v1011 = vadd.f32 %v1009, %v1010
    %1013 = vrot.lane.b32.xlu0 %v905, 64
    %v1014 = vpop.permute.xlu0 %1013
    %v1016 = vadd.f32 %v1011, %v1014
    %1018 = vrot.lane.b32.xlu0 %v1011, 64
    %v1019 = vpop.permute.xlu0 %1018
    %v1020 = vsel %vm382, %v1019, 0
    %1022 = vmatprep.subr.mxu0 0.0
    %1023 = vmatpush1.msra.mxu0 0.0
    %1024 = vmatprep.subr.mxu0 0.0
    %1025 = vmatpush1.msra.mxu0 0.0
    %1026 = vmatprep.subr.mxu0 0.0
    %1027 = vmatpush1.msra.mxu0 0.0
    %1028 = vmatprep.subr.mxu0 0.0
    %1029 = vmatpush1.msra.mxu0 0.0
    %1030 = vmatprep.subr.mxu0 0.0
    %1031 = vmatpush1.msra.mxu0 0.0
    %1032 = vmatprep.subr.mxu0 0.0
    %1033 = vmatpush1.msra.mxu0 0.0
    %1034 = vmatprep.subr.mxu0 0.0
    %1035 = vmatpush1.msra.mxu0 0.0
    %1036 = vmatprep.subr.mxu0 0.0
    %1037 = vmatpush1.msra.mxu0 0.0
    %1038 = vmatprep.subr.mxu0 0.0
    %1039 = vmatpush1.msra.mxu0 0.0
    %1040 = vmatprep.subr.mxu0 0.0
    %1041 = vmatpush1.msra.mxu0 0.0
    %1042 = vmatprep.subr.mxu0 0.0
    %1043 = vmatpush1.msra.mxu0 0.0
    %1044 = vmatprep.subr.mxu0 0.0
    %1045 = vmatpush1.msra.mxu0 0.0
    %1046 = vmatprep.subr.mxu0 0.0
    %1047 = vmatpush1.msra.mxu0 %v424
    %1048 = vmatprep.subr.mxu0 0.0
    %1049 = vmatpush1.msra.mxu0 %v423
    %1050 = vmatprep.subr.mxu0 0.0
    %1051 = vmatpush1.msra.mxu0 %v422
    %1052 = vmatprep.subr.mxu0 0.0
    %1053 = vmatpush1.msra.mxu0 %v421
    %1054 = vmatprep.subr.mxu0 0.0
    %1055 = vmatpush2.msra.mxu0 0.0
    %1056 = vmatprep.subr.mxu0 0.0
    %1057 = vmatpush2.msra.mxu0 0.0
    %1058 = vmatprep.subr.mxu0 0.0
    %1059 = vmatpush2.msra.mxu0 0.0
    %1060 = vmatprep.subr.mxu0 0.0
    %1061 = vmatpush2.msra.mxu0 0.0
    %1062 = vmatprep.subr.mxu0 0.0
    %1063 = vmatpush2.msra.mxu0 0.0
    %1064 = vmatprep.subr.mxu0 0.0
    %1065 = vmatpush2.msra.mxu0 0.0
    %1066 = vmatprep.subr.mxu0 0.0
    %1067 = vmatpush2.msra.mxu0 0.0
    %1068 = vmatprep.subr.mxu0 0.0
    %1069 = vmatpush2.msra.mxu0 0.0
    %1070 = vmatprep.subr.mxu0 0.0
    %1071 = vmatpush2.msra.mxu0 0.0
    %1072 = vmatprep.subr.mxu0 0.0
    %1073 = vmatpush2.msra.mxu0 0.0
    %1074 = vmatprep.subr.mxu0 0.0
    %1075 = vmatpush2.msra.mxu0 0.0
    %1076 = vmatprep.subr.mxu0 0.0
    %1077 = vmatpush2.msra.mxu0 0.0
    %1078 = vmatprep.subr.mxu0 0.0
    %1079 = vmatpush2.msra.mxu0 0.0
    %1080 = vmatprep.subr.mxu0 0.0
    %1081 = vmatpush2.msra.mxu0 0.0
    %1082 = vmatprep.subr.mxu0 0.0
    %1083 = vmatpush2.msra.mxu0 0.0
    %1084 = vmatprep.subr.mxu0 0.0
    %1085 = vmatpush2.msra.mxu0 0.0
    %1086 = vmatprep.mubr.f32.mxu0 0.0
    %1087 = vmatmul.mubr.f32.gmra.mxu0 %v1020
    %v1088 = vpop.f32.mrf.mxu0
    %v1089 = vadd.f32 0.0, %v1088
    %v1090 = vpop.f32.mrf.mxu0
    %1091 = vdwg.mxu0
    %v1092 = vadd.f32 %v906, %v1089
    %v1093 = vadd.f32 %v1092, %v981
    %v1094 = vxor.u32 %v1093, 2147483648
    %v1095 = vmul.f32 %v1094, 1.442695
    %v1096 = vpow.pop %v1095
    %v1097 = vadd.f32 %v1096, 1.0
    %v1098 = vrcp.pop %v1097
    %v1099 = vmul.f32 1.0, %v1098
    %1101 = vrot.lane.b32.xlu0 %v981, 64
    %v1102 = vpop.permute.xlu0 %1101
    %v1104 = vmul.f32 %v1099, %v1102
    %1106 = vrot.lane.b32.xlu0 %v1104, 64
    %v1107 = vpop.permute.xlu0 %1106
    %v1109 = vadd.f32 %v1092, %v1107
    %v1110 = vtanh.pop %v1109
    %v1111 = vsub.f32 1.0, %v1099
    %1113 = vrot.lane.b32.xlu0 %v1110, 96
    %v1114 = vpop.permute.xlu0 %1113
    %v1116 = vmul.f32 %v1111, %v1114
    %v1117 = vmul.f32 %v1099, %v890
    %v1118 = vadd.f32 %v1116, %v1117
    %1120 = vrot.lane.b32.xlu0 %v1016, 96
    %v1121 = vpop.permute.xlu0 %1120
    %v1123 = vadd.f32 %v1118, %v1121
    %1125 = vrot.lane.b32.xlu0 %v1123, 96
    %v1126 = vpop.permute.xlu0 %1125
    %s1128 = scalar_lea.vmem [#allocation3], 16
    %1129 = vst.msk [vmem:[%s1128] sm:$0xff] %vm382, %v1126
    %s1130 = smul.u32 3, 3
    %s1131 = smul.addr %s1130, 8
    %s1132 = scalar_lea.vmem [#allocation2], %s1131
    %v1133 = vld [vmem:[%s1132] sm:$0xff]
    %v1134 = vld [vmem:[%s1132 + $0x8] sm:$0xff]
    %v1136 = vsel %vm382, %v1019, %v1118
    %v1138 = vsel %vm449, %v1136, 0
    %1140 = vmatprep.subr.mxu0 0.0
    %1141 = vmatpush1.msra.mxu0 0.0
    %1142 = vmatprep.subr.mxu0 0.0
    %1143 = vmatpush1.msra.mxu0 0.0
    %1144 = vmatprep.subr.mxu0 0.0
    %1145 = vmatpush1.msra.mxu0 0.0
    %1146 = vmatprep.subr.mxu0 0.0
    %1147 = vmatpush1.msra.mxu0 0.0
    %1148 = vmatprep.subr.mxu0 0.0
    %1149 = vmatpush1.msra.mxu0 0.0
    %1150 = vmatprep.subr.mxu0 0.0
    %1151 = vmatpush1.msra.mxu0 0.0
    %1152 = vmatprep.subr.mxu0 0.0
    %1153 = vmatpush1.msra.mxu0 0.0
    %1154 = vmatprep.subr.mxu0 0.0
    %1155 = vmatpush1.msra.mxu0 0.0
    %1156 = vmatprep.subr.mxu0 %v420
    %1157 = vmatpush1.msra.mxu0 %v419
    %1158 = vmatprep.subr.mxu0 %v418
    %1159 = vmatpush1.msra.mxu0 %v417
    %1160 = vmatprep.subr.mxu0 %v416
    %1161 = vmatpush1.msra.mxu0 %v415
    %1162 = vmatprep.subr.mxu0 %v414
    %1163 = vmatpush1.msra.mxu0 %v413
    %1164 = vmatprep.subr.mxu0 %v412
    %1165 = vmatpush1.msra.mxu0 %v411
    %1166 = vmatprep.subr.mxu0 %v410
    %1167 = vmatpush1.msra.mxu0 %v409
    %1168 = vmatprep.subr.mxu0 %v408
    %1169 = vmatpush1.msra.mxu0 %v407
    %1170 = vmatprep.subr.mxu0 %v406
    %1171 = vmatpush1.msra.mxu0 %v405
    %1172 = vmatprep.subr.mxu0 0.0
    %1173 = vmatpush2.msra.mxu0 0.0
    %1174 = vmatprep.subr.mxu0 0.0
    %1175 = vmatpush2.msra.mxu0 0.0
    %1176 = vmatprep.subr.mxu0 0.0
    %1177 = vmatpush2.msra.mxu0 0.0
    %1178 = vmatprep.subr.mxu0 0.0
    %1179 = vmatpush2.msra.mxu0 0.0
    %1180 = vmatprep.subr.mxu0 0.0
    %1181 = vmatpush2.msra.mxu0 0.0
    %1182 = vmatprep.subr.mxu0 0.0
    %1183 = vmatpush2.msra.mxu0 0.0
    %1184 = vmatprep.subr.mxu0 0.0
    %1185 = vmatpush2.msra.mxu0 0.0
    %1186 = vmatprep.subr.mxu0 0.0
    %1187 = vmatpush2.msra.mxu0 0.0
    %1188 = vmatprep.subr.mxu0 0.0
    %1189 = vmatpush2.msra.mxu0 0.0
    %1190 = vmatprep.subr.mxu0 0.0
    %1191 = vmatpush2.msra.mxu0 0.0
    %1192 = vmatprep.subr.mxu0 0.0
    %1193 = vmatpush2.msra.mxu0 0.0
    %1194 = vmatprep.subr.mxu0 0.0
    %1195 = vmatpush2.msra.mxu0 0.0
    %1196 = vmatprep.subr.mxu0 0.0
    %1197 = vmatpush2.msra.mxu0 0.0
    %1198 = vmatprep.subr.mxu0 0.0
    %1199 = vmatpush2.msra.mxu0 0.0
    %1200 = vmatprep.subr.mxu0 0.0
    %1201 = vmatpush2.msra.mxu0 0.0
    %1202 = vmatprep.subr.mxu0 0.0
    %1203 = vmatpush2.msra.mxu0 0.0
    %1204 = vmatprep.mubr.f32.mxu0 0.0
    %1205 = vmatmul.mubr.f32.gmra.mxu0 %v1138
    %v1206 = vpop.f32.mrf.mxu0
    %v1207 = vadd.f32 %v430, %v1206
    %v1208 = vpop.f32.mrf.mxu0
    %v1209 = vadd.f32 %v434, %v1208
    %1210 = vdwg.mxu0
    %1212 = vrot.lane.b32.xlu0 %v1207, 32
    %v1213 = vpop.permute.xlu0 %1212
    %v1215 = vadd.f32 %v1133, %v1213
    %v1216 = vxor.u32 %v1215, 2147483648
    %v1217 = vmul.f32 %v1216, 1.442695
    %v1218 = vpow.pop %v1217
    %v1219 = vadd.f32 %v1218, 1.0
    %v1220 = vrcp.pop %v1219
    %v1221 = vmul.f32 1.0, %v1220
    %1222 = vrot.lane.b32.xlu0 %v1207, 96
    %v1223 = vpop.permute.xlu0 %1222
    %v1225 = vmul.f32 %v1221, %v1223
    %1227 = vrot.lane.b32.xlu0 %v1225, 64
    %v1228 = vpop.permute.xlu0 %1227
    %v1230 = vadd.f32 %v1133, %v1228
    %v1231 = vtanh.pop %v1230
    %v1232 = vsub.f32 1.0, %v1221
    %1234 = vrot.lane.b32.xlu0 %v1231, 96
    %v1235 = vpop.permute.xlu0 %1234
    %v1237 = vmul.f32 %v1232, %v1235
    %v1238 = vmul.f32 %v1221, %v1011
    %v1239 = vadd.f32 %v1237, %v1238
    %1241 = vrot.lane.b32.xlu0 %v1133, 64
    %v1242 = vpop.permute.xlu0 %1241
    %v1244 = vadd.f32 %v1239, %v1242
    %1246 = vrot.lane.b32.xlu0 %v1239, 64
    %v1247 = vpop.permute.xlu0 %1246
    %v1248 = vsel %vm382, %v1247, 0
    %1250 = vmatprep.subr.mxu0 0.0
    %1251 = vmatpush1.msra.mxu0 0.0
    %1252 = vmatprep.subr.mxu0 0.0
    %1253 = vmatpush1.msra.mxu0 0.0
    %1254 = vmatprep.subr.mxu0 0.0
    %1255 = vmatpush1.msra.mxu0 0.0
    %1256 = vmatprep.subr.mxu0 0.0
    %1257 = vmatpush1.msra.mxu0 0.0
    %1258 = vmatprep.subr.mxu0 0.0
    %1259 = vmatpush1.msra.mxu0 0.0
    %1260 = vmatprep.subr.mxu0 0.0
    %1261 = vmatpush1.msra.mxu0 0.0
    %1262 = vmatprep.subr.mxu0 0.0
    %1263 = vmatpush1.msra.mxu0 0.0
    %1264 = vmatprep.subr.mxu0 0.0
    %1265 = vmatpush1.msra.mxu0 0.0
    %1266 = vmatprep.subr.mxu0 0.0
    %1267 = vmatpush1.msra.mxu0 0.0
    %1268 = vmatprep.subr.mxu0 0.0
    %1269 = vmatpush1.msra.mxu0 0.0
    %1270 = vmatprep.subr.mxu0 0.0
    %1271 = vmatpush1.msra.mxu0 0.0
    %1272 = vmatprep.subr.mxu0 0.0
    %1273 = vmatpush1.msra.mxu0 0.0
    %1274 = vmatprep.subr.mxu0 0.0
    %1275 = vmatpush1.msra.mxu0 %v424
    %1276 = vmatprep.subr.mxu0 0.0
    %1277 = vmatpush1.msra.mxu0 %v423
    %1278 = vmatprep.subr.mxu0 0.0
    %1279 = vmatpush1.msra.mxu0 %v422
    %1280 = vmatprep.subr.mxu0 0.0
    %1281 = vmatpush1.msra.mxu0 %v421
    %1282 = vmatprep.subr.mxu0 0.0
    %1283 = vmatpush2.msra.mxu0 0.0
    %1284 = vmatprep.subr.mxu0 0.0
    %1285 = vmatpush2.msra.mxu0 0.0
    %1286 = vmatprep.subr.mxu0 0.0
    %1287 = vmatpush2.msra.mxu0 0.0
    %1288 = vmatprep.subr.mxu0 0.0
    %1289 = vmatpush2.msra.mxu0 0.0
    %1290 = vmatprep.subr.mxu0 0.0
    %1291 = vmatpush2.msra.mxu0 0.0
    %1292 = vmatprep.subr.mxu0 0.0
    %1293 = vmatpush2.msra.mxu0 0.0
    %1294 = vmatprep.subr.mxu0 0.0
    %1295 = vmatpush2.msra.mxu0 0.0
    %1296 = vmatprep.subr.mxu0 0.0
    %1297 = vmatpush2.msra.mxu0 0.0
    %1298 = vmatprep.subr.mxu0 0.0
    %1299 = vmatpush2.msra.mxu0 0.0
    %1300 = vmatprep.subr.mxu0 0.0
    %1301 = vmatpush2.msra.mxu0 0.0
    %1302 = vmatprep.subr.mxu0 0.0
    %1303 = vmatpush2.msra.mxu0 0.0
    %1304 = vmatprep.subr.mxu0 0.0
    %1305 = vmatpush2.msra.mxu0 0.0
    %1306 = vmatprep.subr.mxu0 0.0
    %1307 = vmatpush2.msra.mxu0 0.0
    %1308 = vmatprep.subr.mxu0 0.0
    %1309 = vmatpush2.msra.mxu0 0.0
    %1310 = vmatprep.subr.mxu0 0.0
    %1311 = vmatpush2.msra.mxu0 0.0
    %1312 = vmatprep.subr.mxu0 0.0
    %1313 = vmatpush2.msra.mxu0 0.0
    %1314 = vmatprep.mubr.f32.mxu0 0.0
    %1315 = vmatmul.mubr.f32.gmra.mxu0 %v1248
    %v1316 = vpop.f32.mrf.mxu0
    %v1317 = vadd.f32 0.0, %v1316
    %v1318 = vpop.f32.mrf.mxu0
    %1319 = vdwg.mxu0
    %v1320 = vadd.f32 %v1134, %v1317
    %v1321 = vadd.f32 %v1320, %v1209
    %v1322 = vxor.u32 %v1321, 2147483648
    %v1323 = vmul.f32 %v1322, 1.442695
    %v1324 = vpow.pop %v1323
    %v1325 = vadd.f32 %v1324, 1.0
    %v1326 = vrcp.pop %v1325
    %v1327 = vmul.f32 1.0, %v1326
    %1329 = vrot.lane.b32.xlu0 %v1209, 64
    %v1330 = vpop.permute.xlu0 %1329
    %v1332 = vmul.f32 %v1327, %v1330
    %1334 = vrot.lane.b32.xlu0 %v1332, 64
    %v1335 = vpop.permute.xlu0 %1334
    %v1337 = vadd.f32 %v1320, %v1335
    %v1338 = vtanh.pop %v1337
    %v1339 = vsub.f32 1.0, %v1327
    %1341 = vrot.lane.b32.xlu0 %v1338, 96
    %v1342 = vpop.permute.xlu0 %1341
    %v1344 = vmul.f32 %v1339, %v1342
    %v1345 = vmul.f32 %v1327, %v1118
    %v1346 = vadd.f32 %v1344, %v1345
    %1348 = vrot.lane.b32.xlu0 %v1244, 96
    %v1349 = vpop.permute.xlu0 %1348
    %v1351 = vadd.f32 %v1346, %v1349
    %1353 = vrot.lane.b32.xlu0 %v1351, 96
    %v1354 = vpop.permute.xlu0 %1353
    %s1356 = scalar_lea.vmem [#allocation3], 24
    %1357 = vst.msk [vmem:[%s1356] sm:$0xff] %vm382, %v1354
    %s1358 = smul.u32 4, 3
    %s1359 = smul.addr %s1358, 8
    %s1360 = scalar_lea.vmem [#allocation2], %s1359
    %v1361 = vld [vmem:[%s1360] sm:$0xff]
    %v1362 = vld [vmem:[%s1360 + $0x8] sm:$0xff]
    %v1364 = vsel %vm382, %v1247, %v1346
    %v1366 = vsel %vm449, %v1364, 0
    %1368 = vmatprep.subr.mxu0 0.0
    %1369 = vmatpush1.msra.mxu0 0.0
    %1370 = vmatprep.subr.mxu0 0.0
    %1371 = vmatpush1.msra.mxu0 0.0
    %1372 = vmatprep.subr.mxu0 0.0
    %1373 = vmatpush1.msra.mxu0 0.0
    %1374 = vmatprep.subr.mxu0 0.0
    %1375 = vmatpush1.msra.mxu0 0.0
    %1376 = vmatprep.subr.mxu0 0.0
    %1377 = vmatpush1.msra.mxu0 0.0
    %1378 = vmatprep.subr.mxu0 0.0
    %1379 = vmatpush1.msra.mxu0 0.0
    %1380 = vmatprep.subr.mxu0 0.0
    %1381 = vmatpush1.msra.mxu0 0.0
    %1382 = vmatprep.subr.mxu0 0.0
    %1383 = vmatpush1.msra.mxu0 0.0
    %1384 = vmatprep.subr.mxu0 %v420
    %1385 = vmatpush1.msra.mxu0 %v419
    %1386 = vmatprep.subr.mxu0 %v418
    %1387 = vmatpush1.msra.mxu0 %v417
    %1388 = vmatprep.subr.mxu0 %v416
    %1389 = vmatpush1.msra.mxu0 %v415
    %1390 = vmatprep.subr.mxu0 %v414
    %1391 = vmatpush1.msra.mxu0 %v413
    %1392 = vmatprep.subr.mxu0 %v412
    %1393 = vmatpush1.msra.mxu0 %v411
    %1394 = vmatprep.subr.mxu0 %v410
    %1395 = vmatpush1.msra.mxu0 %v409
    %1396 = vmatprep.subr.mxu0 %v408
    %1397 = vmatpush1.msra.mxu0 %v407
    %1398 = vmatprep.subr.mxu0 %v406
    %1399 = vmatpush1.msra.mxu0 %v405
    %1400 = vmatprep.subr.mxu0 0.0
    %1401 = vmatpush2.msra.mxu0 0.0
    %1402 = vmatprep.subr.mxu0 0.0
    %1403 = vmatpush2.msra.mxu0 0.0
    %1404 = vmatprep.subr.mxu0 0.0
    %1405 = vmatpush2.msra.mxu0 0.0
    %1406 = vmatprep.subr.mxu0 0.0
    %1407 = vmatpush2.msra.mxu0 0.0
    %1408 = vmatprep.subr.mxu0 0.0
    %1409 = vmatpush2.msra.mxu0 0.0
    %1410 = vmatprep.subr.mxu0 0.0
    %1411 = vmatpush2.msra.mxu0 0.0
    %1412 = vmatprep.subr.mxu0 0.0
    %1413 = vmatpush2.msra.mxu0 0.0
    %1414 = vmatprep.subr.mxu0 0.0
    %1415 = vmatpush2.msra.mxu0 0.0
    %1416 = vmatprep.subr.mxu0 0.0
    %1417 = vmatpush2.msra.mxu0 0.0
    %1418 = vmatprep.subr.mxu0 0.0
    %1419 = vmatpush2.msra.mxu0 0.0
    %1420 = vmatprep.subr.mxu0 0.0
    %1421 = vmatpush2.msra.mxu0 0.0
    %1422 = vmatprep.subr.mxu0 0.0
    %1423 = vmatpush2.msra.mxu0 0.0
    %1424 = vmatprep.subr.mxu0 0.0
    %1425 = vmatpush2.msra.mxu0 0.0
    %1426 = vmatprep.subr.mxu0 0.0
    %1427 = vmatpush2.msra.mxu0 0.0
    %1428 = vmatprep.subr.mxu0 0.0
    %1429 = vmatpush2.msra.mxu0 0.0
    %1430 = vmatprep.subr.mxu0 0.0
    %1431 = vmatpush2.msra.mxu0 0.0
    %1432 = vmatprep.mubr.f32.mxu0 0.0
    %1433 = vmatmul.mubr.f32.gmra.mxu0 %v1366
    %v1434 = vpop.f32.mrf.mxu0
    %v1435 = vadd.f32 %v430, %v1434
    %v1436 = vpop.f32.mrf.mxu0
    %v1437 = vadd.f32 %v434, %v1436
    %1438 = vdwg.mxu0
    %1440 = vrot.lane.b32.xlu0 %v1435, 32
    %v1441 = vpop.permute.xlu0 %1440
    %v1443 = vadd.f32 %v1361, %v1441
    %v1444 = vxor.u32 %v1443, 2147483648
    %v1445 = vmul.f32 %v1444, 1.442695
    %v1446 = vpow.pop %v1445
    %v1447 = vadd.f32 %v1446, 1.0
    %v1448 = vrcp.pop %v1447
    %v1449 = vmul.f32 1.0, %v1448
    %1450 = vrot.lane.b32.xlu0 %v1435, 96
    %v1451 = vpop.permute.xlu0 %1450
    %v1453 = vmul.f32 %v1449, %v1451
    %1455 = vrot.lane.b32.xlu0 %v1453, 64
    %v1456 = vpop.permute.xlu0 %1455
    %v1458 = vadd.f32 %v1361, %v1456
    %v1459 = vtanh.pop %v1458
    %v1460 = vsub.f32 1.0, %v1449
    %1462 = vrot.lane.b32.xlu0 %v1459, 96
    %v1463 = vpop.permute.xlu0 %1462
    %v1465 = vmul.f32 %v1460, %v1463
    %v1466 = vmul.f32 %v1449, %v1239
    %v1467 = vadd.f32 %v1465, %v1466
    %1469 = vrot.lane.b32.xlu0 %v1361, 64
    %v1470 = vpop.permute.xlu0 %1469
    %v1472 = vadd.f32 %v1467, %v1470
    %1474 = vrot.lane.b32.xlu0 %v1467, 64
    %v1475 = vpop.permute.xlu0 %1474
    %v1476 = vsel %vm382, %v1475, 0
    %1478 = vmatprep.subr.mxu0 0.0
    %1479 = vmatpush1.msra.mxu0 0.0
    %1480 = vmatprep.subr.mxu0 0.0
    %1481 = vmatpush1.msra.mxu0 0.0
    %1482 = vmatprep.subr.mxu0 0.0
    %1483 = vmatpush1.msra.mxu0 0.0
    %1484 = vmatprep.subr.mxu0 0.0
    %1485 = vmatpush1.msra.mxu0 0.0
    %1486 = vmatprep.subr.mxu0 0.0
    %1487 = vmatpush1.msra.mxu0 0.0
    %1488 = vmatprep.subr.mxu0 0.0
    %1489 = vmatpush1.msra.mxu0 0.0
    %1490 = vmatprep.subr.mxu0 0.0
    %1491 = vmatpush1.msra.mxu0 0.0
    %1492 = vmatprep.subr.mxu0 0.0
    %1493 = vmatpush1.msra.mxu0 0.0
    %1494 = vmatprep.subr.mxu0 0.0
    %1495 = vmatpush1.msra.mxu0 0.0
    %1496 = vmatprep.subr.mxu0 0.0
    %1497 = vmatpush1.msra.mxu0 0.0
    %1498 = vmatprep.subr.mxu0 0.0
    %1499 = vmatpush1.msra.mxu0 0.0
    %1500 = vmatprep.subr.mxu0 0.0
    %1501 = vmatpush1.msra.mxu0 0.0
    %1502 = vmatprep.subr.mxu0 0.0
    %1503 = vmatpush1.msra.mxu0 %v424
    %1504 = vmatprep.subr.mxu0 0.0
    %1505 = vmatpush1.msra.mxu0 %v423
    %1506 = vmatprep.subr.mxu0 0.0
    %1507 = vmatpush1.msra.mxu0 %v422
    %1508 = vmatprep.subr.mxu0 0.0
    %1509 = vmatpush1.msra.mxu0 %v421
    %1510 = vmatprep.subr.mxu0 0.0
    %1511 = vmatpush2.msra.mxu0 0.0
    %1512 = vmatprep.subr.mxu0 0.0
    %1513 = vmatpush2.msra.mxu0 0.0
    %1514 = vmatprep.subr.mxu0 0.0
    %1515 = vmatpush2.msra.mxu0 0.0
    %1516 = vmatprep.subr.mxu0 0.0
    %1517 = vmatpush2.msra.mxu0 0.0
    %1518 = vmatprep.subr.mxu0 0.0
    %1519 = vmatpush2.msra.mxu0 0.0
    %1520 = vmatprep.subr.mxu0 0.0
    %1521 = vmatpush2.msra.mxu0 0.0
    %1522 = vmatprep.subr.mxu0 0.0
    %1523 = vmatpush2.msra.mxu0 0.0
    %1524 = vmatprep.subr.mxu0 0.0
    %1525 = vmatpush2.msra.mxu0 0.0
    %1526 = vmatprep.subr.mxu0 0.0
    %1527 = vmatpush2.msra.mxu0 0.0
    %1528 = vmatprep.subr.mxu0 0.0
    %1529 = vmatpush2.msra.mxu0 0.0
    %1530 = vmatprep.subr.mxu0 0.0
    %1531 = vmatpush2.msra.mxu0 0.0
    %1532 = vmatprep.subr.mxu0 0.0
    %1533 = vmatpush2.msra.mxu0 0.0
    %1534 = vmatprep.subr.mxu0 0.0
    %1535 = vmatpush2.msra.mxu0 0.0
    %1536 = vmatprep.subr.mxu0 0.0
    %1537 = vmatpush2.msra.mxu0 0.0
    %1538 = vmatprep.subr.mxu0 0.0
    %1539 = vmatpush2.msra.mxu0 0.0
    %1540 = vmatprep.subr.mxu0 0.0
    %1541 = vmatpush2.msra.mxu0 0.0
    %1542 = vmatprep.mubr.f32.mxu0 0.0
    %1543 = vmatmul.mubr.f32.gmra.mxu0 %v1476
    %v1544 = vpop.f32.mrf.mxu0
    %v1545 = vadd.f32 0.0, %v1544
    %v1546 = vpop.f32.mrf.mxu0
    %1547 = vdwg.mxu0
    %v1548 = vadd.f32 %v1362, %v1545
    %v1549 = vadd.f32 %v1548, %v1437
    %v1550 = vxor.u32 %v1549, 2147483648
    %v1551 = vmul.f32 %v1550, 1.442695
    %v1552 = vpow.pop %v1551
    %v1553 = vadd.f32 %v1552, 1.0
    %v1554 = vrcp.pop %v1553
    %v1555 = vmul.f32 1.0, %v1554
    %1557 = vrot.lane.b32.xlu0 %v1437, 64
    %v1558 = vpop.permute.xlu0 %1557
    %v1560 = vmul.f32 %v1555, %v1558
    %1562 = vrot.lane.b32.xlu0 %v1560, 64
    %v1563 = vpop.permute.xlu0 %1562
    %v1565 = vadd.f32 %v1548, %v1563
    %v1566 = vtanh.pop %v1565
    %v1567 = vsub.f32 1.0, %v1555
    %1569 = vrot.lane.b32.xlu0 %v1566, 96
    %v1570 = vpop.permute.xlu0 %1569
    %v1572 = vmul.f32 %v1567, %v1570
    %v1573 = vmul.f32 %v1555, %v1346
    %v1574 = vadd.f32 %v1572, %v1573
    %1576 = vrot.lane.b32.xlu0 %v1472, 96
    %v1577 = vpop.permute.xlu0 %1576
    %v1579 = vadd.f32 %v1574, %v1577
    %1581 = vrot.lane.b32.xlu0 %v1579, 96
    %v1582 = vpop.permute.xlu0 %1581
    %s1584 = scalar_lea.vmem [#allocation3], 32
    %1585 = vst.msk [vmem:[%s1584] sm:$0xff] %vm382, %v1582
    %s1586 = smul.u32 5, 3
    %s1587 = smul.addr %s1586, 8
    %s1588 = scalar_lea.vmem [#allocation2], %s1587
    %v1589 = vld [vmem:[%s1588] sm:$0xff]
    %v1590 = vld [vmem:[%s1588 + $0x8] sm:$0xff]
    %v1592 = vsel %vm382, %v1475, %v1574
    %v1594 = vsel %vm449, %v1592, 0
    %1596 = vmatprep.subr.mxu0 0.0
    %1597 = vmatpush1.msra.mxu0 0.0
    %1598 = vmatprep.subr.mxu0 0.0
    %1599 = vmatpush1.msra.mxu0 0.0
    %1600 = vmatprep.subr.mxu0 0.0
    %1601 = vmatpush1.msra.mxu0 0.0
    %1602 = vmatprep.subr.mxu0 0.0
    %1603 = vmatpush1.msra.mxu0 0.0
    %1604 = vmatprep.subr.mxu0 0.0
    %1605 = vmatpush1.msra.mxu0 0.0
    %1606 = vmatprep.subr.mxu0 0.0
    %1607 = vmatpush1.msra.mxu0 0.0
    %1608 = vmatprep.subr.mxu0 0.0
    %1609 = vmatpush1.msra.mxu0 0.0
    %1610 = vmatprep.subr.mxu0 0.0
    %1611 = vmatpush1.msra.mxu0 0.0
    %1612 = vmatprep.subr.mxu0 %v420
    %1613 = vmatpush1.msra.mxu0 %v419
    %1614 = vmatprep.subr.mxu0 %v418
    %1615 = vmatpush1.msra.mxu0 %v417
    %1616 = vmatprep.subr.mxu0 %v416
    %1617 = vmatpush1.msra.mxu0 %v415
    %1618 = vmatprep.subr.mxu0 %v414
    %1619 = vmatpush1.msra.mxu0 %v413
    %1620 = vmatprep.subr.mxu0 %v412
    %1621 = vmatpush1.msra.mxu0 %v411
    %1622 = vmatprep.subr.mxu0 %v410
    %1623 = vmatpush1.msra.mxu0 %v409
    %1624 = vmatprep.subr.mxu0 %v408
    %1625 = vmatpush1.msra.mxu0 %v407
    %1626 = vmatprep.subr.mxu0 %v406
    %1627 = vmatpush1.msra.mxu0 %v405
    %1628 = vmatprep.subr.mxu0 0.0
    %1629 = vmatpush2.msra.mxu0 0.0
    %1630 = vmatprep.subr.mxu0 0.0
    %1631 = vmatpush2.msra.mxu0 0.0
    %1632 = vmatprep.subr.mxu0 0.0
    %1633 = vmatpush2.msra.mxu0 0.0
    %1634 = vmatprep.subr.mxu0 0.0
    %1635 = vmatpush2.msra.mxu0 0.0
    %1636 = vmatprep.subr.mxu0 0.0
    %1637 = vmatpush2.msra.mxu0 0.0
    %1638 = vmatprep.subr.mxu0 0.0
    %1639 = vmatpush2.msra.mxu0 0.0
    %1640 = vmatprep.subr.mxu0 0.0
    %1641 = vmatpush2.msra.mxu0 0.0
    %1642 = vmatprep.subr.mxu0 0.0
    %1643 = vmatpush2.msra.mxu0 0.0
    %1644 = vmatprep.subr.mxu0 0.0
    %1645 = vmatpush2.msra.mxu0 0.0
    %1646 = vmatprep.subr.mxu0 0.0
    %1647 = vmatpush2.msra.mxu0 0.0
    %1648 = vmatprep.subr.mxu0 0.0
    %1649 = vmatpush2.msra.mxu0 0.0
    %1650 = vmatprep.subr.mxu0 0.0
    %1651 = vmatpush2.msra.mxu0 0.0
    %1652 = vmatprep.subr.mxu0 0.0
    %1653 = vmatpush2.msra.mxu0 0.0
    %1654 = vmatprep.subr.mxu0 0.0
    %1655 = vmatpush2.msra.mxu0 0.0
    %1656 = vmatprep.subr.mxu0 0.0
    %1657 = vmatpush2.msra.mxu0 0.0
    %1658 = vmatprep.subr.mxu0 0.0
    %1659 = vmatpush2.msra.mxu0 0.0
    %1660 = vmatprep.mubr.f32.mxu0 0.0
    %1661 = vmatmul.mubr.f32.gmra.mxu0 %v1594
    %v1662 = vpop.f32.mrf.mxu0
    %v1663 = vadd.f32 %v430, %v1662
    %v1664 = vpop.f32.mrf.mxu0
    %v1665 = vadd.f32 %v434, %v1664
    %1666 = vdwg.mxu0
    %1668 = vrot.lane.b32.xlu0 %v1663, 32
    %v1669 = vpop.permute.xlu0 %1668
    %v1671 = vadd.f32 %v1589, %v1669
    %v1672 = vxor.u32 %v1671, 2147483648
    %v1673 = vmul.f32 %v1672, 1.442695
    %v1674 = vpow.pop %v1673
    %v1675 = vadd.f32 %v1674, 1.0
    %v1676 = vrcp.pop %v1675
    %v1677 = vmul.f32 1.0, %v1676
    %1678 = vrot.lane.b32.xlu0 %v1663, 96
    %v1679 = vpop.permute.xlu0 %1678
    %v1681 = vmul.f32 %v1677, %v1679
    %1683 = vrot.lane.b32.xlu0 %v1681, 64
    %v1684 = vpop.permute.xlu0 %1683
    %v1686 = vadd.f32 %v1589, %v1684
    %v1687 = vtanh.pop %v1686
    %v1688 = vsub.f32 1.0, %v1677
    %1690 = vrot.lane.b32.xlu0 %v1687, 96
    %v1691 = vpop.permute.xlu0 %1690
    %v1693 = vmul.f32 %v1688, %v1691
    %v1694 = vmul.f32 %v1677, %v1467
    %v1695 = vadd.f32 %v1693, %v1694
    %1697 = vrot.lane.b32.xlu0 %v1589, 64
    %v1698 = vpop.permute.xlu0 %1697
    %v1700 = vadd.f32 %v1695, %v1698
    %1702 = vrot.lane.b32.xlu0 %v1695, 64
    %v1703 = vpop.permute.xlu0 %1702
    %v1704 = vsel %vm382, %v1703, 0
    %1706 = vmatprep.subr.mxu0 0.0
    %1707 = vmatpush1.msra.mxu0 0.0
    %1708 = vmatprep.subr.mxu0 0.0
    %1709 = vmatpush1.msra.mxu0 0.0
    %1710 = vmatprep.subr.mxu0 0.0
    %1711 = vmatpush1.msra.mxu0 0.0
    %1712 = vmatprep.subr.mxu0 0.0
    %1713 = vmatpush1.msra.mxu0 0.0
    %1714 = vmatprep.subr.mxu0 0.0
    %1715 = vmatpush1.msra.mxu0 0.0
    %1716 = vmatprep.subr.mxu0 0.0
    %1717 = vmatpush1.msra.mxu0 0.0
    %1718 = vmatprep.subr.mxu0 0.0
    %1719 = vmatpush1.msra.mxu0 0.0
    %1720 = vmatprep.subr.mxu0 0.0
    %1721 = vmatpush1.msra.mxu0 0.0
    %1722 = vmatprep.subr.mxu0 0.0
    %1723 = vmatpush1.msra.mxu0 0.0
    %1724 = vmatprep.subr.mxu0 0.0
    %1725 = vmatpush1.msra.mxu0 0.0
    %1726 = vmatprep.subr.mxu0 0.0
    %1727 = vmatpush1.msra.mxu0 0.0
    %1728 = vmatprep.subr.mxu0 0.0
    %1729 = vmatpush1.msra.mxu0 0.0
    %1730 = vmatprep.subr.mxu0 0.0
    %1731 = vmatpush1.msra.mxu0 %v424
    %1732 = vmatprep.subr.mxu0 0.0
    %1733 = vmatpush1.msra.mxu0 %v423
    %1734 = vmatprep.subr.mxu0 0.0
    %1735 = vmatpush1.msra.mxu0 %v422
    %1736 = vmatprep.subr.mxu0 0.0
    %1737 = vmatpush1.msra.mxu0 %v421
    %1738 = vmatprep.subr.mxu0 0.0
    %1739 = vmatpush2.msra.mxu0 0.0
    %1740 = vmatprep.subr.mxu0 0.0
    %1741 = vmatpush2.msra.mxu0 0.0
    %1742 = vmatprep.subr.mxu0 0.0
    %1743 = vmatpush2.msra.mxu0 0.0
    %1744 = vmatprep.subr.mxu0 0.0
    %1745 = vmatpush2.msra.mxu0 0.0
    %1746 = vmatprep.subr.mxu0 0.0
    %1747 = vmatpush2.msra.mxu0 0.0
    %1748 = vmatprep.subr.mxu0 0.0
    %1749 = vmatpush2.msra.mxu0 0.0
    %1750 = vmatprep.subr.mxu0 0.0
    %1751 = vmatpush2.msra.mxu0 0.0
    %1752 = vmatprep.subr.mxu0 0.0
    %1753 = vmatpush2.msra.mxu0 0.0
    %1754 = vmatprep.subr.mxu0 0.0
    %1755 = vmatpush2.msra.mxu0 0.0
    %1756 = vmatprep.subr.mxu0 0.0
    %1757 = vmatpush2.msra.mxu0 0.0
    %1758 = vmatprep.subr.mxu0 0.0
    %1759 = vmatpush2.msra.mxu0 0.0
    %1760 = vmatprep.subr.mxu0 0.0
    %1761 = vmatpush2.msra.mxu0 0.0
    %1762 = vmatprep.subr.mxu0 0.0
    %1763 = vmatpush2.msra.mxu0 0.0
    %1764 = vmatprep.subr.mxu0 0.0
    %1765 = vmatpush2.msra.mxu0 0.0
    %1766 = vmatprep.subr.mxu0 0.0
    %1767 = vmatpush2.msra.mxu0 0.0
    %1768 = vmatprep.subr.mxu0 0.0
    %1769 = vmatpush2.msra.mxu0 0.0
    %1770 = vmatprep.mubr.f32.mxu0 0.0
    %1771 = vmatmul.mubr.f32.gmra.mxu0 %v1704
    %v1772 = vpop.f32.mrf.mxu0
    %v1773 = vadd.f32 0.0, %v1772
    %v1774 = vpop.f32.mrf.mxu0
    %1775 = vdwg.mxu0
    %v1776 = vadd.f32 %v1590, %v1773
    %v1777 = vadd.f32 %v1776, %v1665
    %v1778 = vxor.u32 %v1777, 2147483648
    %v1779 = vmul.f32 %v1778, 1.442695
    %v1780 = vpow.pop %v1779
    %v1781 = vadd.f32 %v1780, 1.0
    %v1782 = vrcp.pop %v1781
    %v1783 = vmul.f32 1.0, %v1782
    %1785 = vrot.lane.b32.xlu0 %v1665, 64
    %v1786 = vpop.permute.xlu0 %1785
    %v1788 = vmul.f32 %v1783, %v1786
    %1790 = vrot.lane.b32.xlu0 %v1788, 64
    %v1791 = vpop.permute.xlu0 %1790
    %v1793 = vadd.f32 %v1776, %v1791
    %v1794 = vtanh.pop %v1793
    %v1795 = vsub.f32 1.0, %v1783
    %1797 = vrot.lane.b32.xlu0 %v1794, 96
    %v1798 = vpop.permute.xlu0 %1797
    %v1800 = vmul.f32 %v1795, %v1798
    %v1801 = vmul.f32 %v1783, %v1574
    %v1802 = vadd.f32 %v1800, %v1801
    %1804 = vrot.lane.b32.xlu0 %v1700, 96
    %v1805 = vpop.permute.xlu0 %1804
    %v1807 = vadd.f32 %v1802, %v1805
    %1809 = vrot.lane.b32.xlu0 %v1807, 96
    %v1810 = vpop.permute.xlu0 %1809
    %s1812 = scalar_lea.vmem [#allocation3], 40
    %1813 = vst.msk [vmem:[%s1812] sm:$0xff] %vm382, %v1810
    %s1814 = smul.u32 6, 3
    %s1815 = smul.addr %s1814, 8
    %s1816 = scalar_lea.vmem [#allocation2], %s1815
    %v1817 = vld [vmem:[%s1816] sm:$0xff]
    %v1818 = vld [vmem:[%s1816 + $0x8] sm:$0xff]
    %v1820 = vsel %vm382, %v1703, %v1802
    %v1822 = vsel %vm449, %v1820, 0
    %1824 = vmatprep.subr.mxu0 0.0
    %1825 = vmatpush1.msra.mxu0 0.0
    %1826 = vmatprep.subr.mxu0 0.0
    %1827 = vmatpush1.msra.mxu0 0.0
    %1828 = vmatprep.subr.mxu0 0.0
    %1829 = vmatpush1.msra.mxu0 0.0
    %1830 = vmatprep.subr.mxu0 0.0
    %1831 = vmatpush1.msra.mxu0 0.0
    %1832 = vmatprep.subr.mxu0 0.0
    %1833 = vmatpush1.msra.mxu0 0.0
    %1834 = vmatprep.subr.mxu0 0.0
    %1835 = vmatpush1.msra.mxu0 0.0
    %1836 = vmatprep.subr.mxu0 0.0
    %1837 = vmatpush1.msra.mxu0 0.0
    %1838 = vmatprep.subr.mxu0 0.0
    %1839 = vmatpush1.msra.mxu0 0.0
    %1840 = vmatprep.subr.mxu0 %v420
    %1841 = vmatpush1.msra.mxu0 %v419
    %1842 = vmatprep.subr.mxu0 %v418
    %1843 = vmatpush1.msra.mxu0 %v417
    %1844 = vmatprep.subr.mxu0 %v416
    %1845 = vmatpush1.msra.mxu0 %v415
    %1846 = vmatprep.subr.mxu0 %v414
    %1847 = vmatpush1.msra.mxu0 %v413
    %1848 = vmatprep.subr.mxu0 %v412
    %1849 = vmatpush1.msra.mxu0 %v411
    %1850 = vmatprep.subr.mxu0 %v410
    %1851 = vmatpush1.msra.mxu0 %v409
    %1852 = vmatprep.subr.mxu0 %v408
    %1853 = vmatpush1.msra.mxu0 %v407
    %1854 = vmatprep.subr.mxu0 %v406
    %1855 = vmatpush1.msra.mxu0 %v405
    %1856 = vmatprep.subr.mxu0 0.0
    %1857 = vmatpush2.msra.mxu0 0.0
    %1858 = vmatprep.subr.mxu0 0.0
    %1859 = vmatpush2.msra.mxu0 0.0
    %1860 = vmatprep.subr.mxu0 0.0
    %1861 = vmatpush2.msra.mxu0 0.0
    %1862 = vmatprep.subr.mxu0 0.0
    %1863 = vmatpush2.msra.mxu0 0.0
    %1864 = vmatprep.subr.mxu0 0.0
    %1865 = vmatpush2.msra.mxu0 0.0
    %1866 = vmatprep.subr.mxu0 0.0
    %1867 = vmatpush2.msra.mxu0 0.0
    %1868 = vmatprep.subr.mxu0 0.0
    %1869 = vmatpush2.msra.mxu0 0.0
    %1870 = vmatprep.subr.mxu0 0.0
    %1871 = vmatpush2.msra.mxu0 0.0
    %1872 = vmatprep.subr.mxu0 0.0
    %1873 = vmatpush2.msra.mxu0 0.0
    %1874 = vmatprep.subr.mxu0 0.0
    %1875 = vmatpush2.msra.mxu0 0.0
    %1876 = vmatprep.subr.mxu0 0.0
    %1877 = vmatpush2.msra.mxu0 0.0
    %1878 = vmatprep.subr.mxu0 0.0
    %1879 = vmatpush2.msra.mxu0 0.0
    %1880 = vmatprep.subr.mxu0 0.0
    %1881 = vmatpush2.msra.mxu0 0.0
    %1882 = vmatprep.subr.mxu0 0.0
    %1883 = vmatpush2.msra.mxu0 0.0
    %1884 = vmatprep.subr.mxu0 0.0
    %1885 = vmatpush2.msra.mxu0 0.0
    %1886 = vmatprep.subr.mxu0 0.0
    %1887 = vmatpush2.msra.mxu0 0.0
    %1888 = vmatprep.mubr.f32.mxu0 0.0
    %1889 = vmatmul.mubr.f32.gmra.mxu0 %v1822
    %v1890 = vpop.f32.mrf.mxu0
    %v1891 = vadd.f32 %v430, %v1890
    %v1892 = vpop.f32.mrf.mxu0
    %v1893 = vadd.f32 %v434, %v1892
    %1894 = vdwg.mxu0
    %1896 = vrot.lane.b32.xlu0 %v1891, 32
    %v1897 = vpop.permute.xlu0 %1896
    %v1899 = vadd.f32 %v1817, %v1897
    %v1900 = vxor.u32 %v1899, 2147483648
    %v1901 = vmul.f32 %v1900, 1.442695
    %v1902 = vpow.pop %v1901
    %v1903 = vadd.f32 %v1902, 1.0
    %v1904 = vrcp.pop %v1903
    %v1905 = vmul.f32 1.0, %v1904
    %1906 = vrot.lane.b32.xlu0 %v1891, 96
    %v1907 = vpop.permute.xlu0 %1906
    %v1909 = vmul.f32 %v1905, %v1907
    %1911 = vrot.lane.b32.xlu0 %v1909, 64
    %v1912 = vpop.permute.xlu0 %1911
    %v1914 = vadd.f32 %v1817, %v1912
    %v1915 = vtanh.pop %v1914
    %v1916 = vsub.f32 1.0, %v1905
    %1918 = vrot.lane.b32.xlu0 %v1915, 96
    %v1919 = vpop.permute.xlu0 %1918
    %v1921 = vmul.f32 %v1916, %v1919
    %v1922 = vmul.f32 %v1905, %v1695
    %v1923 = vadd.f32 %v1921, %v1922
    %1925 = vrot.lane.b32.xlu0 %v1817, 64
    %v1926 = vpop.permute.xlu0 %1925
    %v1928 = vadd.f32 %v1923, %v1926
    %1930 = vrot.lane.b32.xlu0 %v1923, 64
    %v1931 = vpop.permute.xlu0 %1930
    %v1932 = vsel %vm382, %v1931, 0
    %1934 = vmatprep.subr.mxu0 0.0
    %1935 = vmatpush1.msra.mxu0 0.0
    %1936 = vmatprep.subr.mxu0 0.0
    %1937 = vmatpush1.msra.mxu0 0.0
    %1938 = vmatprep.subr.mxu0 0.0
    %1939 = vmatpush1.msra.mxu0 0.0
    %1940 = vmatprep.subr.mxu0 0.0
    %1941 = vmatpush1.msra.mxu0 0.0
    %1942 = vmatprep.subr.mxu0 0.0
    %1943 = vmatpush1.msra.mxu0 0.0
    %1944 = vmatprep.subr.mxu0 0.0
    %1945 = vmatpush1.msra.mxu0 0.0
    %1946 = vmatprep.subr.mxu0 0.0
    %1947 = vmatpush1.msra.mxu0 0.0
    %1948 = vmatprep.subr.mxu0 0.0
    %1949 = vmatpush1.msra.mxu0 0.0
    %1950 = vmatprep.subr.mxu0 0.0
    %1951 = vmatpush1.msra.mxu0 0.0
    %1952 = vmatprep.subr.mxu0 0.0
    %1953 = vmatpush1.msra.mxu0 0.0
    %1954 = vmatprep.subr.mxu0 0.0
    %1955 = vmatpush1.msra.mxu0 0.0
    %1956 = vmatprep.subr.mxu0 0.0
    %1957 = vmatpush1.msra.mxu0 0.0
    %1958 = vmatprep.subr.mxu0 0.0
    %1959 = vmatpush1.msra.mxu0 %v424
    %1960 = vmatprep.subr.mxu0 0.0
    %1961 = vmatpush1.msra.mxu0 %v423
    %1962 = vmatprep.subr.mxu0 0.0
    %1963 = vmatpush1.msra.mxu0 %v422
    %1964 = vmatprep.subr.mxu0 0.0
    %1965 = vmatpush1.msra.mxu0 %v421
    %1966 = vmatprep.subr.mxu0 0.0
    %1967 = vmatpush2.msra.mxu0 0.0
    %1968 = vmatprep.subr.mxu0 0.0
    %1969 = vmatpush2.msra.mxu0 0.0
    %1970 = vmatprep.subr.mxu0 0.0
    %1971 = vmatpush2.msra.mxu0 0.0
    %1972 = vmatprep.subr.mxu0 0.0
    %1973 = vmatpush2.msra.mxu0 0.0
    %1974 = vmatprep.subr.mxu0 0.0
    %1975 = vmatpush2.msra.mxu0 0.0
    %1976 = vmatprep.subr.mxu0 0.0
    %1977 = vmatpush2.msra.mxu0 0.0
    %1978 = vmatprep.subr.mxu0 0.0
    %1979 = vmatpush2.msra.mxu0 0.0
    %1980 = vmatprep.subr.mxu0 0.0
    %1981 = vmatpush2.msra.mxu0 0.0
    %1982 = vmatprep.subr.mxu0 0.0
    %1983 = vmatpush2.msra.mxu0 0.0
    %1984 = vmatprep.subr.mxu0 0.0
    %1985 = vmatpush2.msra.mxu0 0.0
    %1986 = vmatprep.subr.mxu0 0.0
    %1987 = vmatpush2.msra.mxu0 0.0
    %1988 = vmatprep.subr.mxu0 0.0
    %1989 = vmatpush2.msra.mxu0 0.0
    %1990 = vmatprep.subr.mxu0 0.0
    %1991 = vmatpush2.msra.mxu0 0.0
    %1992 = vmatprep.subr.mxu0 0.0
    %1993 = vmatpush2.msra.mxu0 0.0
    %1994 = vmatprep.subr.mxu0 0.0
    %1995 = vmatpush2.msra.mxu0 0.0
    %1996 = vmatprep.subr.mxu0 0.0
    %1997 = vmatpush2.msra.mxu0 0.0
    %1998 = vmatprep.mubr.f32.mxu0 0.0
    %1999 = vmatmul.mubr.f32.gmra.mxu0 %v1932
    %v2000 = vpop.f32.mrf.mxu0
    %v2001 = vadd.f32 0.0, %v2000
    %v2002 = vpop.f32.mrf.mxu0
    %2003 = vdwg.mxu0
    %v2004 = vadd.f32 %v1818, %v2001
    %v2005 = vadd.f32 %v2004, %v1893
    %v2006 = vxor.u32 %v2005, 2147483648
    %v2007 = vmul.f32 %v2006, 1.442695
    %v2008 = vpow.pop %v2007
    %v2009 = vadd.f32 %v2008, 1.0
    %v2010 = vrcp.pop %v2009
    %v2011 = vmul.f32 1.0, %v2010
    %2013 = vrot.lane.b32.xlu0 %v1893, 64
    %v2014 = vpop.permute.xlu0 %2013
    %v2016 = vmul.f32 %v2011, %v2014
    %2018 = vrot.lane.b32.xlu0 %v2016, 64
    %v2019 = vpop.permute.xlu0 %2018
    %v2021 = vadd.f32 %v2004, %v2019
    %v2022 = vtanh.pop %v2021
    %v2023 = vsub.f32 1.0, %v2011
    %2025 = vrot.lane.b32.xlu0 %v2022, 96
    %v2026 = vpop.permute.xlu0 %2025
    %v2028 = vmul.f32 %v2023, %v2026
    %v2029 = vmul.f32 %v2011, %v1802
    %v2030 = vadd.f32 %v2028, %v2029
    %2032 = vrot.lane.b32.xlu0 %v1928, 96
    %v2033 = vpop.permute.xlu0 %2032
    %v2035 = vadd.f32 %v2030, %v2033
    %2037 = vrot.lane.b32.xlu0 %v2035, 96
    %v2038 = vpop.permute.xlu0 %2037
    %s2040 = scalar_lea.vmem [#allocation3], 48
    %2041 = vst.msk [vmem:[%s2040] sm:$0xff] %vm382, %v2038
    %s2042 = smul.u32 7, 3
    %s2043 = smul.addr %s2042, 8
    %s2044 = scalar_lea.vmem [#allocation2], %s2043
    %v2045 = vld [vmem:[%s2044] sm:$0xff]
    %v2046 = vld [vmem:[%s2044 + $0x8] sm:$0xff]
    %v2048 = vsel %vm382, %v1931, %v2030
    %v2050 = vsel %vm449, %v2048, 0
    %2052 = vmatprep.subr.mxu0 0.0
    %2053 = vmatpush1.msra.mxu0 0.0
    %2054 = vmatprep.subr.mxu0 0.0
    %2055 = vmatpush1.msra.mxu0 0.0
    %2056 = vmatprep.subr.mxu0 0.0
    %2057 = vmatpush1.msra.mxu0 0.0
    %2058 = vmatprep.subr.mxu0 0.0
    %2059 = vmatpush1.msra.mxu0 0.0
    %2060 = vmatprep.subr.mxu0 0.0
    %2061 = vmatpush1.msra.mxu0 0.0
    %2062 = vmatprep.subr.mxu0 0.0
    %2063 = vmatpush1.msra.mxu0 0.0
    %2064 = vmatprep.subr.mxu0 0.0
    %2065 = vmatpush1.msra.mxu0 0.0
    %2066 = vmatprep.subr.mxu0 0.0
    %2067 = vmatpush1.msra.mxu0 0.0
    %2068 = vmatprep.subr.mxu0 %v420
    %2069 = vmatpush1.msra.mxu0 %v419
    %2070 = vmatprep.subr.mxu0 %v418
    %2071 = vmatpush1.msra.mxu0 %v417
    %2072 = vmatprep.subr.mxu0 %v416
    %2073 = vmatpush1.msra.mxu0 %v415
    %2074 = vmatprep.subr.mxu0 %v414
    %2075 = vmatpush1.msra.mxu0 %v413
    %2076 = vmatprep.subr.mxu0 %v412
    %2077 = vmatpush1.msra.mxu0 %v411
    %2078 = vmatprep.subr.mxu0 %v410
    %2079 = vmatpush1.msra.mxu0 %v409
    %2080 = vmatprep.subr.mxu0 %v408
    %2081 = vmatpush1.msra.mxu0 %v407
    %2082 = vmatprep.subr.mxu0 %v406
    %2083 = vmatpush1.msra.mxu0 %v405
    %2084 = vmatprep.subr.mxu0 0.0
    %2085 = vmatpush2.msra.mxu0 0.0
    %2086 = vmatprep.subr.mxu0 0.0
    %2087 = vmatpush2.msra.mxu0 0.0
    %2088 = vmatprep.subr.mxu0 0.0
    %2089 = vmatpush2.msra.mxu0 0.0
    %2090 = vmatprep.subr.mxu0 0.0
    %2091 = vmatpush2.msra.mxu0 0.0
    %2092 = vmatprep.subr.mxu0 0.0
    %2093 = vmatpush2.msra.mxu0 0.0
    %2094 = vmatprep.subr.mxu0 0.0
    %2095 = vmatpush2.msra.mxu0 0.0
    %2096 = vmatprep.subr.mxu0 0.0
    %2097 = vmatpush2.msra.mxu0 0.0
    %2098 = vmatprep.subr.mxu0 0.0
    %2099 = vmatpush2.msra.mxu0 0.0
    %2100 = vmatprep.subr.mxu0 0.0
    %2101 = vmatpush2.msra.mxu0 0.0
    %2102 = vmatprep.subr.mxu0 0.0
    %2103 = vmatpush2.msra.mxu0 0.0
    %2104 = vmatprep.subr.mxu0 0.0
    %2105 = vmatpush2.msra.mxu0 0.0
    %2106 = vmatprep.subr.mxu0 0.0
    %2107 = vmatpush2.msra.mxu0 0.0
    %2108 = vmatprep.subr.mxu0 0.0
    %2109 = vmatpush2.msra.mxu0 0.0
    %2110 = vmatprep.subr.mxu0 0.0
    %2111 = vmatpush2.msra.mxu0 0.0
    %2112 = vmatprep.subr.mxu0 0.0
    %2113 = vmatpush2.msra.mxu0 0.0
    %2114 = vmatprep.subr.mxu0 0.0
    %2115 = vmatpush2.msra.mxu0 0.0
    %2116 = vmatprep.mubr.f32.mxu0 0.0
    %2117 = vmatmul.mubr.f32.gmra.mxu0 %v2050
    %v2118 = vpop.f32.mrf.mxu0
    %v2119 = vadd.f32 %v430, %v2118
    %v2120 = vpop.f32.mrf.mxu0
    %v2121 = vadd.f32 %v434, %v2120
    %2122 = vdwg.mxu0
    %2124 = vrot.lane.b32.xlu0 %v2119, 32
    %v2125 = vpop.permute.xlu0 %2124
    %v2127 = vadd.f32 %v2045, %v2125
    %v2128 = vxor.u32 %v2127, 2147483648
    %v2129 = vmul.f32 %v2128, 1.442695
    %v2130 = vpow.pop %v2129
    %v2131 = vadd.f32 %v2130, 1.0
    %v2132 = vrcp.pop %v2131
    %v2133 = vmul.f32 1.0, %v2132
    %2134 = vrot.lane.b32.xlu0 %v2119, 96
    %v2135 = vpop.permute.xlu0 %2134
    %v2137 = vmul.f32 %v2133, %v2135
    %2139 = vrot.lane.b32.xlu0 %v2137, 64
    %v2140 = vpop.permute.xlu0 %2139
    %v2142 = vadd.f32 %v2045, %v2140
    %v2143 = vtanh.pop %v2142
    %v2144 = vsub.f32 1.0, %v2133
    %2146 = vrot.lane.b32.xlu0 %v2143, 96
    %v2147 = vpop.permute.xlu0 %2146
    %v2149 = vmul.f32 %v2144, %v2147
    %v2150 = vmul.f32 %v2133, %v1923
    %v2151 = vadd.f32 %v2149, %v2150
    %2153 = vrot.lane.b32.xlu0 %v2045, 64
    %v2154 = vpop.permute.xlu0 %2153
    %v2156 = vadd.f32 %v2151, %v2154
    %2158 = vrot.lane.b32.xlu0 %v2151, 64
    %v2159 = vpop.permute.xlu0 %2158
    %v2160 = vsel %vm382, %v2159, 0
    %2162 = vmatprep.subr.mxu0 0.0
    %2163 = vmatpush1.msra.mxu0 0.0
    %2164 = vmatprep.subr.mxu0 0.0
    %2165 = vmatpush1.msra.mxu0 0.0
    %2166 = vmatprep.subr.mxu0 0.0
    %2167 = vmatpush1.msra.mxu0 0.0
    %2168 = vmatprep.subr.mxu0 0.0
    %2169 = vmatpush1.msra.mxu0 0.0
    %2170 = vmatprep.subr.mxu0 0.0
    %2171 = vmatpush1.msra.mxu0 0.0
    %2172 = vmatprep.subr.mxu0 0.0
    %2173 = vmatpush1.msra.mxu0 0.0
    %2174 = vmatprep.subr.mxu0 0.0
    %2175 = vmatpush1.msra.mxu0 0.0
    %2176 = vmatprep.subr.mxu0 0.0
    %2177 = vmatpush1.msra.mxu0 0.0
    %2178 = vmatprep.subr.mxu0 0.0
    %2179 = vmatpush1.msra.mxu0 0.0
    %2180 = vmatprep.subr.mxu0 0.0
    %2181 = vmatpush1.msra.mxu0 0.0
    %2182 = vmatprep.subr.mxu0 0.0
    %2183 = vmatpush1.msra.mxu0 0.0
    %2184 = vmatprep.subr.mxu0 0.0
    %2185 = vmatpush1.msra.mxu0 0.0
    %2186 = vmatprep.subr.mxu0 0.0
    %2187 = vmatpush1.msra.mxu0 %v424
    %2188 = vmatprep.subr.mxu0 0.0
    %2189 = vmatpush1.msra.mxu0 %v423
    %2190 = vmatprep.subr.mxu0 0.0
    %2191 = vmatpush1.msra.mxu0 %v422
    %2192 = vmatprep.subr.mxu0 0.0
    %2193 = vmatpush1.msra.mxu0 %v421
    %2194 = vmatprep.subr.mxu0 0.0
    %2195 = vmatpush2.msra.mxu0 0.0
    %2196 = vmatprep.subr.mxu0 0.0
    %2197 = vmatpush2.msra.mxu0 0.0
    %2198 = vmatprep.subr.mxu0 0.0
    %2199 = vmatpush2.msra.mxu0 0.0
    %2200 = vmatprep.subr.mxu0 0.0
    %2201 = vmatpush2.msra.mxu0 0.0
    %2202 = vmatprep.subr.mxu0 0.0
    %2203 = vmatpush2.msra.mxu0 0.0
    %2204 = vmatprep.subr.mxu0 0.0
    %2205 = vmatpush2.msra.mxu0 0.0
    %2206 = vmatprep.subr.mxu0 0.0
    %2207 = vmatpush2.msra.mxu0 0.0
    %2208 = vmatprep.subr.mxu0 0.0
    %2209 = vmatpush2.msra.mxu0 0.0
    %2210 = vmatprep.subr.mxu0 0.0
    %2211 = vmatpush2.msra.mxu0 0.0
    %2212 = vmatprep.subr.mxu0 0.0
    %2213 = vmatpush2.msra.mxu0 0.0
    %2214 = vmatprep.subr.mxu0 0.0
    %2215 = vmatpush2.msra.mxu0 0.0
    %2216 = vmatprep.subr.mxu0 0.0
    %2217 = vmatpush2.msra.mxu0 0.0
    %2218 = vmatprep.subr.mxu0 0.0
    %2219 = vmatpush2.msra.mxu0 0.0
    %2220 = vmatprep.subr.mxu0 0.0
    %2221 = vmatpush2.msra.mxu0 0.0
    %2222 = vmatprep.subr.mxu0 0.0
    %2223 = vmatpush2.msra.mxu0 0.0
    %2224 = vmatprep.subr.mxu0 0.0
    %2225 = vmatpush2.msra.mxu0 0.0
    %2226 = vmatprep.mubr.f32.mxu0 0.0
    %2227 = vmatmul.mubr.f32.gmra.mxu0 %v2160
    %v2228 = vpop.f32.mrf.mxu0
    %v2229 = vadd.f32 0.0, %v2228
    %v2230 = vpop.f32.mrf.mxu0
    %2231 = vdwg.mxu0
    %v2232 = vadd.f32 %v2046, %v2229
    %v2233 = vadd.f32 %v2232, %v2121
    %v2234 = vxor.u32 %v2233, 2147483648
    %v2235 = vmul.f32 %v2234, 1.442695
    %v2236 = vpow.pop %v2235
    %v2237 = vadd.f32 %v2236, 1.0
    %v2238 = vrcp.pop %v2237
    %v2239 = vmul.f32 1.0, %v2238
    %2241 = vrot.lane.b32.xlu0 %v2121, 64
    %v2242 = vpop.permute.xlu0 %2241
    %v2244 = vmul.f32 %v2239, %v2242
    %2246 = vrot.lane.b32.xlu0 %v2244, 64
    %v2247 = vpop.permute.xlu0 %2246
    %v2249 = vadd.f32 %v2232, %v2247
    %v2250 = vtanh.pop %v2249
    %v2251 = vsub.f32 1.0, %v2239
    %2253 = vrot.lane.b32.xlu0 %v2250, 96
    %v2254 = vpop.permute.xlu0 %2253
    %v2256 = vmul.f32 %v2251, %v2254
    %v2257 = vmul.f32 %v2239, %v2030
    %v2258 = vadd.f32 %v2256, %v2257
    %2260 = vrot.lane.b32.xlu0 %v2156, 96
    %v2261 = vpop.permute.xlu0 %2260
    %v2263 = vadd.f32 %v2258, %v2261
    %2265 = vrot.lane.b32.xlu0 %v2263, 96
    %v2266 = vpop.permute.xlu0 %2265
    %s2268 = scalar_lea.vmem [#allocation3], 56
    %2269 = vst.msk [vmem:[%s2268] sm:$0xff] %vm382, %v2266
    %2271 = vst.msk [vmem:[#allocation4] sm:$0xff] %vm382, %v2159
    %2273 = vrot.lane.b32.xlu0 %v2258, 96
    %v2274 = vpop.permute.xlu0 %2273
    %2276 = vst.msk [vmem:[#allocation5] sm:$0xff] %vm382, %v2274
    %v2277 = vld [vmem:[#allocation3] sm:$0xff]
    %v2278 = vld [vmem:[#allocation3 + $0x8] sm:$0xff]
    %v2279 = vld [vmem:[#allocation3 + $0x10] sm:$0xff]
    %v2280 = vld [vmem:[#allocation3 + $0x18] sm:$0xff]
    %v2281 = vld [vmem:[#allocation3 + $0x20] sm:$0xff]
    %v2282 = vld [vmem:[#allocation3 + $0x28] sm:$0xff]
    %v2283 = vld [vmem:[#allocation3 + $0x30] sm:$0xff]
    %v2284 = vld [vmem:[#allocation3 + $0x38] sm:$0xff]
    %v2285 = vld [vmem:[#allocation2 + $0x8] sm:$0xff]
    %v2286 = vld [vmem:[#allocation2 + $0x20] sm:$0xff]
    %v2287 = vld [vmem:[#allocation2 + $0x38] sm:$0xff]
    %v2288 = vld [vmem:[#allocation2 + $0x50] sm:$0xff]
    %v2289 = vld [vmem:[#allocation2 + $0x68] sm:$0xff]
    %v2290 = vld [vmem:[#allocation2 + $0x80] sm:$0xff]
    %v2291 = vld [vmem:[#allocation2 + $0x98] sm:$0xff]
    %v2292 = vld [vmem:[#allocation2 + $0xb0] sm:$0xff]
    %v2293 = vld [vmem:[#allocation2 + $0x10] sm:$0xff]
    %v2294 = vld [vmem:[#allocation2 + $0x28] sm:$0xff]
    %v2295 = vld [vmem:[#allocation2 + $0x40] sm:$0xff]
    %v2296 = vld [vmem:[#allocation2 + $0x58] sm:$0xff]
    %v2297 = vld [vmem:[#allocation2 + $0x70] sm:$0xff]
    %v2298 = vld [vmem:[#allocation2 + $0x88] sm:$0xff]
    %v2299 = vld [vmem:[#allocation2 + $0xa0] sm:$0xff]
    %v2300 = vld [vmem:[#allocation2 + $0xb8] sm:$0xff]
    %v2301 = vld [vmem:[%s6] sm:$0xff]
    %v2302 = vld [vmem:[%s6 + $0x8] sm:$0xff]
    %v2303 = vld [vmem:[%s6 + $0x10] sm:$0xff]
    %v2304 = vld [vmem:[%s6 + $0x18] sm:$0xff]
    %2313 = vrot.lane.b32.xlu0 %v2285, 32
    %v2314 = vpop.permute.xlu0 %2313
    %2315 = vrot.lane.b32.xlu0 %v2286, 32
    %v2316 = vpop.permute.xlu0 %2315
    %2317 = vrot.lane.b32.xlu0 %v2287, 32
    %v2318 = vpop.permute.xlu0 %2317
    %2319 = vrot.lane.b32.xlu0 %v2288, 32
    %v2320 = vpop.permute.xlu0 %2319
    %2321 = vrot.lane.b32.xlu0 %v2289, 32
    %v2322 = vpop.permute.xlu0 %2321
    %2323 = vrot.lane.b32.xlu0 %v2290, 32
    %v2324 = vpop.permute.xlu0 %2323
    %2325 = vrot.lane.b32.xlu0 %v2291, 32
    %v2326 = vpop.permute.xlu0 %2325
    %2327 = vrot.lane.b32.xlu0 %v2292, 32
    %v2328 = vpop.permute.xlu0 %2327
    %v2338 = vsel %vm382, %v2277, 0
    %v2341 = vsel %vm382, %v2278, 0
    %v2344 = vsel %vm382, %v2279, 0
    %v2347 = vsel %vm382, %v2280, 0
    %v2350 = vsel %vm382, %v2281, 0
    %v2353 = vsel %vm382, %v2282, 0
    %v2356 = vsel %vm382, %v2283, 0
    %v2359 = vsel %vm382, %v2284, 0
    %2361 = vmatprep.subr.mxu0 0.0
    %2362 = vmatpush1.msra.mxu0 0.0
    %2363 = vmatprep.subr.mxu0 0.0
    %2364 = vmatpush1.msra.mxu0 0.0
    %2365 = vmatprep.subr.mxu0 0.0
    %2366 = vmatpush1.msra.mxu0 0.0
    %2367 = vmatprep.subr.mxu0 0.0
    %2368 = vmatpush1.msra.mxu0 0.0
    %2369 = vmatprep.subr.mxu0 0.0
    %2370 = vmatpush1.msra.mxu0 0.0
    %2371 = vmatprep.subr.mxu0 0.0
    %2372 = vmatpush1.msra.mxu0 0.0
    %2373 = vmatprep.subr.mxu0 0.0
    %2374 = vmatpush1.msra.mxu0 0.0
    %2375 = vmatprep.subr.mxu0 0.0
    %2376 = vmatpush1.msra.mxu0 0.0
    %2377 = vmatprep.subr.mxu0 0.0
    %2378 = vmatpush1.msra.mxu0 0.0
    %2379 = vmatprep.subr.mxu0 0.0
    %2380 = vmatpush1.msra.mxu0 0.0
    %2381 = vmatprep.subr.mxu0 0.0
    %2382 = vmatpush1.msra.mxu0 0.0
    %2383 = vmatprep.subr.mxu0 0.0
    %2384 = vmatpush1.msra.mxu0 0.0
    %2385 = vmatprep.subr.mxu0 0.0
    %2386 = vmatpush1.msra.mxu0 %v2304
    %2387 = vmatprep.subr.mxu0 0.0
    %2388 = vmatpush1.msra.mxu0 %v2303
    %2389 = vmatprep.subr.mxu0 0.0
    %2390 = vmatpush1.msra.mxu0 %v2302
    %2391 = vmatprep.subr.mxu0 0.0
    %2392 = vmatpush1.msra.mxu0 %v2301
    %2393 = vmatprep.subr.mxu0 0.0
    %2394 = vmatpush2.msra.mxu0 0.0
    %2395 = vmatprep.subr.mxu0 0.0
    %2396 = vmatpush2.msra.mxu0 0.0
    %2397 = vmatprep.subr.mxu0 0.0
    %2398 = vmatpush2.msra.mxu0 0.0
    %2399 = vmatprep.subr.mxu0 0.0
    %2400 = vmatpush2.msra.mxu0 0.0
    %2401 = vmatprep.subr.mxu0 0.0
    %2402 = vmatpush2.msra.mxu0 0.0
    %2403 = vmatprep.subr.mxu0 0.0
    %2404 = vmatpush2.msra.mxu0 0.0
    %2405 = vmatprep.subr.mxu0 0.0
    %2406 = vmatpush2.msra.mxu0 0.0
    %2407 = vmatprep.subr.mxu0 0.0
    %2408 = vmatpush2.msra.mxu0 0.0
    %2409 = vmatprep.subr.mxu0 0.0
    %2410 = vmatpush2.msra.mxu0 0.0
    %2411 = vmatprep.subr.mxu0 0.0
    %2412 = vmatpush2.msra.mxu0 0.0
    %2413 = vmatprep.subr.mxu0 0.0
    %2414 = vmatpush2.msra.mxu0 0.0
    %2415 = vmatprep.subr.mxu0 0.0
    %2416 = vmatpush2.msra.mxu0 0.0
    %2417 = vmatprep.subr.mxu0 0.0
    %2418 = vmatpush2.msra.mxu0 0.0
    %2419 = vmatprep.subr.mxu0 0.0
    %2420 = vmatpush2.msra.mxu0 0.0
    %2421 = vmatprep.subr.mxu0 0.0
    %2422 = vmatpush2.msra.mxu0 0.0
    %2423 = vmatprep.subr.mxu0 0.0
    %2424 = vmatpush2.msra.mxu0 0.0
    %2425 = vmatprep.mubr.f32.mxu0 0.0
    %2426 = vmatmul.mubr.f32.gmra.mxu0 %v2338
    %v2427 = vpop.f32.mrf.mxu0
    %v2428 = vadd.f32 %v2314, %v2427
    %v2429 = vpop.f32.mrf.mxu0
    %2430 = vmatprep.mubr.f32.mxu0 0.0
    %2431 = vmatmul.mubr.f32.gmra.mxu0 %v2341
    %v2432 = vpop.f32.mrf.mxu0
    %v2433 = vadd.f32 %v2316, %v2432
    %v2434 = vpop.f32.mrf.mxu0
    %2435 = vmatprep.mubr.f32.mxu0 0.0
    %2436 = vmatmul.mubr.f32.gmra.mxu0 %v2344
    %v2437 = vpop.f32.mrf.mxu0
    %v2438 = vadd.f32 %v2318, %v2437
    %v2439 = vpop.f32.mrf.mxu0
    %2440 = vmatprep.mubr.f32.mxu0 0.0
    %2441 = vmatmul.mubr.f32.gmra.mxu0 %v2347
    %v2442 = vpop.f32.mrf.mxu0
    %v2443 = vadd.f32 %v2320, %v2442
    %v2444 = vpop.f32.mrf.mxu0
    %2445 = vmatprep.mubr.f32.mxu0 0.0
    %2446 = vmatmul.mubr.f32.gmra.mxu0 %v2350
    %v2447 = vpop.f32.mrf.mxu0
    %v2448 = vadd.f32 %v2322, %v2447
    %v2449 = vpop.f32.mrf.mxu0
    %2450 = vmatprep.mubr.f32.mxu0 0.0
    %2451 = vmatmul.mubr.f32.gmra.mxu0 %v2353
    %v2452 = vpop.f32.mrf.mxu0
    %v2453 = vadd.f32 %v2324, %v2452
    %v2454 = vpop.f32.mrf.mxu0
    %2455 = vmatprep.mubr.f32.mxu0 0.0
    %2456 = vmatmul.mubr.f32.gmra.mxu0 %v2356
    %v2457 = vpop.f32.mrf.mxu0
    %v2458 = vadd.f32 %v2326, %v2457
    %v2459 = vpop.f32.mrf.mxu0
    %2460 = vmatprep.mubr.f32.mxu0 0.0
    %2461 = vmatmul.mubr.f32.gmra.mxu0 %v2359
    %v2462 = vpop.f32.mrf.mxu0
    %v2463 = vadd.f32 %v2328, %v2462
    %v2464 = vpop.f32.mrf.mxu0
    %2465 = vdwg.mxu0
    %v2466 = vmax.f32 %v2428, 0.0
    %v2467 = vmax.f32 %v2433, 0.0
    %v2468 = vmax.f32 %v2438, 0.0
    %v2469 = vmax.f32 %v2443, 0.0
    %v2470 = vmax.f32 %v2448, 0.0
    %v2471 = vmax.f32 %v2453, 0.0
    %v2472 = vmax.f32 %v2458, 0.0
    %v2473 = vmax.f32 %v2463, 0.0
    %s2474 = scalar_lea.vmem %s6, 32
    %v2475 = vld [vmem:[%s2474] sm:$0xff]
    %v2476 = vld [vmem:[%s2474 + $0x8] sm:$0xff]
    %v2477 = vld [vmem:[%s2474 + $0x10] sm:$0xff]
    %v2478 = vld [vmem:[%s2474 + $0x18] sm:$0xff]
    %v2480 = vsel %vm382, %v2466, 0
    %v2483 = vsel %vm382, %v2467, 0
    %v2486 = vsel %vm382, %v2468, 0
    %v2489 = vsel %vm382, %v2469, 0
    %v2492 = vsel %vm382, %v2470, 0
    %v2495 = vsel %vm382, %v2471, 0
    %v2498 = vsel %vm382, %v2472, 0
    %v2501 = vsel %vm382, %v2473, 0
    %2503 = vmatprep.subr.mxu0 0.0
    %2504 = vmatpush1.msra.mxu0 0.0
    %2505 = vmatprep.subr.mxu0 0.0
    %2506 = vmatpush1.msra.mxu0 0.0
    %2507 = vmatprep.subr.mxu0 0.0
    %2508 = vmatpush1.msra.mxu0 0.0
    %2509 = vmatprep.subr.mxu0 0.0
    %2510 = vmatpush1.msra.mxu0 0.0
    %2511 = vmatprep.subr.mxu0 0.0
    %2512 = vmatpush1.msra.mxu0 0.0
    %2513 = vmatprep.subr.mxu0 0.0
    %2514 = vmatpush1.msra.mxu0 0.0
    %2515 = vmatprep.subr.mxu0 0.0
    %2516 = vmatpush1.msra.mxu0 0.0
    %2517 = vmatprep.subr.mxu0 0.0
    %2518 = vmatpush1.msra.mxu0 0.0
    %2519 = vmatprep.subr.mxu0 0.0
    %2520 = vmatpush1.msra.mxu0 0.0
    %2521 = vmatprep.subr.mxu0 0.0
    %2522 = vmatpush1.msra.mxu0 0.0
    %2523 = vmatprep.subr.mxu0 0.0
    %2524 = vmatpush1.msra.mxu0 0.0
    %2525 = vmatprep.subr.mxu0 0.0
    %2526 = vmatpush1.msra.mxu0 0.0
    %2527 = vmatprep.subr.mxu0 0.0
    %2528 = vmatpush1.msra.mxu0 %v2478
    %2529 = vmatprep.subr.mxu0 0.0
    %2530 = vmatpush1.msra.mxu0 %v2477
    %2531 = vmatprep.subr.mxu0 0.0
    %2532 = vmatpush1.msra.mxu0 %v2476
    %2533 = vmatprep.subr.mxu0 0.0
    %2534 = vmatpush1.msra.mxu0 %v2475
    %2535 = vmatprep.subr.mxu0 0.0
    %2536 = vmatpush2.msra.mxu0 0.0
    %2537 = vmatprep.subr.mxu0 0.0
    %2538 = vmatpush2.msra.mxu0 0.0
    %2539 = vmatprep.subr.mxu0 0.0
    %2540 = vmatpush2.msra.mxu0 0.0
    %2541 = vmatprep.subr.mxu0 0.0
    %2542 = vmatpush2.msra.mxu0 0.0
    %2543 = vmatprep.subr.mxu0 0.0
    %2544 = vmatpush2.msra.mxu0 0.0
    %2545 = vmatprep.subr.mxu0 0.0
    %2546 = vmatpush2.msra.mxu0 0.0
    %2547 = vmatprep.subr.mxu0 0.0
    %2548 = vmatpush2.msra.mxu0 0.0
    %2549 = vmatprep.subr.mxu0 0.0
    %2550 = vmatpush2.msra.mxu0 0.0
    %2551 = vmatprep.subr.mxu0 0.0
    %2552 = vmatpush2.msra.mxu0 0.0
    %2553 = vmatprep.subr.mxu0 0.0
    %2554 = vmatpush2.msra.mxu0 0.0
    %2555 = vmatprep.subr.mxu0 0.0
    %2556 = vmatpush2.msra.mxu0 0.0
    %2557 = vmatprep.subr.mxu0 0.0
    %2558 = vmatpush2.msra.mxu0 0.0
    %2559 = vmatprep.subr.mxu0 0.0
    %2560 = vmatpush2.msra.mxu0 0.0
    %2561 = vmatprep.subr.mxu0 0.0
    %2562 = vmatpush2.msra.mxu0 0.0
    %2563 = vmatprep.subr.mxu0 0.0
    %2564 = vmatpush2.msra.mxu0 0.0
    %2565 = vmatprep.subr.mxu0 0.0
    %2566 = vmatpush2.msra.mxu0 0.0
    %2567 = vmatprep.mubr.f32.mxu0 0.0
    %2568 = vmatmul.mubr.f32.gmra.mxu0 %v2480
    %v2569 = vpop.f32.mrf.mxu0
    %v2570 = vadd.f32 %v2293, %v2569
    %v2571 = vpop.f32.mrf.mxu0
    %2572 = vmatprep.mubr.f32.mxu0 0.0
    %2573 = vmatmul.mubr.f32.gmra.mxu0 %v2483
    %v2574 = vpop.f32.mrf.mxu0
    %v2575 = vadd.f32 %v2294, %v2574
    %v2576 = vpop.f32.mrf.mxu0
    %2577 = vmatprep.mubr.f32.mxu0 0.0
    %2578 = vmatmul.mubr.f32.gmra.mxu0 %v2486
    %v2579 = vpop.f32.mrf.mxu0
    %v2580 = vadd.f32 %v2295, %v2579
    %v2581 = vpop.f32.mrf.mxu0
    %2582 = vmatprep.mubr.f32.mxu0 0.0
    %2583 = vmatmul.mubr.f32.gmra.mxu0 %v2489
    %v2584 = vpop.f32.mrf.mxu0
    %v2585 = vadd.f32 %v2296, %v2584
    %v2586 = vpop.f32.mrf.mxu0
    %2587 = vmatprep.mubr.f32.mxu0 0.0
    %2588 = vmatmul.mubr.f32.gmra.mxu0 %v2492
    %v2589 = vpop.f32.mrf.mxu0
    %v2590 = vadd.f32 %v2297, %v2589
    %v2591 = vpop.f32.mrf.mxu0
    %2592 = vmatprep.mubr.f32.mxu0 0.0
    %2593 = vmatmul.mubr.f32.gmra.mxu0 %v2495
    %v2594 = vpop.f32.mrf.mxu0
    %v2595 = vadd.f32 %v2298, %v2594
    %v2596 = vpop.f32.mrf.mxu0
    %2597 = vmatprep.mubr.f32.mxu0 0.0
    %2598 = vmatmul.mubr.f32.gmra.mxu0 %v2498
    %v2599 = vpop.f32.mrf.mxu0
    %v2600 = vadd.f32 %v2299, %v2599
    %v2601 = vpop.f32.mrf.mxu0
    %2602 = vmatprep.mubr.f32.mxu0 0.0
    %2603 = vmatmul.mubr.f32.gmra.mxu0 %v2501
    %v2604 = vpop.f32.mrf.mxu0
    %v2605 = vadd.f32 %v2300, %v2604
    %v2606 = vpop.f32.mrf.mxu0
    %2607 = vdwg.mxu0
    %v2608 = vmax.f32 %v2570, 0.0
    %v2609 = vmax.f32 %v2575, 0.0
    %v2610 = vmax.f32 %v2580, 0.0
    %v2611 = vmax.f32 %v2585, 0.0
    %v2612 = vmax.f32 %v2590, 0.0
    %v2613 = vmax.f32 %v2595, 0.0
    %v2614 = vmax.f32 %v2600, 0.0
    %v2615 = vmax.f32 %v2605, 0.0
    %v2616 = vld [vmem:[#allocation11] sm:$0xff]
    %v2617 = vld [vmem:[#allocation11 + $0x8] sm:$0xff]
    %v2618 = vld [vmem:[#allocation11 + $0x10] sm:$0xff]
    %v2619 = vld [vmem:[#allocation11 + $0x18] sm:$0xff]
    %v2620 = vld [vmem:[%s8] sm:$0x1]
    %v2622 = vlaneseq
    %v2623 = vshrl.u32 %v2622, 7
    %v2624 = vsub.s32 0, %v2623
    %v2625 = vrot.slane %v2620, %v2624
    %v2628 = vsel %vm382, %v2608, 0
    %v2631 = vsel %vm382, %v2609, 0
    %v2634 = vsel %vm382, %v2610, 0
    %v2637 = vsel %vm382, %v2611, 0
    %v2640 = vsel %vm382, %v2612, 0
    %v2643 = vsel %vm382, %v2613, 0
    %v2646 = vsel %vm382, %v2614, 0
    %v2649 = vsel %vm382, %v2615, 0
    %2651 = vmatprep.subr.mxu0 0.0
    %2652 = vmatpush1.msra.mxu0 0.0
    %2653 = vmatprep.subr.mxu0 0.0
    %2654 = vmatpush1.msra.mxu0 0.0
    %2655 = vmatprep.subr.mxu0 0.0
    %2656 = vmatpush1.msra.mxu0 0.0
    %2657 = vmatprep.subr.mxu0 0.0
    %2658 = vmatpush1.msra.mxu0 0.0
    %2659 = vmatprep.subr.mxu0 0.0
    %2660 = vmatpush1.msra.mxu0 0.0
    %2661 = vmatprep.subr.mxu0 0.0
    %2662 = vmatpush1.msra.mxu0 0.0
    %2663 = vmatprep.subr.mxu0 0.0
    %2664 = vmatpush1.msra.mxu0 0.0
    %2665 = vmatprep.subr.mxu0 0.0
    %2666 = vmatpush1.msra.mxu0 0.0
    %2667 = vmatprep.subr.mxu0 0.0
    %2668 = vmatpush1.msra.mxu0 0.0
    %2669 = vmatprep.subr.mxu0 0.0
    %2670 = vmatpush1.msra.mxu0 0.0
    %2671 = vmatprep.subr.mxu0 0.0
    %2672 = vmatpush1.msra.mxu0 0.0
    %2673 = vmatprep.subr.mxu0 0.0
    %2674 = vmatpush1.msra.mxu0 0.0
    %2675 = vmatprep.subr.mxu0 0.0
    %2676 = vmatpush1.msra.mxu0 %v2619
    %2677 = vmatprep.subr.mxu0 0.0
    %2678 = vmatpush1.msra.mxu0 %v2618
    %2679 = vmatprep.subr.mxu0 0.0
    %2680 = vmatpush1.msra.mxu0 %v2617
    %2681 = vmatprep.subr.mxu0 0.0
    %2682 = vmatpush1.msra.mxu0 %v2616
    %2683 = vmatprep.subr.mxu0 0.0
    %2684 = vmatpush2.msra.mxu0 0.0
    %2685 = vmatprep.subr.mxu0 0.0
    %2686 = vmatpush2.msra.mxu0 0.0
    %2687 = vmatprep.subr.mxu0 0.0
    %2688 = vmatpush2.msra.mxu0 0.0
    %2689 = vmatprep.subr.mxu0 0.0
    %2690 = vmatpush2.msra.mxu0 0.0
    %2691 = vmatprep.subr.mxu0 0.0
    %2692 = vmatpush2.msra.mxu0 0.0
    %2693 = vmatprep.subr.mxu0 0.0
    %2694 = vmatpush2.msra.mxu0 0.0
    %2695 = vmatprep.subr.mxu0 0.0
    %2696 = vmatpush2.msra.mxu0 0.0
    %2697 = vmatprep.subr.mxu0 0.0
    %2698 = vmatpush2.msra.mxu0 0.0
    %2699 = vmatprep.subr.mxu0 0.0
    %2700 = vmatpush2.msra.mxu0 0.0
    %2701 = vmatprep.subr.mxu0 0.0
    %2702 = vmatpush2.msra.mxu0 0.0
    %2703 = vmatprep.subr.mxu0 0.0
    %2704 = vmatpush2.msra.mxu0 0.0
    %2705 = vmatprep.subr.mxu0 0.0
    %2706 = vmatpush2.msra.mxu0 0.0
    %2707 = vmatprep.subr.mxu0 0.0
    %2708 = vmatpush2.msra.mxu0 0.0
    %2709 = vmatprep.subr.mxu0 0.0
    %2710 = vmatpush2.msra.mxu0 0.0
    %2711 = vmatprep.subr.mxu0 0.0
    %2712 = vmatpush2.msra.mxu0 0.0
    %2713 = vmatprep.subr.mxu0 0.0
    %2714 = vmatpush2.msra.mxu0 0.0
    %2715 = vmatprep.mubr.f32.mxu0 0.0
    %2716 = vmatmul.mubr.f32.gmra.mxu0 %v2628
    %v2717 = vpop.f32.mrf.mxu0
    %v2718 = vadd.f32 %v2625, %v2717
    %v2719 = vpop.f32.mrf.mxu0
    %2720 = vmatprep.mubr.f32.mxu0 0.0
    %2721 = vmatmul.mubr.f32.gmra.mxu0 %v2631
    %v2722 = vpop.f32.mrf.mxu0
    %v2723 = vadd.f32 %v2625, %v2722
    %v2724 = vpop.f32.mrf.mxu0
    %2725 = vmatprep.mubr.f32.mxu0 0.0
    %2726 = vmatmul.mubr.f32.gmra.mxu0 %v2634
    %v2727 = vpop.f32.mrf.mxu0
    %v2728 = vadd.f32 %v2625, %v2727
    %v2729 = vpop.f32.mrf.mxu0
    %2730 = vmatprep.mubr.f32.mxu0 0.0
    %2731 = vmatmul.mubr.f32.gmra.mxu0 %v2637
    %v2732 = vpop.f32.mrf.mxu0
    %v2733 = vadd.f32 %v2625, %v2732
    %v2734 = vpop.f32.mrf.mxu0
    %2735 = vmatprep.mubr.f32.mxu0 0.0
    %2736 = vmatmul.mubr.f32.gmra.mxu0 %v2640
    %v2737 = vpop.f32.mrf.mxu0
    %v2738 = vadd.f32 %v2625, %v2737
    %v2739 = vpop.f32.mrf.mxu0
    %2740 = vmatprep.mubr.f32.mxu0 0.0
    %2741 = vmatmul.mubr.f32.gmra.mxu0 %v2643
    %v2742 = vpop.f32.mrf.mxu0
    %v2743 = vadd.f32 %v2625, %v2742
    %v2744 = vpop.f32.mrf.mxu0
    %2745 = vmatprep.mubr.f32.mxu0 0.0
    %2746 = vmatmul.mubr.f32.gmra.mxu0 %v2646
    %v2747 = vpop.f32.mrf.mxu0
    %v2748 = vadd.f32 %v2625, %v2747
    %v2749 = vpop.f32.mrf.mxu0
    %2750 = vmatprep.mubr.f32.mxu0 0.0
    %2751 = vmatmul.mubr.f32.gmra.mxu0 %v2649
    %v2752 = vpop.f32.mrf.mxu0
    %v2753 = vadd.f32 %v2625, %v2752
    %v2754 = vpop.f32.mrf.mxu0
    %2755 = vdwg.mxu0
    %2756 = vst [vmem:[#allocation12] sm:$0xff] %v2718
    %2757 = vst [vmem:[#allocation12 + $0x8] sm:$0xff] %v2723
    %2758 = vst [vmem:[#allocation12 + $0x10] sm:$0xff] %v2728
    %2759 = vst [vmem:[#allocation12 + $0x18] sm:$0xff] %v2733
    %2760 = vst [vmem:[#allocation12 + $0x20] sm:$0xff] %v2738
    %2761 = vst [vmem:[#allocation12 + $0x28] sm:$0xff] %v2743
    %2762 = vst [vmem:[#allocation12 + $0x30] sm:$0xff] %v2748
    %2763 = vst [vmem:[#allocation12 + $0x38] sm:$0xff] %v2753
    // Predicated region
    $region54: #{tpu_custom_call.1} parent=1 // pred_check
      _
    $region55: #{tpu_custom_call.1} parent=1 // pred_check_branch
      %2765 = sbr.rel (0) target = $region57
    $region56: #{tpu_custom_call.1} parent=1 // pred_region
      %s2767 = ssub.s32 1024, 1024
      %2768 = vsyncadd [#allocation8], %s2767
      %s2769 = sshll.u32 [#allocation12], 4
      %s2770 = int_to_ptr.vmem [resolvable:$true] %s2769
      %2775 = dma.vmem_to_hbm [thread:$0]  %s2770, 1024, %s9, [#allocation8], 128, 128, 8
    $region57: #{tpu_custom_call.1} parent=1 // pred_fallthru
      _
    // Predicated region
    $region58: #{tpu_custom_call.1} parent=1 // pred_check
      _
    $region59: #{tpu_custom_call.1} parent=1 // pred_check_branch
      %2777 = sbr.rel (0) target = $region61
    $region60: #{tpu_custom_call.1} parent=1 // pred_region
      %2778 = dma.done [#allocation8], 1024
    $region61: #{tpu_custom_call.1} parent=1 // pred_fallthru
      _
    %2779 = vsyncpa [#allocation7], 1
    %2780 = vsyncpa [#allocation10], 1
    %2781 = vsyncpa [#allocation8], 1

</llo_original>
